<compile_context>
chip_gen: v6e
topology: v6e:2x2x1
jax: 0.10.0
libtpu: 0.0.40
codegen_flags: <defaults>
</compile_context>

<pallas_src>
import jax
import jax.numpy as jnp
from jax.experimental import pallas as pl
from jax.experimental.pallas import tpu as pltpu

POOL_K = 11
POOL_S = 11
POOL_P = 2
H_IN = 216                       # (216 + 2*2 - 11)//11 + 1 = 20
POOL_OUT = 20
FLAT = POOL_OUT * POOL_OUT       # 400 = fc input features
HID = 80
OUT = 9
SENTINEL = 333.0                 # exactly representable in f32
TB_MAX = 16                      # batch rows per grid step (VMEM-safe on v7x)


def _win(i):
    """Valid input range covered by pooling-output index i (pad handled by clipping)."""
    lo = max(0, POOL_S * i - POOL_P)
    hi = min(H_IN, POOL_S * i - POOL_P + POOL_K)
    return lo, hi


def _extractor_kernel(x_ref, m_ref, w1_ref, b1_ref, w2_ref, b2_ref, o_ref):
    # x_ref: (TB,216,216) f32 image; m_ref: (TB,216,216) bool mask.
    sent = jnp.float32(SENTINEL)

    # ---- masked min-pool, row (sublane) direction -------------------------
    # Output row r covers input rows [11r-2, 11r+9) clipped to [0,216); the 20
    # windows are disjoint and cover every row exactly once.
    rows = []
    for r in range(POOL_OUT):
        lo, hi = _win(r)
        xw = jnp.where(m_ref[:, lo:hi, :], x_ref[:, lo:hi, :], sent)
        rows.append(jnp.min(xw, axis=1))                       # (TB, 216)
    rowp = jnp.stack(rows, axis=1)                             # (TB, 20, 216)

    # ---- column (lane) direction ------------------------------------------
    cols = []
    for c in range(POOL_OUT):
        lo, hi = _win(c)
        cols.append(jnp.min(rowp[:, :, lo:hi], axis=2))        # (TB, 20) [r on lanes]
    # Lane-concat -> (TB, 400) in c*20+r order (W1 rows are permuted to match).
    pooled = jnp.concatenate(cols, axis=1)

    # Fully-masked windows pooled to the sentinel -> 0  (PyTorch: x[x==333]=0).
    pooled = jnp.where(pooled == sent, jnp.float32(0.0), pooled)

    # ---- fc: Linear(400,80) -> ReLU -> Linear(80,9) ------------------------
    h = jnp.dot(pooled, w1_ref[...], preferred_element_type=jnp.float32)
    h = jnp.maximum(h + b1_ref[...], jnp.float32(0.0))
    o = jnp.dot(h, w2_ref[...], preferred_element_type=jnp.float32)
    o_ref[...] = o + b2_ref[...]


def _choose_batch_tile(batch):
    """Pick TB <= TB_MAX minimizing batch padding (ties -> largest TB)."""
    best = None
    for tb in range(1, min(batch, TB_MAX) + 1):
        grid = -(-batch // tb)
        pad = grid * tb - batch
        key = (pad, -tb)
        if best is None or key < best[0]:
            best = (key, tb, grid)
    return best[1], best[2]


@jax.jit
def track_agile_extractor(x, mask, w1, b1, w2, b2):
    """x: (B,1,216,216) float, mask: (B,1,216,216) bool -> (B,9) float32.

    w1: (400,80), b1: (1,80), w2: (80,9), b2: (1,9)  (weights stored (in,out)).
    """
    batch = x.shape[0]
    x2 = x[:, 0].astype(jnp.float32)          # size-1 dim squeeze: free in XLA
    m2 = mask[:, 0].astype(jnp.bool_)

    # Kernel produces pooled features in c*20+r order; permute W1 rows to match
    # the PyTorch r*20+c flatten (tiny, done on the (400,80) weight only).
    w1k = w1.reshape(POOL_OUT, POOL_OUT, HID).transpose(1, 0, 2).reshape(FLAT, HID)

    tb, grid = _choose_batch_tile(batch)
    b_pad = tb * grid
    if b_pad != batch:                        # rare with adaptive TB; rows discarded
        x2 = jnp.pad(x2, ((0, b_pad - batch), (0, 0), (0, 0)))
        m2 = jnp.pad(m2, ((0, b_pad - batch), (0, 0), (0, 0)))

    out = pl.pallas_call(
        _extractor_kernel,
        out_shape=jax.ShapeDtypeStruct((grid, tb, OUT), jnp.float32),
        grid_spec=pltpu.PrefetchScalarGridSpec(
            num_scalar_prefetch=0,
            grid=(grid,),
            in_specs=[
                pl.BlockSpec((tb, H_IN, H_IN), lambda i: (i, 0, 0)),   # image
                pl.BlockSpec((tb, H_IN, H_IN), lambda i: (i, 0, 0)),   # mask
                pl.BlockSpec((FLAT, HID), lambda i: (0, 0)),           # W1 (permuted)
                pl.BlockSpec((1, HID), lambda i: (0, 0)),              # b1
                pl.BlockSpec((HID, OUT), lambda i: (0, 0)),            # W2
                pl.BlockSpec((1, OUT), lambda i: (0, 0)),              # b2
            ],
            out_specs=pl.BlockSpec((None, tb, OUT), lambda i: (i, 0, 0)),
        ),
        compiler_params=pltpu.CompilerParams(
            dimension_semantics=("parallel",),
            vmem_limit_bytes=40 * 1024 * 1024,
        ),
    )(x2, m2, w1k, b1, w2, b2)
    return out.reshape(b_pad, OUT)[:batch]


def reference_forward(x, mask, w1, b1, w2, b2):
    # Pure-JAX reference reproducing the PyTorch forward semantics exactly.
    batch = x.shape[0]
    xm = jnp.where(mask[:, 0], x[:, 0].astype(jnp.float32), jnp.float32(SENTINEL))
    xp = jnp.pad(xm, ((0, 0), (POOL_P, POOL_P), (POOL_P, POOL_P)),
                 constant_values=jnp.inf)                      # +inf == maxpool pad
    xr = xp.reshape(batch, POOL_OUT, POOL_K, POOL_OUT, POOL_K)
    pooled = xr.min(axis=(2, 4))                               # -maxpool(-x)
    pooled = jnp.where(pooled == SENTINEL, 0.0, pooled)
    flat = pooled.reshape(batch, FLAT)
    h = jnp.maximum(
        jnp.dot(flat, w1, precision=jax.lax.Precision.HIGHEST) + b1, 0.0)
    return jnp.dot(h, w2, precision=jax.lax.Precision.HIGHEST) + b2


if __name__ == "__main__":
    B = 2
    key = jax.random.PRNGKey(0)
    kx, km, k1, k2 = jax.random.split(key, 4)

    x = jax.random.normal(kx, (B, 1, H_IN, H_IN), jnp.float32) * 5.0
    mask = jax.random.uniform(km, (B, 1, H_IN, H_IN)) > 0.3
    # Force some fully-masked pooling windows to exercise the 333 -> 0 path.
    mask = mask.at[:, :, :22, :22].set(False)

    # kaiming_normal_(mode='fan_in', nonlinearity='relu'): std = sqrt(2/fan_in),
    # biases zero.  Weights stored transposed (in, out).
    w1 = jax.random.normal(k1, (FLAT, HID), jnp.float32) * jnp.sqrt(2.0 / FLAT)
    b1 = jnp.zeros((1, HID), jnp.float32)
    w2 = jax.random.normal(k2, (HID, OUT), jnp.float32) * jnp.sqrt(2.0 / HID)
    b2 = jnp.zeros((1, OUT), jnp.float32)

    out = jax.block_until_ready(track_agile_extractor(x, mask, w1, b1, w2, b2))
    ref = reference_forward(x, mask, w1, b1, w2, b2)

    assert out.shape == (B, OUT)
    err = float(jnp.max(jnp.abs(out - ref)))
    assert jnp.allclose(out, ref, rtol=1e-3, atol=1e-3), f"max abs err {err}"
    print("KERNEL_OK")
</pallas_src>

<mosaic_0001>
module attributes {stable_mosaic.version = 11 : i64} {
  func.func @_extractor_kernel(%arg0: i32, %arg1: memref<2x216x216xf32, #tpu.memory_space<vmem>>, %arg2: memref<2x216x216xi32, #tpu.memory_space<vmem>>, %arg3: memref<400x80xf32, #tpu.memory_space<vmem>>, %arg4: memref<1x80xf32, #tpu.memory_space<vmem>>, %arg5: memref<80x9xf32, #tpu.memory_space<vmem>>, %arg6: memref<1x9xf32, #tpu.memory_space<vmem>>, %arg7: memref<1x2x9xf32, #tpu.memory_space<vmem>>) attributes {dimension_semantics = [#tpu.dimension_semantics<parallel>], iteration_bounds = array<i64: 1>, scalar_prefetch = 0 : i64, scratch_operands = 0 : i64, tpu.core_type = #tpu.core_type<tc>, window_params = [{transform_indices = @transform_0, window_bounds = array<i64: 2, 216, 216>}, {transform_indices = @transform_1, window_bounds = array<i64: 2, 216, 216>}, {pipeline_mode = #tpu.pipeline_mode<synchronous>, transform_indices = @transform_2, window_bounds = array<i64: 400, 80>}, {pipeline_mode = #tpu.pipeline_mode<synchronous>, transform_indices = @transform_3, window_bounds = array<i64: 1, 80>}, {pipeline_mode = #tpu.pipeline_mode<synchronous>, transform_indices = @transform_4, window_bounds = array<i64: 80, 9>}, {pipeline_mode = #tpu.pipeline_mode<synchronous>, transform_indices = @transform_5, window_bounds = array<i64: 1, 9>}, {transform_indices = @transform_6, window_bounds = array<i64: 1, 2, 9>}]} {
    %c0 = arith.constant 0 : index
    %c0_0 = arith.constant 0 : index
    %c0_1 = arith.constant 0 : index
    %0 = vector.load %arg2[%c0, %c0_0, %c0_1] : memref<2x216x216xi32, #tpu.memory_space<vmem>>, vector<2x9x216xi32>
    %cst = arith.constant dense<0> : vector<2x9x216xi32>
    %1 = arith.cmpi ne, %0, %cst : vector<2x9x216xi32>
    %c0_2 = arith.constant 0 : index
    %c0_3 = arith.constant 0 : index
    %c0_4 = arith.constant 0 : index
    %2 = vector.load %arg1[%c0_2, %c0_3, %c0_4] : memref<2x216x216xf32, #tpu.memory_space<vmem>>, vector<2x9x216xf32>
    %cst_5 = arith.constant 3.330000e+02 : f32
    %3 = vector.broadcast %cst_5 : f32 to vector<2x9x216xf32>
    %4 = arith.select %1, %2, %3 : vector<2x9x216xi1>, vector<2x9x216xf32>
    %cst_6 = arith.constant dense<0x7F800000> : vector<2x216xf32>
    %5 = vector.multi_reduction <minimumf>, %4, %cst_6 [1] : vector<2x9x216xf32> to vector<2x216xf32>
    %c0_7 = arith.constant 0 : index
    %c9 = arith.constant 9 : index
    %c0_8 = arith.constant 0 : index
    %6 = vector.load %arg2[%c0_7, %c9, %c0_8] : memref<2x216x216xi32, #tpu.memory_space<vmem>>, vector<2x11x216xi32>
    %cst_9 = arith.constant dense<0> : vector<2x11x216xi32>
    %7 = arith.cmpi ne, %6, %cst_9 : vector<2x11x216xi32>
    %c0_10 = arith.constant 0 : index
    %c9_11 = arith.constant 9 : index
    %c0_12 = arith.constant 0 : index
    %8 = vector.load %arg1[%c0_10, %c9_11, %c0_12] : memref<2x216x216xf32, #tpu.memory_space<vmem>>, vector<2x11x216xf32>
    %cst_13 = arith.constant 3.330000e+02 : f32
    %9 = vector.broadcast %cst_13 : f32 to vector<2x11x216xf32>
    %10 = arith.select %7, %8, %9 : vector<2x11x216xi1>, vector<2x11x216xf32>
    %cst_14 = arith.constant dense<0x7F800000> : vector<2x216xf32>
    %11 = vector.multi_reduction <minimumf>, %10, %cst_14 [1] : vector<2x11x216xf32> to vector<2x216xf32>
    %c0_15 = arith.constant 0 : index
    %c20 = arith.constant 20 : index
    %c0_16 = arith.constant 0 : index
    %12 = vector.load %arg2[%c0_15, %c20, %c0_16] : memref<2x216x216xi32, #tpu.memory_space<vmem>>, vector<2x11x216xi32>
    %cst_17 = arith.constant dense<0> : vector<2x11x216xi32>
    %13 = arith.cmpi ne, %12, %cst_17 : vector<2x11x216xi32>
    %c0_18 = arith.constant 0 : index
    %c20_19 = arith.constant 20 : index
    %c0_20 = arith.constant 0 : index
    %14 = vector.load %arg1[%c0_18, %c20_19, %c0_20] : memref<2x216x216xf32, #tpu.memory_space<vmem>>, vector<2x11x216xf32>
    %cst_21 = arith.constant 3.330000e+02 : f32
    %15 = vector.broadcast %cst_21 : f32 to vector<2x11x216xf32>
    %16 = arith.select %13, %14, %15 : vector<2x11x216xi1>, vector<2x11x216xf32>
    %cst_22 = arith.constant dense<0x7F800000> : vector<2x216xf32>
    %17 = vector.multi_reduction <minimumf>, %16, %cst_22 [1] : vector<2x11x216xf32> to vector<2x216xf32>
    %c0_23 = arith.constant 0 : index
    %c31 = arith.constant 31 : index
    %c0_24 = arith.constant 0 : index
    %18 = vector.load %arg2[%c0_23, %c31, %c0_24] : memref<2x216x216xi32, #tpu.memory_space<vmem>>, vector<2x11x216xi32>
    %cst_25 = arith.constant dense<0> : vector<2x11x216xi32>
    %19 = arith.cmpi ne, %18, %cst_25 : vector<2x11x216xi32>
    %c0_26 = arith.constant 0 : index
    %c31_27 = arith.constant 31 : index
    %c0_28 = arith.constant 0 : index
    %20 = vector.load %arg1[%c0_26, %c31_27, %c0_28] : memref<2x216x216xf32, #tpu.memory_space<vmem>>, vector<2x11x216xf32>
    %cst_29 = arith.constant 3.330000e+02 : f32
    %21 = vector.broadcast %cst_29 : f32 to vector<2x11x216xf32>
    %22 = arith.select %19, %20, %21 : vector<2x11x216xi1>, vector<2x11x216xf32>
    %cst_30 = arith.constant dense<0x7F800000> : vector<2x216xf32>
    %23 = vector.multi_reduction <minimumf>, %22, %cst_30 [1] : vector<2x11x216xf32> to vector<2x216xf32>
    %c0_31 = arith.constant 0 : index
    %c42 = arith.constant 42 : index
    %c0_32 = arith.constant 0 : index
    %24 = vector.load %arg2[%c0_31, %c42, %c0_32] : memref<2x216x216xi32, #tpu.memory_space<vmem>>, vector<2x11x216xi32>
    %cst_33 = arith.constant dense<0> : vector<2x11x216xi32>
    %25 = arith.cmpi ne, %24, %cst_33 : vector<2x11x216xi32>
    %c0_34 = arith.constant 0 : index
    %c42_35 = arith.constant 42 : index
    %c0_36 = arith.constant 0 : index
    %26 = vector.load %arg1[%c0_34, %c42_35, %c0_36] : memref<2x216x216xf32, #tpu.memory_space<vmem>>, vector<2x11x216xf32>
    %cst_37 = arith.constant 3.330000e+02 : f32
    %27 = vector.broadcast %cst_37 : f32 to vector<2x11x216xf32>
    %28 = arith.select %25, %26, %27 : vector<2x11x216xi1>, vector<2x11x216xf32>
    %cst_38 = arith.constant dense<0x7F800000> : vector<2x216xf32>
    %29 = vector.multi_reduction <minimumf>, %28, %cst_38 [1] : vector<2x11x216xf32> to vector<2x216xf32>
    %c0_39 = arith.constant 0 : index
    %c53 = arith.constant 53 : index
    %c0_40 = arith.constant 0 : index
    %30 = vector.load %arg2[%c0_39, %c53, %c0_40] : memref<2x216x216xi32, #tpu.memory_space<vmem>>, vector<2x11x216xi32>
    %cst_41 = arith.constant dense<0> : vector<2x11x216xi32>
    %31 = arith.cmpi ne, %30, %cst_41 : vector<2x11x216xi32>
    %c0_42 = arith.constant 0 : index
    %c53_43 = arith.constant 53 : index
    %c0_44 = arith.constant 0 : index
    %32 = vector.load %arg1[%c0_42, %c53_43, %c0_44] : memref<2x216x216xf32, #tpu.memory_space<vmem>>, vector<2x11x216xf32>
    %cst_45 = arith.constant 3.330000e+02 : f32
    %33 = vector.broadcast %cst_45 : f32 to vector<2x11x216xf32>
    %34 = arith.select %31, %32, %33 : vector<2x11x216xi1>, vector<2x11x216xf32>
    %cst_46 = arith.constant dense<0x7F800000> : vector<2x216xf32>
    %35 = vector.multi_reduction <minimumf>, %34, %cst_46 [1] : vector<2x11x216xf32> to vector<2x216xf32>
    %c0_47 = arith.constant 0 : index
    %c64 = arith.constant 64 : index
    %c0_48 = arith.constant 0 : index
    %36 = vector.load %arg2[%c0_47, %c64, %c0_48] : memref<2x216x216xi32, #tpu.memory_space<vmem>>, vector<2x11x216xi32>
    %cst_49 = arith.constant dense<0> : vector<2x11x216xi32>
    %37 = arith.cmpi ne, %36, %cst_49 : vector<2x11x216xi32>
    %c0_50 = arith.constant 0 : index
    %c64_51 = arith.constant 64 : index
    %c0_52 = arith.constant 0 : index
    %38 = vector.load %arg1[%c0_50, %c64_51, %c0_52] : memref<2x216x216xf32, #tpu.memory_space<vmem>>, vector<2x11x216xf32>
    %cst_53 = arith.constant 3.330000e+02 : f32
    %39 = vector.broadcast %cst_53 : f32 to vector<2x11x216xf32>
    %40 = arith.select %37, %38, %39 : vector<2x11x216xi1>, vector<2x11x216xf32>
    %cst_54 = arith.constant dense<0x7F800000> : vector<2x216xf32>
    %41 = vector.multi_reduction <minimumf>, %40, %cst_54 [1] : vector<2x11x216xf32> to vector<2x216xf32>
    %c0_55 = arith.constant 0 : index
    %c75 = arith.constant 75 : index
    %c0_56 = arith.constant 0 : index
    %42 = vector.load %arg2[%c0_55, %c75, %c0_56] : memref<2x216x216xi32, #tpu.memory_space<vmem>>, vector<2x11x216xi32>
    %cst_57 = arith.constant dense<0> : vector<2x11x216xi32>
    %43 = arith.cmpi ne, %42, %cst_57 : vector<2x11x216xi32>
    %c0_58 = arith.constant 0 : index
    %c75_59 = arith.constant 75 : index
    %c0_60 = arith.constant 0 : index
    %44 = vector.load %arg1[%c0_58, %c75_59, %c0_60] : memref<2x216x216xf32, #tpu.memory_space<vmem>>, vector<2x11x216xf32>
    %cst_61 = arith.constant 3.330000e+02 : f32
    %45 = vector.broadcast %cst_61 : f32 to vector<2x11x216xf32>
    %46 = arith.select %43, %44, %45 : vector<2x11x216xi1>, vector<2x11x216xf32>
    %cst_62 = arith.constant dense<0x7F800000> : vector<2x216xf32>
    %47 = vector.multi_reduction <minimumf>, %46, %cst_62 [1] : vector<2x11x216xf32> to vector<2x216xf32>
    %c0_63 = arith.constant 0 : index
    %c86 = arith.constant 86 : index
    %c0_64 = arith.constant 0 : index
    %48 = vector.load %arg2[%c0_63, %c86, %c0_64] : memref<2x216x216xi32, #tpu.memory_space<vmem>>, vector<2x11x216xi32>
    %cst_65 = arith.constant dense<0> : vector<2x11x216xi32>
    %49 = arith.cmpi ne, %48, %cst_65 : vector<2x11x216xi32>
    %c0_66 = arith.constant 0 : index
    %c86_67 = arith.constant 86 : index
    %c0_68 = arith.constant 0 : index
    %50 = vector.load %arg1[%c0_66, %c86_67, %c0_68] : memref<2x216x216xf32, #tpu.memory_space<vmem>>, vector<2x11x216xf32>
    %cst_69 = arith.constant 3.330000e+02 : f32
    %51 = vector.broadcast %cst_69 : f32 to vector<2x11x216xf32>
    %52 = arith.select %49, %50, %51 : vector<2x11x216xi1>, vector<2x11x216xf32>
    %cst_70 = arith.constant dense<0x7F800000> : vector<2x216xf32>
    %53 = vector.multi_reduction <minimumf>, %52, %cst_70 [1] : vector<2x11x216xf32> to vector<2x216xf32>
    %c0_71 = arith.constant 0 : index
    %c97 = arith.constant 97 : index
    %c0_72 = arith.constant 0 : index
    %54 = vector.load %arg2[%c0_71, %c97, %c0_72] : memref<2x216x216xi32, #tpu.memory_space<vmem>>, vector<2x11x216xi32>
    %cst_73 = arith.constant dense<0> : vector<2x11x216xi32>
    %55 = arith.cmpi ne, %54, %cst_73 : vector<2x11x216xi32>
    %c0_74 = arith.constant 0 : index
    %c97_75 = arith.constant 97 : index
    %c0_76 = arith.constant 0 : index
    %56 = vector.load %arg1[%c0_74, %c97_75, %c0_76] : memref<2x216x216xf32, #tpu.memory_space<vmem>>, vector<2x11x216xf32>
    %cst_77 = arith.constant 3.330000e+02 : f32
    %57 = vector.broadcast %cst_77 : f32 to vector<2x11x216xf32>
    %58 = arith.select %55, %56, %57 : vector<2x11x216xi1>, vector<2x11x216xf32>
    %cst_78 = arith.constant dense<0x7F800000> : vector<2x216xf32>
    %59 = vector.multi_reduction <minimumf>, %58, %cst_78 [1] : vector<2x11x216xf32> to vector<2x216xf32>
    %c0_79 = arith.constant 0 : index
    %c108 = arith.constant 108 : index
    %c0_80 = arith.constant 0 : index
    %60 = vector.load %arg2[%c0_79, %c108, %c0_80] : memref<2x216x216xi32, #tpu.memory_space<vmem>>, vector<2x11x216xi32>
    %cst_81 = arith.constant dense<0> : vector<2x11x216xi32>
    %61 = arith.cmpi ne, %60, %cst_81 : vector<2x11x216xi32>
    %c0_82 = arith.constant 0 : index
    %c108_83 = arith.constant 108 : index
    %c0_84 = arith.constant 0 : index
    %62 = vector.load %arg1[%c0_82, %c108_83, %c0_84] : memref<2x216x216xf32, #tpu.memory_space<vmem>>, vector<2x11x216xf32>
    %cst_85 = arith.constant 3.330000e+02 : f32
    %63 = vector.broadcast %cst_85 : f32 to vector<2x11x216xf32>
    %64 = arith.select %61, %62, %63 : vector<2x11x216xi1>, vector<2x11x216xf32>
    %cst_86 = arith.constant dense<0x7F800000> : vector<2x216xf32>
    %65 = vector.multi_reduction <minimumf>, %64, %cst_86 [1] : vector<2x11x216xf32> to vector<2x216xf32>
    %c0_87 = arith.constant 0 : index
    %c119 = arith.constant 119 : index
    %c0_88 = arith.constant 0 : index
    %66 = vector.load %arg2[%c0_87, %c119, %c0_88] : memref<2x216x216xi32, #tpu.memory_space<vmem>>, vector<2x11x216xi32>
    %cst_89 = arith.constant dense<0> : vector<2x11x216xi32>
    %67 = arith.cmpi ne, %66, %cst_89 : vector<2x11x216xi32>
    %c0_90 = arith.constant 0 : index
    %c119_91 = arith.constant 119 : index
    %c0_92 = arith.constant 0 : index
    %68 = vector.load %arg1[%c0_90, %c119_91, %c0_92] : memref<2x216x216xf32, #tpu.memory_space<vmem>>, vector<2x11x216xf32>
    %cst_93 = arith.constant 3.330000e+02 : f32
    %69 = vector.broadcast %cst_93 : f32 to vector<2x11x216xf32>
    %70 = arith.select %67, %68, %69 : vector<2x11x216xi1>, vector<2x11x216xf32>
    %cst_94 = arith.constant dense<0x7F800000> : vector<2x216xf32>
    %71 = vector.multi_reduction <minimumf>, %70, %cst_94 [1] : vector<2x11x216xf32> to vector<2x216xf32>
    %c0_95 = arith.constant 0 : index
    %c130 = arith.constant 130 : index
    %c0_96 = arith.constant 0 : index
    %72 = vector.load %arg2[%c0_95, %c130, %c0_96] : memref<2x216x216xi32, #tpu.memory_space<vmem>>, vector<2x11x216xi32>
    %cst_97 = arith.constant dense<0> : vector<2x11x216xi32>
    %73 = arith.cmpi ne, %72, %cst_97 : vector<2x11x216xi32>
    %c0_98 = arith.constant 0 : index
    %c130_99 = arith.constant 130 : index
    %c0_100 = arith.constant 0 : index
    %74 = vector.load %arg1[%c0_98, %c130_99, %c0_100] : memref<2x216x216xf32, #tpu.memory_space<vmem>>, vector<2x11x216xf32>
    %cst_101 = arith.constant 3.330000e+02 : f32
    %75 = vector.broadcast %cst_101 : f32 to vector<2x11x216xf32>
    %76 = arith.select %73, %74, %75 : vector<2x11x216xi1>, vector<2x11x216xf32>
    %cst_102 = arith.constant dense<0x7F800000> : vector<2x216xf32>
    %77 = vector.multi_reduction <minimumf>, %76, %cst_102 [1] : vector<2x11x216xf32> to vector<2x216xf32>
    %c0_103 = arith.constant 0 : index
    %c141 = arith.constant 141 : index
    %c0_104 = arith.constant 0 : index
    %78 = vector.load %arg2[%c0_103, %c141, %c0_104] : memref<2x216x216xi32, #tpu.memory_space<vmem>>, vector<2x11x216xi32>
    %cst_105 = arith.constant dense<0> : vector<2x11x216xi32>
    %79 = arith.cmpi ne, %78, %cst_105 : vector<2x11x216xi32>
    %c0_106 = arith.constant 0 : index
    %c141_107 = arith.constant 141 : index
    %c0_108 = arith.constant 0 : index
    %80 = vector.load %arg1[%c0_106, %c141_107, %c0_108] : memref<2x216x216xf32, #tpu.memory_space<vmem>>, vector<2x11x216xf32>
    %cst_109 = arith.constant 3.330000e+02 : f32
    %81 = vector.broadcast %cst_109 : f32 to vector<2x11x216xf32>
    %82 = arith.select %79, %80, %81 : vector<2x11x216xi1>, vector<2x11x216xf32>
    %cst_110 = arith.constant dense<0x7F800000> : vector<2x216xf32>
    %83 = vector.multi_reduction <minimumf>, %82, %cst_110 [1] : vector<2x11x216xf32> to vector<2x216xf32>
    %c0_111 = arith.constant 0 : index
    %c152 = arith.constant 152 : index
    %c0_112 = arith.constant 0 : index
    %84 = vector.load %arg2[%c0_111, %c152, %c0_112] : memref<2x216x216xi32, #tpu.memory_space<vmem>>, vector<2x11x216xi32>
    %cst_113 = arith.constant dense<0> : vector<2x11x216xi32>
    %85 = arith.cmpi ne, %84, %cst_113 : vector<2x11x216xi32>
    %c0_114 = arith.constant 0 : index
    %c152_115 = arith.constant 152 : index
    %c0_116 = arith.constant 0 : index
    %86 = vector.load %arg1[%c0_114, %c152_115, %c0_116] : memref<2x216x216xf32, #tpu.memory_space<vmem>>, vector<2x11x216xf32>
    %cst_117 = arith.constant 3.330000e+02 : f32
    %87 = vector.broadcast %cst_117 : f32 to vector<2x11x216xf32>
    %88 = arith.select %85, %86, %87 : vector<2x11x216xi1>, vector<2x11x216xf32>
    %cst_118 = arith.constant dense<0x7F800000> : vector<2x216xf32>
    %89 = vector.multi_reduction <minimumf>, %88, %cst_118 [1] : vector<2x11x216xf32> to vector<2x216xf32>
    %c0_119 = arith.constant 0 : index
    %c163 = arith.constant 163 : index
    %c0_120 = arith.constant 0 : index
    %90 = vector.load %arg2[%c0_119, %c163, %c0_120] : memref<2x216x216xi32, #tpu.memory_space<vmem>>, vector<2x11x216xi32>
    %cst_121 = arith.constant dense<0> : vector<2x11x216xi32>
    %91 = arith.cmpi ne, %90, %cst_121 : vector<2x11x216xi32>
    %c0_122 = arith.constant 0 : index
    %c163_123 = arith.constant 163 : index
    %c0_124 = arith.constant 0 : index
    %92 = vector.load %arg1[%c0_122, %c163_123, %c0_124] : memref<2x216x216xf32, #tpu.memory_space<vmem>>, vector<2x11x216xf32>
    %cst_125 = arith.constant 3.330000e+02 : f32
    %93 = vector.broadcast %cst_125 : f32 to vector<2x11x216xf32>
    %94 = arith.select %91, %92, %93 : vector<2x11x216xi1>, vector<2x11x216xf32>
    %cst_126 = arith.constant dense<0x7F800000> : vector<2x216xf32>
    %95 = vector.multi_reduction <minimumf>, %94, %cst_126 [1] : vector<2x11x216xf32> to vector<2x216xf32>
    %c0_127 = arith.constant 0 : index
    %c174 = arith.constant 174 : index
    %c0_128 = arith.constant 0 : index
    %96 = vector.load %arg2[%c0_127, %c174, %c0_128] : memref<2x216x216xi32, #tpu.memory_space<vmem>>, vector<2x11x216xi32>
    %cst_129 = arith.constant dense<0> : vector<2x11x216xi32>
    %97 = arith.cmpi ne, %96, %cst_129 : vector<2x11x216xi32>
    %c0_130 = arith.constant 0 : index
    %c174_131 = arith.constant 174 : index
    %c0_132 = arith.constant 0 : index
    %98 = vector.load %arg1[%c0_130, %c174_131, %c0_132] : memref<2x216x216xf32, #tpu.memory_space<vmem>>, vector<2x11x216xf32>
    %cst_133 = arith.constant 3.330000e+02 : f32
    %99 = vector.broadcast %cst_133 : f32 to vector<2x11x216xf32>
    %100 = arith.select %97, %98, %99 : vector<2x11x216xi1>, vector<2x11x216xf32>
    %cst_134 = arith.constant dense<0x7F800000> : vector<2x216xf32>
    %101 = vector.multi_reduction <minimumf>, %100, %cst_134 [1] : vector<2x11x216xf32> to vector<2x216xf32>
    %c0_135 = arith.constant 0 : index
    %c185 = arith.constant 185 : index
    %c0_136 = arith.constant 0 : index
    %102 = vector.load %arg2[%c0_135, %c185, %c0_136] : memref<2x216x216xi32, #tpu.memory_space<vmem>>, vector<2x11x216xi32>
    %cst_137 = arith.constant dense<0> : vector<2x11x216xi32>
    %103 = arith.cmpi ne, %102, %cst_137 : vector<2x11x216xi32>
    %c0_138 = arith.constant 0 : index
    %c185_139 = arith.constant 185 : index
    %c0_140 = arith.constant 0 : index
    %104 = vector.load %arg1[%c0_138, %c185_139, %c0_140] : memref<2x216x216xf32, #tpu.memory_space<vmem>>, vector<2x11x216xf32>
    %cst_141 = arith.constant 3.330000e+02 : f32
    %105 = vector.broadcast %cst_141 : f32 to vector<2x11x216xf32>
    %106 = arith.select %103, %104, %105 : vector<2x11x216xi1>, vector<2x11x216xf32>
    %cst_142 = arith.constant dense<0x7F800000> : vector<2x216xf32>
    %107 = vector.multi_reduction <minimumf>, %106, %cst_142 [1] : vector<2x11x216xf32> to vector<2x216xf32>
    %c0_143 = arith.constant 0 : index
    %c196 = arith.constant 196 : index
    %c0_144 = arith.constant 0 : index
    %108 = vector.load %arg2[%c0_143, %c196, %c0_144] : memref<2x216x216xi32, #tpu.memory_space<vmem>>, vector<2x11x216xi32>
    %cst_145 = arith.constant dense<0> : vector<2x11x216xi32>
    %109 = arith.cmpi ne, %108, %cst_145 : vector<2x11x216xi32>
    %c0_146 = arith.constant 0 : index
    %c196_147 = arith.constant 196 : index
    %c0_148 = arith.constant 0 : index
    %110 = vector.load %arg1[%c0_146, %c196_147, %c0_148] : memref<2x216x216xf32, #tpu.memory_space<vmem>>, vector<2x11x216xf32>
    %cst_149 = arith.constant 3.330000e+02 : f32
    %111 = vector.broadcast %cst_149 : f32 to vector<2x11x216xf32>
    %112 = arith.select %109, %110, %111 : vector<2x11x216xi1>, vector<2x11x216xf32>
    %cst_150 = arith.constant dense<0x7F800000> : vector<2x216xf32>
    %113 = vector.multi_reduction <minimumf>, %112, %cst_150 [1] : vector<2x11x216xf32> to vector<2x216xf32>
    %c0_151 = arith.constant 0 : index
    %c207 = arith.constant 207 : index
    %c0_152 = arith.constant 0 : index
    %114 = vector.load %arg2[%c0_151, %c207, %c0_152] : memref<2x216x216xi32, #tpu.memory_space<vmem>>, vector<2x9x216xi32>
    %cst_153 = arith.constant dense<0> : vector<2x9x216xi32>
    %115 = arith.cmpi ne, %114, %cst_153 : vector<2x9x216xi32>
    %c0_154 = arith.constant 0 : index
    %c207_155 = arith.constant 207 : index
    %c0_156 = arith.constant 0 : index
    %116 = vector.load %arg1[%c0_154, %c207_155, %c0_156] : memref<2x216x216xf32, #tpu.memory_space<vmem>>, vector<2x9x216xf32>
    %cst_157 = arith.constant 3.330000e+02 : f32
    %117 = vector.broadcast %cst_157 : f32 to vector<2x9x216xf32>
    %118 = arith.select %115, %116, %117 : vector<2x9x216xi1>, vector<2x9x216xf32>
    %cst_158 = arith.constant dense<0x7F800000> : vector<2x216xf32>
    %119 = vector.multi_reduction <minimumf>, %118, %cst_158 [1] : vector<2x9x216xf32> to vector<2x216xf32>
    %120 = vector.shape_cast %5 : vector<2x216xf32> to vector<2x1x216xf32>
    %121 = vector.shape_cast %11 : vector<2x216xf32> to vector<2x1x216xf32>
    %122 = vector.shape_cast %17 : vector<2x216xf32> to vector<2x1x216xf32>
    %123 = vector.shape_cast %23 : vector<2x216xf32> to vector<2x1x216xf32>
    %124 = vector.shape_cast %29 : vector<2x216xf32> to vector<2x1x216xf32>
    %125 = vector.shape_cast %35 : vector<2x216xf32> to vector<2x1x216xf32>
    %126 = vector.shape_cast %41 : vector<2x216xf32> to vector<2x1x216xf32>
    %127 = vector.shape_cast %47 : vector<2x216xf32> to vector<2x1x216xf32>
    %128 = vector.shape_cast %53 : vector<2x216xf32> to vector<2x1x216xf32>
    %129 = vector.shape_cast %59 : vector<2x216xf32> to vector<2x1x216xf32>
    %130 = vector.shape_cast %65 : vector<2x216xf32> to vector<2x1x216xf32>
    %131 = vector.shape_cast %71 : vector<2x216xf32> to vector<2x1x216xf32>
    %132 = vector.shape_cast %77 : vector<2x216xf32> to vector<2x1x216xf32>
    %133 = vector.shape_cast %83 : vector<2x216xf32> to vector<2x1x216xf32>
    %134 = vector.shape_cast %89 : vector<2x216xf32> to vector<2x1x216xf32>
    %135 = vector.shape_cast %95 : vector<2x216xf32> to vector<2x1x216xf32>
    %136 = vector.shape_cast %101 : vector<2x216xf32> to vector<2x1x216xf32>
    %137 = vector.shape_cast %107 : vector<2x216xf32> to vector<2x1x216xf32>
    %138 = vector.shape_cast %113 : vector<2x216xf32> to vector<2x1x216xf32>
    %139 = vector.shape_cast %119 : vector<2x216xf32> to vector<2x1x216xf32>
    %140 = tpu.concatenate %120, %121, %122, %123, %124, %125, %126, %127, %128, %129, %130, %131, %132, %133, %134, %135 in 1 : vector<2x1x216xf32>, vector<2x1x216xf32>, vector<2x1x216xf32>, vector<2x1x216xf32>, vector<2x1x216xf32>, vector<2x1x216xf32>, vector<2x1x216xf32>, vector<2x1x216xf32>, vector<2x1x216xf32>, vector<2x1x216xf32>, vector<2x1x216xf32>, vector<2x1x216xf32>, vector<2x1x216xf32>, vector<2x1x216xf32>, vector<2x1x216xf32>, vector<2x1x216xf32> -> vector<2x16x216xf32>
    %141 = tpu.concatenate %136, %137, %138, %139 in 1 : vector<2x1x216xf32>, vector<2x1x216xf32>, vector<2x1x216xf32>, vector<2x1x216xf32> -> vector<2x4x216xf32>
    %142 = tpu.concatenate %140, %141 in 1 : vector<2x16x216xf32>, vector<2x4x216xf32> -> vector<2x20x216xf32>
    %143 = vector.extract_strided_slice %142 {offsets = [0, 0, 0], sizes = [2, 20, 9], strides = [1, 1, 1]} : vector<2x20x216xf32> to vector<2x20x9xf32>
    %cst_159 = arith.constant dense<0x7F800000> : vector<2x20xf32>
    %144 = vector.multi_reduction <minimumf>, %143, %cst_159 [2] : vector<2x20x9xf32> to vector<2x20xf32>
    %145 = vector.extract_strided_slice %142 {offsets = [0, 0, 9], sizes = [2, 20, 11], strides = [1, 1, 1]} : vector<2x20x216xf32> to vector<2x20x11xf32>
    %cst_160 = arith.constant dense<0x7F800000> : vector<2x20xf32>
    %146 = vector.multi_reduction <minimumf>, %145, %cst_160 [2] : vector<2x20x11xf32> to vector<2x20xf32>
    %147 = vector.extract_strided_slice %142 {offsets = [0, 0, 20], sizes = [2, 20, 11], strides = [1, 1, 1]} : vector<2x20x216xf32> to vector<2x20x11xf32>
    %cst_161 = arith.constant dense<0x7F800000> : vector<2x20xf32>
    %148 = vector.multi_reduction <minimumf>, %147, %cst_161 [2] : vector<2x20x11xf32> to vector<2x20xf32>
    %149 = vector.extract_strided_slice %142 {offsets = [0, 0, 31], sizes = [2, 20, 11], strides = [1, 1, 1]} : vector<2x20x216xf32> to vector<2x20x11xf32>
    %cst_162 = arith.constant dense<0x7F800000> : vector<2x20xf32>
    %150 = vector.multi_reduction <minimumf>, %149, %cst_162 [2] : vector<2x20x11xf32> to vector<2x20xf32>
    %151 = vector.extract_strided_slice %142 {offsets = [0, 0, 42], sizes = [2, 20, 11], strides = [1, 1, 1]} : vector<2x20x216xf32> to vector<2x20x11xf32>
    %cst_163 = arith.constant dense<0x7F800000> : vector<2x20xf32>
    %152 = vector.multi_reduction <minimumf>, %151, %cst_163 [2] : vector<2x20x11xf32> to vector<2x20xf32>
    %153 = vector.extract_strided_slice %142 {offsets = [0, 0, 53], sizes = [2, 20, 11], strides = [1, 1, 1]} : vector<2x20x216xf32> to vector<2x20x11xf32>
    %cst_164 = arith.constant dense<0x7F800000> : vector<2x20xf32>
    %154 = vector.multi_reduction <minimumf>, %153, %cst_164 [2] : vector<2x20x11xf32> to vector<2x20xf32>
    %155 = vector.extract_strided_slice %142 {offsets = [0, 0, 64], sizes = [2, 20, 11], strides = [1, 1, 1]} : vector<2x20x216xf32> to vector<2x20x11xf32>
    %cst_165 = arith.constant dense<0x7F800000> : vector<2x20xf32>
    %156 = vector.multi_reduction <minimumf>, %155, %cst_165 [2] : vector<2x20x11xf32> to vector<2x20xf32>
    %157 = vector.extract_strided_slice %142 {offsets = [0, 0, 75], sizes = [2, 20, 11], strides = [1, 1, 1]} : vector<2x20x216xf32> to vector<2x20x11xf32>
    %cst_166 = arith.constant dense<0x7F800000> : vector<2x20xf32>
    %158 = vector.multi_reduction <minimumf>, %157, %cst_166 [2] : vector<2x20x11xf32> to vector<2x20xf32>
    %159 = vector.extract_strided_slice %142 {offsets = [0, 0, 86], sizes = [2, 20, 11], strides = [1, 1, 1]} : vector<2x20x216xf32> to vector<2x20x11xf32>
    %cst_167 = arith.constant dense<0x7F800000> : vector<2x20xf32>
    %160 = vector.multi_reduction <minimumf>, %159, %cst_167 [2] : vector<2x20x11xf32> to vector<2x20xf32>
    %161 = vector.extract_strided_slice %142 {offsets = [0, 0, 97], sizes = [2, 20, 11], strides = [1, 1, 1]} : vector<2x20x216xf32> to vector<2x20x11xf32>
    %cst_168 = arith.constant dense<0x7F800000> : vector<2x20xf32>
    %162 = vector.multi_reduction <minimumf>, %161, %cst_168 [2] : vector<2x20x11xf32> to vector<2x20xf32>
    %163 = vector.extract_strided_slice %142 {offsets = [0, 0, 108], sizes = [2, 20, 11], strides = [1, 1, 1]} : vector<2x20x216xf32> to vector<2x20x11xf32>
    %cst_169 = arith.constant dense<0x7F800000> : vector<2x20xf32>
    %164 = vector.multi_reduction <minimumf>, %163, %cst_169 [2] : vector<2x20x11xf32> to vector<2x20xf32>
    %165 = vector.extract_strided_slice %142 {offsets = [0, 0, 119], sizes = [2, 20, 11], strides = [1, 1, 1]} : vector<2x20x216xf32> to vector<2x20x11xf32>
    %cst_170 = arith.constant dense<0x7F800000> : vector<2x20xf32>
    %166 = vector.multi_reduction <minimumf>, %165, %cst_170 [2] : vector<2x20x11xf32> to vector<2x20xf32>
    %167 = vector.extract_strided_slice %142 {offsets = [0, 0, 130], sizes = [2, 20, 11], strides = [1, 1, 1]} : vector<2x20x216xf32> to vector<2x20x11xf32>
    %cst_171 = arith.constant dense<0x7F800000> : vector<2x20xf32>
    %168 = vector.multi_reduction <minimumf>, %167, %cst_171 [2] : vector<2x20x11xf32> to vector<2x20xf32>
    %169 = vector.extract_strided_slice %142 {offsets = [0, 0, 141], sizes = [2, 20, 11], strides = [1, 1, 1]} : vector<2x20x216xf32> to vector<2x20x11xf32>
    %cst_172 = arith.constant dense<0x7F800000> : vector<2x20xf32>
    %170 = vector.multi_reduction <minimumf>, %169, %cst_172 [2] : vector<2x20x11xf32> to vector<2x20xf32>
    %171 = vector.extract_strided_slice %142 {offsets = [0, 0, 152], sizes = [2, 20, 11], strides = [1, 1, 1]} : vector<2x20x216xf32> to vector<2x20x11xf32>
    %cst_173 = arith.constant dense<0x7F800000> : vector<2x20xf32>
    %172 = vector.multi_reduction <minimumf>, %171, %cst_173 [2] : vector<2x20x11xf32> to vector<2x20xf32>
    %173 = vector.extract_strided_slice %142 {offsets = [0, 0, 163], sizes = [2, 20, 11], strides = [1, 1, 1]} : vector<2x20x216xf32> to vector<2x20x11xf32>
    %cst_174 = arith.constant dense<0x7F800000> : vector<2x20xf32>
    %174 = vector.multi_reduction <minimumf>, %173, %cst_174 [2] : vector<2x20x11xf32> to vector<2x20xf32>
    %175 = vector.extract_strided_slice %142 {offsets = [0, 0, 174], sizes = [2, 20, 11], strides = [1, 1, 1]} : vector<2x20x216xf32> to vector<2x20x11xf32>
    %cst_175 = arith.constant dense<0x7F800000> : vector<2x20xf32>
    %176 = vector.multi_reduction <minimumf>, %175, %cst_175 [2] : vector<2x20x11xf32> to vector<2x20xf32>
    %177 = vector.extract_strided_slice %142 {offsets = [0, 0, 185], sizes = [2, 20, 11], strides = [1, 1, 1]} : vector<2x20x216xf32> to vector<2x20x11xf32>
    %cst_176 = arith.constant dense<0x7F800000> : vector<2x20xf32>
    %178 = vector.multi_reduction <minimumf>, %177, %cst_176 [2] : vector<2x20x11xf32> to vector<2x20xf32>
    %179 = vector.extract_strided_slice %142 {offsets = [0, 0, 196], sizes = [2, 20, 11], strides = [1, 1, 1]} : vector<2x20x216xf32> to vector<2x20x11xf32>
    %cst_177 = arith.constant dense<0x7F800000> : vector<2x20xf32>
    %180 = vector.multi_reduction <minimumf>, %179, %cst_177 [2] : vector<2x20x11xf32> to vector<2x20xf32>
    %181 = vector.extract_strided_slice %142 {offsets = [0, 0, 207], sizes = [2, 20, 9], strides = [1, 1, 1]} : vector<2x20x216xf32> to vector<2x20x9xf32>
    %cst_178 = arith.constant dense<0x7F800000> : vector<2x20xf32>
    %182 = vector.multi_reduction <minimumf>, %181, %cst_178 [2] : vector<2x20x9xf32> to vector<2x20xf32>
    %183 = tpu.concatenate %144, %146, %148, %150, %152, %154, %156, %158, %160, %162, %164, %166, %168, %170, %172, %174 in 1 : vector<2x20xf32>, vector<2x20xf32>, vector<2x20xf32>, vector<2x20xf32>, vector<2x20xf32>, vector<2x20xf32>, vector<2x20xf32>, vector<2x20xf32>, vector<2x20xf32>, vector<2x20xf32>, vector<2x20xf32>, vector<2x20xf32>, vector<2x20xf32>, vector<2x20xf32>, vector<2x20xf32>, vector<2x20xf32> -> vector<2x320xf32>
    %184 = tpu.concatenate %176, %178, %180, %182 in 1 : vector<2x20xf32>, vector<2x20xf32>, vector<2x20xf32>, vector<2x20xf32> -> vector<2x80xf32>
    %185 = tpu.concatenate %183, %184 in 1 : vector<2x320xf32>, vector<2x80xf32> -> vector<2x400xf32>
    %cst_179 = arith.constant 3.330000e+02 : f32
    %186 = vector.broadcast %cst_179 : f32 to vector<2x400xf32>
    %187 = arith.cmpf oeq, %185, %186 : vector<2x400xf32>
    %cst_180 = arith.constant 0.000000e+00 : f32
    %188 = vector.broadcast %cst_180 : f32 to vector<2x400xf32>
    %189 = arith.select %187, %188, %185 : vector<2x400xi1>, vector<2x400xf32>
    %c0_181 = arith.constant 0 : index
    %c0_182 = arith.constant 0 : index
    %190 = vector.load %arg3[%c0_181, %c0_182] : memref<400x80xf32, #tpu.memory_space<vmem>>, vector<400x80xf32>
    %cst_183 = arith.constant dense<0.000000e+00> : vector<2x80xf32>
    %191 = tpu.matmul %189, %190, %cst_183 {dimension_numbers = #tpu.dot_dimension_numbers<[1], [0], [0], [1], [0, 0, 1, 1], [], []>} : vector<2x400xf32>, vector<400x80xf32>, vector<2x80xf32> -> vector<2x80xf32>
    %c0_184 = arith.constant 0 : index
    %c0_185 = arith.constant 0 : index
    %192 = vector.load %arg4[%c0_184, %c0_185] : memref<1x80xf32, #tpu.memory_space<vmem>>, vector<1x80xf32>
    %193 = vector.broadcast %192 : vector<1x80xf32> to vector<2x80xf32>
    %194 = arith.addf %191, %193 : vector<2x80xf32>
    %cst_186 = arith.constant 0.000000e+00 : f32
    %195 = vector.broadcast %cst_186 : f32 to vector<2x80xf32>
    %196 = arith.maximumf %194, %195 : vector<2x80xf32>
    %c0_187 = arith.constant 0 : index
    %c0_188 = arith.constant 0 : index
    %197 = vector.load %arg5[%c0_187, %c0_188] : memref<80x9xf32, #tpu.memory_space<vmem>>, vector<80x9xf32>
    %cst_189 = arith.constant dense<0.000000e+00> : vector<2x9xf32>
    %198 = tpu.matmul %196, %197, %cst_189 {dimension_numbers = #tpu.dot_dimension_numbers<[1], [0], [0], [1], [0, 0, 1, 1], [], []>} : vector<2x80xf32>, vector<80x9xf32>, vector<2x9xf32> -> vector<2x9xf32>
    %c0_190 = arith.constant 0 : index
    %c0_191 = arith.constant 0 : index
    %199 = vector.load %arg6[%c0_190, %c0_191] : memref<1x9xf32, #tpu.memory_space<vmem>>, vector<1x9xf32>
    %200 = vector.broadcast %199 : vector<1x9xf32> to vector<2x9xf32>
    %201 = arith.addf %198, %200 : vector<2x9xf32>
    %c0_192 = arith.constant 0 : index
    %c0_193 = arith.constant 0 : index
    %c0_194 = arith.constant 0 : index
    %202 = vector.load %arg7[%c0_192, %c0_193, %c0_194] : memref<1x2x9xf32, #tpu.memory_space<vmem>>, vector<1x2x9xf32>
    %203 = vector.shape_cast %202 : vector<1x2x9xf32> to vector<2x9xf32>
    %204 = vector.shape_cast %201 : vector<2x9xf32> to vector<1x2x9xf32>
    tpu.vector_store %arg7[%c0_192, %c0_193, %c0_194], %204 {strides = array<i32>} : memref<1x2x9xf32, #tpu.memory_space<vmem>>, vector<1x2x9xf32>,
    return
  }
  func.func @transform_0(%arg0: i32) -> (i32, i32, i32) {
    %c0_i32 = arith.constant 0 : i32
    %c0_i32_0 = arith.constant 0 : i32
    %c0_i32_1 = arith.constant 0 : i32
    return %arg0, %c0_i32, %c0_i32_0 : i32, i32, i32
  }
  func.func @transform_1(%arg0: i32) -> (i32, i32, i32) {
    %c0_i32 = arith.constant 0 : i32
    %c0_i32_0 = arith.constant 0 : i32
    %c0_i32_1 = arith.constant 0 : i32
    return %arg0, %c0_i32, %c0_i32_0 : i32, i32, i32
  }
  func.func @transform_2(%arg0: i32) -> (i32, i32) {
    %c0_i32 = arith.constant 0 : i32
    %c0_i32_0 = arith.constant 0 : i32
    %c0_i32_1 = arith.constant 0 : i32
    return %c0_i32, %c0_i32_0 : i32, i32
  }
  func.func @transform_3(%arg0: i32) -> (i32, i32) {
    %c0_i32 = arith.constant 0 : i32
    %c0_i32_0 = arith.constant 0 : i32
    %c0_i32_1 = arith.constant 0 : i32
    return %c0_i32, %c0_i32_0 : i32, i32
  }
  func.func @transform_4(%arg0: i32) -> (i32, i32) {
    %c0_i32 = arith.constant 0 : i32
    %c0_i32_0 = arith.constant 0 : i32
    %c0_i32_1 = arith.constant 0 : i32
    return %c0_i32, %c0_i32_0 : i32, i32
  }
  func.func @transform_5(%arg0: i32) -> (i32, i32) {
    %c0_i32 = arith.constant 0 : i32
    %c0_i32_0 = arith.constant 0 : i32
    %c0_i32_1 = arith.constant 0 : i32
    return %c0_i32, %c0_i32_0 : i32, i32
  }
  func.func @transform_6(%arg0: i32) -> (i32, i32, i32) {
    %c0_i32 = arith.constant 0 : i32
    %c0_i32_0 = arith.constant 0 : i32
    %c0_i32_1 = arith.constant 0 : i32
    return %arg0, %c0_i32, %c0_i32_0 : i32, i32, i32
  }
}

</mosaic_0001>

<llo_original>
// kernel: track_agile_extractor.1
$region0: #{track_agile_extractor.1}
  #allocation0 [shape = 'u32[]', space=smem, size = 0x4, offset = 0x4, fixed_abs, tag = 'smem constant byte address 0x4 - core index']
  #allocation1 [shape = 'u32[144,128]{1,0:T(1,128)}', space=vmem, size = 0x12000, scoped, tag = 'internal scratch']
  %s0 = inlined_call_operand.vmem [shape: f32[2,216,216], index: 0, kind: input, shape index: {}]
  %s1 = inlined_call_operand.vmem [shape: s32[2,216,216], index: 1, kind: input, shape index: {}]
  %s2 = inlined_call_operand.vmem [shape: f32[400,80], index: 2, kind: input, shape index: {}]
  %s3 = inlined_call_operand.vmem [shape: f32[1,80], index: 3, kind: input, shape index: {}]
  %s4 = inlined_call_operand.vmem [shape: f32[80,9], index: 4, kind: input, shape index: {}]
  %s5 = inlined_call_operand.vmem [shape: f32[1,9], index: 5, kind: input, shape index: {}]
  %s6 = inlined_call_operand.hbm [shape: f32[1,2,9], index: 6, kind: output, shape index: {}]
  %s7 = sld [smem:[#allocation0]]
  $region34: #{track_agile_extractor.1} parent=0
    _
  %s9 = ssub.s32 1, %s7
  %s10 = scalar_select 0, %s9, %s7
  $region1: #{track_agile_extractor.1} parent=0
    #allocation2 [shape = 'u8[1024]{0}', space=vmem, size = 0x400, scoped, tag = 'output window, operand 0, single buffered']
    #allocation3 [shape = 's32[1]{0}', space=sflag, size = 0x4, scoped, tag = 'scoped memory for track_agile_extractor.1']
    %11 = vsyncpa [#allocation3], 0
    // Predicated region
    $region2: #{track_agile_extractor.1} parent=1 // pred_check
      _
    $region3: #{track_agile_extractor.1} parent=1 // pred_check_branch
      %13 = sbr.rel (0) target = $region5
    $region4: #{track_agile_extractor.1} parent=1 // pred_region
      _
    $region5: #{track_agile_extractor.1} parent=1 // pred_fallthru
      _
    // Predicated region
    $region6: #{track_agile_extractor.1} parent=1 // pred_check
      _
    $region7: #{track_agile_extractor.1} parent=1 // pred_check_branch
      %15 = sbr.rel (0) target = $region9
    $region8: #{track_agile_extractor.1} parent=1 // pred_region
      _
    $region9: #{track_agile_extractor.1} parent=1 // pred_fallthru
      _
    // Predicated region
    $region10: #{track_agile_extractor.1} parent=1 // pred_check
      _
    $region11: #{track_agile_extractor.1} parent=1 // pred_check_branch
      %17 = sbr.rel (0) target = $region13
    $region12: #{track_agile_extractor.1} parent=1 // pred_region
      _
    $region13: #{track_agile_extractor.1} parent=1 // pred_fallthru
      _
    // Predicated region
    $region14: #{track_agile_extractor.1} parent=1 // pred_check
      _
    $region15: #{track_agile_extractor.1} parent=1 // pred_check_branch
      %19 = sbr.rel (0) target = $region17
    $region16: #{track_agile_extractor.1} parent=1 // pred_region
      _
    $region17: #{track_agile_extractor.1} parent=1 // pred_fallthru
      _
    // Predicated region
    $region18: #{track_agile_extractor.1} parent=1 // pred_check
      _
    $region19: #{track_agile_extractor.1} parent=1 // pred_check_branch
      %21 = sbr.rel (0) target = $region21
    $region20: #{track_agile_extractor.1} parent=1 // pred_region
      _
    $region21: #{track_agile_extractor.1} parent=1 // pred_fallthru
      _
    // Predicated region
    $region22: #{track_agile_extractor.1} parent=1 // pred_check
      _
    $region23: #{track_agile_extractor.1} parent=1 // pred_check_branch
      %23 = sbr.rel (0) target = $region25
    $region24: #{track_agile_extractor.1} parent=1 // pred_region
      _
    $region25: #{track_agile_extractor.1} parent=1 // pred_fallthru
      _
    %v24 = vld [vmem:[%s1] sm:$0xff]
    %v25 = vld [vmem:[%s1 + $0x8] sm:$0xff]
    %v26 = vld [vmem:[%s1 + $0x10] sm:$0x1]
    %v27 = vld [vmem:[%s1 + $0x18] sm:$0x1]
    %v28 = vld [vmem:[%s1 + $0x1b0] sm:$0xff]
    %v29 = vld [vmem:[%s1 + $0x1b8] sm:$0xff]
    %v30 = vld [vmem:[%s1 + $0x1c0] sm:$0x1]
    %v31 = vld [vmem:[%s1 + $0x1c8] sm:$0x1]
    %vm32 = vcmp.ne.s32.totalorder %v24, 0
    %vm33 = vcmp.ne.s32.totalorder %v25, 0
    %vm34 = vcmp.ne.s32.totalorder %v26, 0
    %vm35 = vcmp.ne.s32.totalorder %v27, 0
    %vm36 = vcmp.ne.s32.totalorder %v28, 0
    %vm37 = vcmp.ne.s32.totalorder %v29, 0
    %vm38 = vcmp.ne.s32.totalorder %v30, 0
    %vm39 = vcmp.ne.s32.totalorder %v31, 0
    %v40 = vld [vmem:[%s0] sm:$0xff]
    %v41 = vld [vmem:[%s0 + $0x8] sm:$0xff]
    %v42 = vld [vmem:[%s0 + $0x10] sm:$0x1]
    %v43 = vld [vmem:[%s0 + $0x18] sm:$0x1]
    %v44 = vld [vmem:[%s0 + $0x1b0] sm:$0xff]
    %v45 = vld [vmem:[%s0 + $0x1b8] sm:$0xff]
    %v46 = vld [vmem:[%s0 + $0x1c0] sm:$0x1]
    %v47 = vld [vmem:[%s0 + $0x1c8] sm:$0x1]
    %v48 = vsel %vm32, %v40, 333.0
    %v49 = vsel %vm33, %v41, 333.0
    %v50 = vsel %vm34, %v42, 333.0
    %v51 = vsel %vm35, %v43, 333.0
    %v52 = vsel %vm36, %v44, 333.0
    %v53 = vsel %vm37, %v45, 333.0
    %v54 = vsel %vm38, %v46, 333.0
    %v55 = vsel %vm39, %v47, 333.0
    %vm56 = vcmask 1040384
    %v57 = vsel %vm56, %v50, inf
    %v58 = vmin.f32 %v48, %v57
    %v59 = vrot.slane %v58, 4
    %v60 = vmin.f32 %v58, %v59
    %v61 = vrot.slane %v60, 2
    %v62 = vmin.f32 %v60, %v61
    %v63 = vrot.slane %v62, 1
    %v64 = vmin.f32 %v62, %v63
    %vm65 = vcmask 719872
    %v66 = vsel %vm65, %v49, inf
    %vm67 = vcmask 712704
    %v68 = vsel %vm67, %v51, inf
    %v69 = vmin.f32 %v66, %v68
    %v70 = vrot.slane %v69, 4
    %v71 = vmin.f32 %v69, %v70
    %v72 = vrot.slane %v71, 2
    %v73 = vmin.f32 %v71, %v72
    %v74 = vrot.slane %v73, 1
    %v75 = vmin.f32 %v73, %v74
    %v76 = vsel %vm56, %v54, inf
    %v77 = vmin.f32 %v52, %v76
    %v78 = vrot.slane %v77, 4
    %v79 = vmin.f32 %v77, %v78
    %v80 = vrot.slane %v79, 2
    %v81 = vmin.f32 %v79, %v80
    %v82 = vrot.slane %v81, 1
    %v83 = vmin.f32 %v81, %v82
    %v84 = vsel %vm65, %v53, inf
    %v85 = vsel %vm67, %v55, inf
    %v86 = vmin.f32 %v84, %v85
    %v87 = vrot.slane %v86, 4
    %v88 = vmin.f32 %v86, %v87
    %v89 = vrot.slane %v88, 2
    %v90 = vmin.f32 %v88, %v89
    %v91 = vrot.slane %v90, 1
    %v92 = vmin.f32 %v90, %v91
    %v93 = vld [vmem:[%s1 + $0x10] sm:$0xfe]
    %v94 = vld [vmem:[%s1 + $0x18] sm:$0xfe]
    %v95 = vld [vmem:[%s1 + $0x20] sm:$0xf]
    %v96 = vld [vmem:[%s1 + $0x28] sm:$0xf]
    %v97 = vld [vmem:[%s1 + $0x1c0] sm:$0xfe]
    %v98 = vld [vmem:[%s1 + $0x1c8] sm:$0xfe]
    %v99 = vld [vmem:[%s1 + $0x1d0] sm:$0xf]
    %v100 = vld [vmem:[%s1 + $0x1d8] sm:$0xf]
    %vm101 = vcmp.ne.s32.totalorder %v93, 0
    %vm102 = vcmp.ne.s32.totalorder %v94, 0
    %vm103 = vcmp.ne.s32.totalorder %v95, 0
    %vm104 = vcmp.ne.s32.totalorder %v96, 0
    %vm105 = vcmp.ne.s32.totalorder %v97, 0
    %vm106 = vcmp.ne.s32.totalorder %v98, 0
    %vm107 = vcmp.ne.s32.totalorder %v99, 0
    %vm108 = vcmp.ne.s32.totalorder %v100, 0
    %v109 = vld [vmem:[%s0 + $0x10] sm:$0xfe]
    %v110 = vld [vmem:[%s0 + $0x18] sm:$0xfe]
    %v111 = vld [vmem:[%s0 + $0x20] sm:$0xf]
    %v112 = vld [vmem:[%s0 + $0x28] sm:$0xf]
    %v113 = vld [vmem:[%s0 + $0x1c0] sm:$0xfe]
    %v114 = vld [vmem:[%s0 + $0x1c8] sm:$0xfe]
    %v115 = vld [vmem:[%s0 + $0x1d0] sm:$0xf]
    %v116 = vld [vmem:[%s0 + $0x1d8] sm:$0xf]
    %v117 = vsel %vm101, %v109, 333.0
    %v118 = vsel %vm102, %v110, 333.0
    %v119 = vsel %vm103, %v111, 333.0
    %v120 = vsel %vm104, %v112, 333.0
    %v121 = vsel %vm105, %v113, 333.0
    %v122 = vsel %vm106, %v114, 333.0
    %v123 = vsel %vm107, %v115, 333.0
    %v124 = vsel %vm108, %v116, 333.0
    %vm125 = vcmask 1047553
    %v126 = vsel %vm125, %v117, inf
    %vm127 = vcmask 1043456
    %v128 = vsel %vm127, %v119, inf
    %v129 = vmin.f32 %v126, %v128
    %v130 = vrot.slane %v129, 4
    %v131 = vmin.f32 %v129, %v130
    %v132 = vrot.slane %v131, 2
    %v133 = vmin.f32 %v131, %v132
    %v134 = vrot.slane %v133, 1
    %v135 = vmin.f32 %v133, %v134
    %vm136 = vcmask 719873
    %v137 = vsel %vm136, %v118, inf
    %vm138 = vcmask 715776
    %v139 = vsel %vm138, %v120, inf
    %v140 = vmin.f32 %v137, %v139
    %v141 = vrot.slane %v140, 4
    %v142 = vmin.f32 %v140, %v141
    %v143 = vrot.slane %v142, 2
    %v144 = vmin.f32 %v142, %v143
    %v145 = vrot.slane %v144, 1
    %v146 = vmin.f32 %v144, %v145
    %v147 = vsel %vm125, %v121, inf
    %v148 = vsel %vm127, %v123, inf
    %v149 = vmin.f32 %v147, %v148
    %v150 = vrot.slane %v149, 4
    %v151 = vmin.f32 %v149, %v150
    %v152 = vrot.slane %v151, 2
    %v153 = vmin.f32 %v151, %v152
    %v154 = vrot.slane %v153, 1
    %v155 = vmin.f32 %v153, %v154
    %v156 = vsel %vm136, %v122, inf
    %v157 = vsel %vm138, %v124, inf
    %v158 = vmin.f32 %v156, %v157
    %v159 = vrot.slane %v158, 4
    %v160 = vmin.f32 %v158, %v159
    %v161 = vrot.slane %v160, 2
    %v162 = vmin.f32 %v160, %v161
    %v163 = vrot.slane %v162, 1
    %v164 = vmin.f32 %v162, %v163
    %v165 = vld [vmem:[%s1 + $0x20] sm:$0xf0]
    %v166 = vld [vmem:[%s1 + $0x28] sm:$0xf0]
    %v167 = vld [vmem:[%s1 + $0x30] sm:$0x7f]
    %v168 = vld [vmem:[%s1 + $0x38] sm:$0x7f]
    %v169 = vld [vmem:[%s1 + $0x1d0] sm:$0xf0]
    %v170 = vld [vmem:[%s1 + $0x1d8] sm:$0xf0]
    %v171 = vld [vmem:[%s1 + $0x1e0] sm:$0x7f]
    %v172 = vld [vmem:[%s1 + $0x1e8] sm:$0x7f]
    %vm173 = vcmp.ne.s32.totalorder %v165, 0
    %vm174 = vcmp.ne.s32.totalorder %v166, 0
    %vm175 = vcmp.ne.s32.totalorder %v167, 0
    %vm176 = vcmp.ne.s32.totalorder %v168, 0
    %vm177 = vcmp.ne.s32.totalorder %v169, 0
    %vm178 = vcmp.ne.s32.totalorder %v170, 0
    %vm179 = vcmp.ne.s32.totalorder %v171, 0
    %vm180 = vcmp.ne.s32.totalorder %v172, 0
    %v181 = vld [vmem:[%s0 + $0x20] sm:$0xf0]
    %v182 = vld [vmem:[%s0 + $0x28] sm:$0xf0]
    %v183 = vld [vmem:[%s0 + $0x30] sm:$0x7f]
    %v184 = vld [vmem:[%s0 + $0x38] sm:$0x7f]
    %v185 = vld [vmem:[%s0 + $0x1d0] sm:$0xf0]
    %v186 = vld [vmem:[%s0 + $0x1d8] sm:$0xf0]
    %v187 = vld [vmem:[%s0 + $0x1e0] sm:$0x7f]
    %v188 = vld [vmem:[%s0 + $0x1e8] sm:$0x7f]
    %v189 = vsel %vm173, %v181, 333.0
    %v190 = vsel %vm174, %v182, 333.0
    %v191 = vsel %vm175, %v183, 333.0
    %v192 = vsel %vm176, %v184, 333.0
    %v193 = vsel %vm177, %v185, 333.0
    %v194 = vsel %vm178, %v186, 333.0
    %v195 = vsel %vm179, %v187, 333.0
    %v196 = vsel %vm180, %v188, 333.0
    %vm197 = vcmask 1047556
    %v198 = vsel %vm197, %v189, inf
    %vm199 = vcmask 1046528
    %v200 = vsel %vm199, %v191, inf
    %v201 = vmin.f32 %v198, %v200
    %v202 = vrot.slane %v201, 4
    %v203 = vmin.f32 %v201, %v202
    %v204 = vrot.slane %v203, 2
    %v205 = vmin.f32 %v203, %v204
    %v206 = vrot.slane %v205, 1
    %v207 = vmin.f32 %v205, %v206
    %vm208 = vcmask 719876
    %v209 = vsel %vm208, %v190, inf
    %vm210 = vcmask 718848
    %v211 = vsel %vm210, %v192, inf
    %v212 = vmin.f32 %v209, %v211
    %v213 = vrot.slane %v212, 4
    %v214 = vmin.f32 %v212, %v213
    %v215 = vrot.slane %v214, 2
    %v216 = vmin.f32 %v214, %v215
    %v217 = vrot.slane %v216, 1
    %v218 = vmin.f32 %v216, %v217
    %v219 = vsel %vm197, %v193, inf
    %v220 = vsel %vm199, %v195, inf
    %v221 = vmin.f32 %v219, %v220
    %v222 = vrot.slane %v221, 4
    %v223 = vmin.f32 %v221, %v222
    %v224 = vrot.slane %v223, 2
    %v225 = vmin.f32 %v223, %v224
    %v226 = vrot.slane %v225, 1
    %v227 = vmin.f32 %v225, %v226
    %v228 = vsel %vm208, %v194, inf
    %v229 = vsel %vm210, %v196, inf
    %v230 = vmin.f32 %v228, %v229
    %v231 = vrot.slane %v230, 4
    %v232 = vmin.f32 %v230, %v231
    %v233 = vrot.slane %v232, 2
    %v234 = vmin.f32 %v232, %v233
    %v235 = vrot.slane %v234, 1
    %v236 = vmin.f32 %v234, %v235
    %v237 = vld [vmem:[%s1 + $0x30] sm:$0x80]
    %v238 = vld [vmem:[%s1 + $0x38] sm:$0x80]
    %v239 = vld [vmem:[%s1 + $0x40] sm:$0xff]
    %v240 = vld [vmem:[%s1 + $0x48] sm:$0xff]
    %v241 = vld [vmem:[%s1 + $0x50] sm:$0x3]
    %v242 = vld [vmem:[%s1 + $0x58] sm:$0x3]
    %v243 = vld [vmem:[%s1 + $0x1e0] sm:$0x80]
    %v244 = vld [vmem:[%s1 + $0x1e8] sm:$0x80]
    %v245 = vld [vmem:[%s1 + $0x1f0] sm:$0xff]
    %v246 = vld [vmem:[%s1 + $0x1f8] sm:$0xff]
    %v247 = vld [vmem:[%s1 + $0x200] sm:$0x3]
    %v248 = vld [vmem:[%s1 + $0x208] sm:$0x3]
    %vm249 = vcmp.ne.s32.totalorder %v237, 0
    %vm250 = vcmp.ne.s32.totalorder %v238, 0
    %vm251 = vcmp.ne.s32.totalorder %v239, 0
    %vm252 = vcmp.ne.s32.totalorder %v240, 0
    %vm253 = vcmp.ne.s32.totalorder %v241, 0
    %vm254 = vcmp.ne.s32.totalorder %v242, 0
    %vm255 = vcmp.ne.s32.totalorder %v243, 0
    %vm256 = vcmp.ne.s32.totalorder %v244, 0
    %vm257 = vcmp.ne.s32.totalorder %v245, 0
    %vm258 = vcmp.ne.s32.totalorder %v246, 0
    %vm259 = vcmp.ne.s32.totalorder %v247, 0
    %vm260 = vcmp.ne.s32.totalorder %v248, 0
    %v261 = vld [vmem:[%s0 + $0x30] sm:$0x80]
    %v262 = vld [vmem:[%s0 + $0x38] sm:$0x80]
    %v263 = vld [vmem:[%s0 + $0x40] sm:$0xff]
    %v264 = vld [vmem:[%s0 + $0x48] sm:$0xff]
    %v265 = vld [vmem:[%s0 + $0x50] sm:$0x3]
    %v266 = vld [vmem:[%s0 + $0x58] sm:$0x3]
    %v267 = vld [vmem:[%s0 + $0x1e0] sm:$0x80]
    %v268 = vld [vmem:[%s0 + $0x1e8] sm:$0x80]
    %v269 = vld [vmem:[%s0 + $0x1f0] sm:$0xff]
    %v270 = vld [vmem:[%s0 + $0x1f8] sm:$0xff]
    %v271 = vld [vmem:[%s0 + $0x200] sm:$0x3]
    %v272 = vld [vmem:[%s0 + $0x208] sm:$0x3]
    %v273 = vsel %vm249, %v261, 333.0
    %v274 = vsel %vm250, %v262, 333.0
    %v275 = vsel %vm251, %v263, 333.0
    %v276 = vsel %vm252, %v264, 333.0
    %v277 = vsel %vm253, %v265, 333.0
    %v278 = vsel %vm254, %v266, 333.0
    %v279 = vsel %vm255, %v267, 333.0
    %v280 = vsel %vm256, %v268, 333.0
    %v281 = vsel %vm257, %v269, 333.0
    %v282 = vsel %vm258, %v270, 333.0
    %v283 = vsel %vm259, %v271, 333.0
    %v284 = vsel %vm260, %v272, 333.0
    %vm285 = vcmask 1047559
    %v286 = vsel %vm285, %v273, inf
    %v287 = vmin.f32 %v286, %v275
    %vm288 = vcmask 1041408
    %v289 = vsel %vm288, %v277, inf
    %v290 = vmin.f32 %v287, %v289
    %v291 = vrot.slane %v290, 4
    %v292 = vmin.f32 %v290, %v291
    %v293 = vrot.slane %v292, 2
    %v294 = vmin.f32 %v292, %v293
    %v295 = vrot.slane %v294, 1
    %v296 = vmin.f32 %v294, %v295
    %vm297 = vcmask 719879
    %v298 = vsel %vm297, %v274, inf
    %v299 = vsel %vm65, %v276, inf
    %v300 = vmin.f32 %v298, %v299
    %vm301 = vcmask 713728
    %v302 = vsel %vm301, %v278, inf
    %v303 = vmin.f32 %v300, %v302
    %v304 = vrot.slane %v303, 4
    %v305 = vmin.f32 %v303, %v304
    %v306 = vrot.slane %v305, 2
    %v307 = vmin.f32 %v305, %v306
    %v308 = vrot.slane %v307, 1
    %v309 = vmin.f32 %v307, %v308
    %v310 = vsel %vm285, %v279, inf
    %v311 = vmin.f32 %v310, %v281
    %v312 = vsel %vm288, %v283, inf
    %v313 = vmin.f32 %v311, %v312
    %v314 = vrot.slane %v313, 4
    %v315 = vmin.f32 %v313, %v314
    %v316 = vrot.slane %v315, 2
    %v317 = vmin.f32 %v315, %v316
    %v318 = vrot.slane %v317, 1
    %v319 = vmin.f32 %v317, %v318
    %v320 = vsel %vm297, %v280, inf
    %v321 = vsel %vm65, %v282, inf
    %v322 = vmin.f32 %v320, %v321
    %v323 = vsel %vm301, %v284, inf
    %v324 = vmin.f32 %v322, %v323
    %v325 = vrot.slane %v324, 4
    %v326 = vmin.f32 %v324, %v325
    %v327 = vrot.slane %v326, 2
    %v328 = vmin.f32 %v326, %v327
    %v329 = vrot.slane %v328, 1
    %v330 = vmin.f32 %v328, %v329
    %v331 = vld [vmem:[%s1 + $0x50] sm:$0xfc]
    %v332 = vld [vmem:[%s1 + $0x58] sm:$0xfc]
    %v333 = vld [vmem:[%s1 + $0x60] sm:$0x1f]
    %v334 = vld [vmem:[%s1 + $0x68] sm:$0x1f]
    %v335 = vld [vmem:[%s1 + $0x200] sm:$0xfc]
    %v336 = vld [vmem:[%s1 + $0x208] sm:$0xfc]
    %v337 = vld [vmem:[%s1 + $0x210] sm:$0x1f]
    %v338 = vld [vmem:[%s1 + $0x218] sm:$0x1f]
    %vm339 = vcmp.ne.s32.totalorder %v331, 0
    %vm340 = vcmp.ne.s32.totalorder %v332, 0
    %vm341 = vcmp.ne.s32.totalorder %v333, 0
    %vm342 = vcmp.ne.s32.totalorder %v334, 0
    %vm343 = vcmp.ne.s32.totalorder %v335, 0
    %vm344 = vcmp.ne.s32.totalorder %v336, 0
    %vm345 = vcmp.ne.s32.totalorder %v337, 0
    %vm346 = vcmp.ne.s32.totalorder %v338, 0
    %v347 = vld [vmem:[%s0 + $0x50] sm:$0xfc]
    %v348 = vld [vmem:[%s0 + $0x58] sm:$0xfc]
    %v349 = vld [vmem:[%s0 + $0x60] sm:$0x1f]
    %v350 = vld [vmem:[%s0 + $0x68] sm:$0x1f]
    %v351 = vld [vmem:[%s0 + $0x200] sm:$0xfc]
    %v352 = vld [vmem:[%s0 + $0x208] sm:$0xfc]
    %v353 = vld [vmem:[%s0 + $0x210] sm:$0x1f]
    %v354 = vld [vmem:[%s0 + $0x218] sm:$0x1f]
    %v355 = vsel %vm339, %v347, 333.0
    %v356 = vsel %vm340, %v348, 333.0
    %v357 = vsel %vm341, %v349, 333.0
    %v358 = vsel %vm342, %v350, 333.0
    %v359 = vsel %vm343, %v351, 333.0
    %v360 = vsel %vm344, %v352, 333.0
    %v361 = vsel %vm345, %v353, 333.0
    %v362 = vsel %vm346, %v354, 333.0
    %vm363 = vcmask 1047554
    %v364 = vsel %vm363, %v355, inf
    %vm365 = vcmask 1044480
    %v366 = vsel %vm365, %v357, inf
    %v367 = vmin.f32 %v364, %v366
    %v368 = vrot.slane %v367, 4
    %v369 = vmin.f32 %v367, %v368
    %v370 = vrot.slane %v369, 2
    %v371 = vmin.f32 %v369, %v370
    %v372 = vrot.slane %v371, 1
    %v373 = vmin.f32 %v371, %v372
    %vm374 = vcmask 719874
    %v375 = vsel %vm374, %v356, inf
    %vm376 = vcmask 716800
    %v377 = vsel %vm376, %v358, inf
    %v378 = vmin.f32 %v375, %v377
    %v379 = vrot.slane %v378, 4
    %v380 = vmin.f32 %v378, %v379
    %v381 = vrot.slane %v380, 2
    %v382 = vmin.f32 %v380, %v381
    %v383 = vrot.slane %v382, 1
    %v384 = vmin.f32 %v382, %v383
    %v385 = vsel %vm363, %v359, inf
    %v386 = vsel %vm365, %v361, inf
    %v387 = vmin.f32 %v385, %v386
    %v388 = vrot.slane %v387, 4
    %v389 = vmin.f32 %v387, %v388
    %v390 = vrot.slane %v389, 2
    %v391 = vmin.f32 %v389, %v390
    %v392 = vrot.slane %v391, 1
    %v393 = vmin.f32 %v391, %v392
    %v394 = vsel %vm374, %v360, inf
    %v395 = vsel %vm376, %v362, inf
    %v396 = vmin.f32 %v394, %v395
    %v397 = vrot.slane %v396, 4
    %v398 = vmin.f32 %v396, %v397
    %v399 = vrot.slane %v398, 2
    %v400 = vmin.f32 %v398, %v399
    %v401 = vrot.slane %v400, 1
    %v402 = vmin.f32 %v400, %v401
    %v403 = vld [vmem:[%s1 + $0x60] sm:$0xe0]
    %v404 = vld [vmem:[%s1 + $0x68] sm:$0xe0]
    %v405 = vld [vmem:[%s1 + $0x70] sm:$0xff]
    %v406 = vld [vmem:[%s1 + $0x78] sm:$0xff]
    %v407 = vld [vmem:[%s1 + $0x210] sm:$0xe0]
    %v408 = vld [vmem:[%s1 + $0x218] sm:$0xe0]
    %v409 = vld [vmem:[%s1 + $0x220] sm:$0xff]
    %v410 = vld [vmem:[%s1 + $0x228] sm:$0xff]
    %vm411 = vcmp.ne.s32.totalorder %v403, 0
    %vm412 = vcmp.ne.s32.totalorder %v404, 0
    %vm413 = vcmp.ne.s32.totalorder %v405, 0
    %vm414 = vcmp.ne.s32.totalorder %v406, 0
    %vm415 = vcmp.ne.s32.totalorder %v407, 0
    %vm416 = vcmp.ne.s32.totalorder %v408, 0
    %vm417 = vcmp.ne.s32.totalorder %v409, 0
    %vm418 = vcmp.ne.s32.totalorder %v410, 0
    %v419 = vld [vmem:[%s0 + $0x60] sm:$0xe0]
    %v420 = vld [vmem:[%s0 + $0x68] sm:$0xe0]
    %v421 = vld [vmem:[%s0 + $0x70] sm:$0xff]
    %v422 = vld [vmem:[%s0 + $0x78] sm:$0xff]
    %v423 = vld [vmem:[%s0 + $0x210] sm:$0xe0]
    %v424 = vld [vmem:[%s0 + $0x218] sm:$0xe0]
    %v425 = vld [vmem:[%s0 + $0x220] sm:$0xff]
    %v426 = vld [vmem:[%s0 + $0x228] sm:$0xff]
    %v427 = vsel %vm411, %v419, 333.0
    %v428 = vsel %vm412, %v420, 333.0
    %v429 = vsel %vm413, %v421, 333.0
    %v430 = vsel %vm414, %v422, 333.0
    %v431 = vsel %vm415, %v423, 333.0
    %v432 = vsel %vm416, %v424, 333.0
    %v433 = vsel %vm417, %v425, 333.0
    %v434 = vsel %vm418, %v426, 333.0
    %vm435 = vcmask 1047557
    %v436 = vsel %vm435, %v427, inf
    %v437 = vmin.f32 %v436, %v429
    %v438 = vrot.slane %v437, 4
    %v439 = vmin.f32 %v437, %v438
    %v440 = vrot.slane %v439, 2
    %v441 = vmin.f32 %v439, %v440
    %v442 = vrot.slane %v441, 1
    %v443 = vmin.f32 %v441, %v442
    %vm444 = vcmask 719877
    %v445 = vsel %vm444, %v428, inf
    %v446 = vsel %vm65, %v430, inf
    %v447 = vmin.f32 %v445, %v446
    %v448 = vrot.slane %v447, 4
    %v449 = vmin.f32 %v447, %v448
    %v450 = vrot.slane %v449, 2
    %v451 = vmin.f32 %v449, %v450
    %v452 = vrot.slane %v451, 1
    %v453 = vmin.f32 %v451, %v452
    %v454 = vsel %vm435, %v431, inf
    %v455 = vmin.f32 %v454, %v433
    %v456 = vrot.slane %v455, 4
    %v457 = vmin.f32 %v455, %v456
    %v458 = vrot.slane %v457, 2
    %v459 = vmin.f32 %v457, %v458
    %v460 = vrot.slane %v459, 1
    %v461 = vmin.f32 %v459, %v460
    %v462 = vsel %vm444, %v432, inf
    %v463 = vsel %vm65, %v434, inf
    %v464 = vmin.f32 %v462, %v463
    %v465 = vrot.slane %v464, 4
    %v466 = vmin.f32 %v464, %v465
    %v467 = vrot.slane %v466, 2
    %v468 = vmin.f32 %v466, %v467
    %v469 = vrot.slane %v468, 1
    %v470 = vmin.f32 %v468, %v469
    %v471 = vld [vmem:[%s1 + $0x80] sm:$0xff]
    %v472 = vld [vmem:[%s1 + $0x88] sm:$0xff]
    %v473 = vld [vmem:[%s1 + $0x90] sm:$0x7]
    %v474 = vld [vmem:[%s1 + $0x98] sm:$0x7]
    %v475 = vld [vmem:[%s1 + $0x230] sm:$0xff]
    %v476 = vld [vmem:[%s1 + $0x238] sm:$0xff]
    %v477 = vld [vmem:[%s1 + $0x240] sm:$0x7]
    %v478 = vld [vmem:[%s1 + $0x248] sm:$0x7]
    %vm479 = vcmp.ne.s32.totalorder %v471, 0
    %vm480 = vcmp.ne.s32.totalorder %v472, 0
    %vm481 = vcmp.ne.s32.totalorder %v473, 0
    %vm482 = vcmp.ne.s32.totalorder %v474, 0
    %vm483 = vcmp.ne.s32.totalorder %v475, 0
    %vm484 = vcmp.ne.s32.totalorder %v476, 0
    %vm485 = vcmp.ne.s32.totalorder %v477, 0
    %vm486 = vcmp.ne.s32.totalorder %v478, 0
    %v487 = vld [vmem:[%s0 + $0x80] sm:$0xff]
    %v488 = vld [vmem:[%s0 + $0x88] sm:$0xff]
    %v489 = vld [vmem:[%s0 + $0x90] sm:$0x7]
    %v490 = vld [vmem:[%s0 + $0x98] sm:$0x7]
    %v491 = vld [vmem:[%s0 + $0x230] sm:$0xff]
    %v492 = vld [vmem:[%s0 + $0x238] sm:$0xff]
    %v493 = vld [vmem:[%s0 + $0x240] sm:$0x7]
    %v494 = vld [vmem:[%s0 + $0x248] sm:$0x7]
    %v495 = vsel %vm479, %v487, 333.0
    %v496 = vsel %vm480, %v488, 333.0
    %v497 = vsel %vm481, %v489, 333.0
    %v498 = vsel %vm482, %v490, 333.0
    %v499 = vsel %vm483, %v491, 333.0
    %v500 = vsel %vm484, %v492, 333.0
    %v501 = vsel %vm485, %v493, 333.0
    %v502 = vsel %vm486, %v494, 333.0
    %vm503 = vcmask 1042432
    %v504 = vsel %vm503, %v497, inf
    %v505 = vmin.f32 %v495, %v504
    %v506 = vrot.slane %v505, 4
    %v507 = vmin.f32 %v505, %v506
    %v508 = vrot.slane %v507, 2
    %v509 = vmin.f32 %v507, %v508
    %v510 = vrot.slane %v509, 1
    %v511 = vmin.f32 %v509, %v510
    %v512 = vsel %vm65, %v496, inf
    %vm513 = vcmask 714752
    %v514 = vsel %vm513, %v498, inf
    %v515 = vmin.f32 %v512, %v514
    %v516 = vrot.slane %v515, 4
    %v517 = vmin.f32 %v515, %v516
    %v518 = vrot.slane %v517, 2
    %v519 = vmin.f32 %v517, %v518
    %v520 = vrot.slane %v519, 1
    %v521 = vmin.f32 %v519, %v520
    %v522 = vsel %vm503, %v501, inf
    %v523 = vmin.f32 %v499, %v522
    %v524 = vrot.slane %v523, 4
    %v525 = vmin.f32 %v523, %v524
    %v526 = vrot.slane %v525, 2
    %v527 = vmin.f32 %v525, %v526
    %v528 = vrot.slane %v527, 1
    %v529 = vmin.f32 %v527, %v528
    %v530 = vsel %vm65, %v500, inf
    %v531 = vsel %vm513, %v502, inf
    %v532 = vmin.f32 %v530, %v531
    %v533 = vrot.slane %v532, 4
    %v534 = vmin.f32 %v532, %v533
    %v535 = vrot.slane %v534, 2
    %v536 = vmin.f32 %v534, %v535
    %v537 = vrot.slane %v536, 1
    %v538 = vmin.f32 %v536, %v537
    %v539 = vld [vmem:[%s1 + $0x90] sm:$0xf8]
    %v540 = vld [vmem:[%s1 + $0x98] sm:$0xf8]
    %v541 = vld [vmem:[%s1 + $0xa0] sm:$0x3f]
    %v542 = vld [vmem:[%s1 + $0xa8] sm:$0x3f]
    %v543 = vld [vmem:[%s1 + $0x240] sm:$0xf8]
    %v544 = vld [vmem:[%s1 + $0x248] sm:$0xf8]
    %v545 = vld [vmem:[%s1 + $0x250] sm:$0x3f]
    %v546 = vld [vmem:[%s1 + $0x258] sm:$0x3f]
    %vm547 = vcmp.ne.s32.totalorder %v539, 0
    %vm548 = vcmp.ne.s32.totalorder %v540, 0
    %vm549 = vcmp.ne.s32.totalorder %v541, 0
    %vm550 = vcmp.ne.s32.totalorder %v542, 0
    %vm551 = vcmp.ne.s32.totalorder %v543, 0
    %vm552 = vcmp.ne.s32.totalorder %v544, 0
    %vm553 = vcmp.ne.s32.totalorder %v545, 0
    %vm554 = vcmp.ne.s32.totalorder %v546, 0
    %v555 = vld [vmem:[%s0 + $0x90] sm:$0xf8]
    %v556 = vld [vmem:[%s0 + $0x98] sm:$0xf8]
    %v557 = vld [vmem:[%s0 + $0xa0] sm:$0x3f]
    %v558 = vld [vmem:[%s0 + $0xa8] sm:$0x3f]
    %v559 = vld [vmem:[%s0 + $0x240] sm:$0xf8]
    %v560 = vld [vmem:[%s0 + $0x248] sm:$0xf8]
    %v561 = vld [vmem:[%s0 + $0x250] sm:$0x3f]
    %v562 = vld [vmem:[%s0 + $0x258] sm:$0x3f]
    %v563 = vsel %vm547, %v555, 333.0
    %v564 = vsel %vm548, %v556, 333.0
    %v565 = vsel %vm549, %v557, 333.0
    %v566 = vsel %vm550, %v558, 333.0
    %v567 = vsel %vm551, %v559, 333.0
    %v568 = vsel %vm552, %v560, 333.0
    %v569 = vsel %vm553, %v561, 333.0
    %v570 = vsel %vm554, %v562, 333.0
    %vm571 = vcmask 1047555
    %v572 = vsel %vm571, %v563, inf
    %vm573 = vcmask 1045504
    %v574 = vsel %vm573, %v565, inf
    %v575 = vmin.f32 %v572, %v574
    %v576 = vrot.slane %v575, 4
    %v577 = vmin.f32 %v575, %v576
    %v578 = vrot.slane %v577, 2
    %v579 = vmin.f32 %v577, %v578
    %v580 = vrot.slane %v579, 1
    %v581 = vmin.f32 %v579, %v580
    %vm582 = vcmask 719875
    %v583 = vsel %vm582, %v564, inf
    %vm584 = vcmask 717824
    %v585 = vsel %vm584, %v566, inf
    %v586 = vmin.f32 %v583, %v585
    %v587 = vrot.slane %v586, 4
    %v588 = vmin.f32 %v586, %v587
    %v589 = vrot.slane %v588, 2
    %v590 = vmin.f32 %v588, %v589
    %v591 = vrot.slane %v590, 1
    %v592 = vmin.f32 %v590, %v591
    %v593 = vsel %vm571, %v567, inf
    %v594 = vsel %vm573, %v569, inf
    %v595 = vmin.f32 %v593, %v594
    %v596 = vrot.slane %v595, 4
    %v597 = vmin.f32 %v595, %v596
    %v598 = vrot.slane %v597, 2
    %v599 = vmin.f32 %v597, %v598
    %v600 = vrot.slane %v599, 1
    %v601 = vmin.f32 %v599, %v600
    %v602 = vsel %vm582, %v568, inf
    %v603 = vsel %vm584, %v570, inf
    %v604 = vmin.f32 %v602, %v603
    %v605 = vrot.slane %v604, 4
    %v606 = vmin.f32 %v604, %v605
    %v607 = vrot.slane %v606, 2
    %v608 = vmin.f32 %v606, %v607
    %v609 = vrot.slane %v608, 1
    %v610 = vmin.f32 %v608, %v609
    %v611 = vld [vmem:[%s1 + $0xa0] sm:$0xc0]
    %v612 = vld [vmem:[%s1 + $0xa8] sm:$0xc0]
    %v613 = vld [vmem:[%s1 + $0xb0] sm:$0xff]
    %v614 = vld [vmem:[%s1 + $0xb8] sm:$0xff]
    %v615 = vld [vmem:[%s1 + $0xc0] sm:$0x1]
    %v616 = vld [vmem:[%s1 + $0xc8] sm:$0x1]
    %v617 = vld [vmem:[%s1 + $0x250] sm:$0xc0]
    %v618 = vld [vmem:[%s1 + $0x258] sm:$0xc0]
    %v619 = vld [vmem:[%s1 + $0x260] sm:$0xff]
    %v620 = vld [vmem:[%s1 + $0x268] sm:$0xff]
    %v621 = vld [vmem:[%s1 + $0x270] sm:$0x1]
    %v622 = vld [vmem:[%s1 + $0x278] sm:$0x1]
    %vm623 = vcmp.ne.s32.totalorder %v611, 0
    %vm624 = vcmp.ne.s32.totalorder %v612, 0
    %vm625 = vcmp.ne.s32.totalorder %v613, 0
    %vm626 = vcmp.ne.s32.totalorder %v614, 0
    %vm627 = vcmp.ne.s32.totalorder %v615, 0
    %vm628 = vcmp.ne.s32.totalorder %v616, 0
    %vm629 = vcmp.ne.s32.totalorder %v617, 0
    %vm630 = vcmp.ne.s32.totalorder %v618, 0
    %vm631 = vcmp.ne.s32.totalorder %v619, 0
    %vm632 = vcmp.ne.s32.totalorder %v620, 0
    %vm633 = vcmp.ne.s32.totalorder %v621, 0
    %vm634 = vcmp.ne.s32.totalorder %v622, 0
    %v635 = vld [vmem:[%s0 + $0xa0] sm:$0xc0]
    %v636 = vld [vmem:[%s0 + $0xa8] sm:$0xc0]
    %v637 = vld [vmem:[%s0 + $0xb0] sm:$0xff]
    %v638 = vld [vmem:[%s0 + $0xb8] sm:$0xff]
    %v639 = vld [vmem:[%s0 + $0xc0] sm:$0x1]
    %v640 = vld [vmem:[%s0 + $0xc8] sm:$0x1]
    %v641 = vld [vmem:[%s0 + $0x250] sm:$0xc0]
    %v642 = vld [vmem:[%s0 + $0x258] sm:$0xc0]
    %v643 = vld [vmem:[%s0 + $0x260] sm:$0xff]
    %v644 = vld [vmem:[%s0 + $0x268] sm:$0xff]
    %v645 = vld [vmem:[%s0 + $0x270] sm:$0x1]
    %v646 = vld [vmem:[%s0 + $0x278] sm:$0x1]
    %v647 = vsel %vm623, %v635, 333.0
    %v648 = vsel %vm624, %v636, 333.0
    %v649 = vsel %vm625, %v637, 333.0
    %v650 = vsel %vm626, %v638, 333.0
    %v651 = vsel %vm627, %v639, 333.0
    %v652 = vsel %vm628, %v640, 333.0
    %v653 = vsel %vm629, %v641, 333.0
    %v654 = vsel %vm630, %v642, 333.0
    %v655 = vsel %vm631, %v643, 333.0
    %v656 = vsel %vm632, %v644, 333.0
    %v657 = vsel %vm633, %v645, 333.0
    %v658 = vsel %vm634, %v646, 333.0
    %vm659 = vcmask 1047558
    %v660 = vsel %vm659, %v647, inf
    %v661 = vmin.f32 %v660, %v649
    %v662 = vsel %vm56, %v651, inf
    %v663 = vmin.f32 %v661, %v662
    %v664 = vrot.slane %v663, 4
    %v665 = vmin.f32 %v663, %v664
    %v666 = vrot.slane %v665, 2
    %v667 = vmin.f32 %v665, %v666
    %v668 = vrot.slane %v667, 1
    %v669 = vmin.f32 %v667, %v668
    %vm670 = vcmask 719878
    %v671 = vsel %vm670, %v648, inf
    %v672 = vsel %vm65, %v650, inf
    %v673 = vmin.f32 %v671, %v672
    %v674 = vsel %vm67, %v652, inf
    %v675 = vmin.f32 %v673, %v674
    %v676 = vrot.slane %v675, 4
    %v677 = vmin.f32 %v675, %v676
    %v678 = vrot.slane %v677, 2
    %v679 = vmin.f32 %v677, %v678
    %v680 = vrot.slane %v679, 1
    %v681 = vmin.f32 %v679, %v680
    %v682 = vsel %vm659, %v653, inf
    %v683 = vmin.f32 %v682, %v655
    %v684 = vsel %vm56, %v657, inf
    %v685 = vmin.f32 %v683, %v684
    %v686 = vrot.slane %v685, 4
    %v687 = vmin.f32 %v685, %v686
    %v688 = vrot.slane %v687, 2
    %v689 = vmin.f32 %v687, %v688
    %v690 = vrot.slane %v689, 1
    %v691 = vmin.f32 %v689, %v690
    %v692 = vsel %vm670, %v654, inf
    %v693 = vsel %vm65, %v656, inf
    %v694 = vmin.f32 %v692, %v693
    %v695 = vsel %vm67, %v658, inf
    %v696 = vmin.f32 %v694, %v695
    %v697 = vrot.slane %v696, 4
    %v698 = vmin.f32 %v696, %v697
    %v699 = vrot.slane %v698, 2
    %v700 = vmin.f32 %v698, %v699
    %v701 = vrot.slane %v700, 1
    %v702 = vmin.f32 %v700, %v701
    %v703 = vld [vmem:[%s1 + $0xc0] sm:$0xfe]
    %v704 = vld [vmem:[%s1 + $0xc8] sm:$0xfe]
    %v705 = vld [vmem:[%s1 + $0xd0] sm:$0xf]
    %v706 = vld [vmem:[%s1 + $0xd8] sm:$0xf]
    %v707 = vld [vmem:[%s1 + $0x270] sm:$0xfe]
    %v708 = vld [vmem:[%s1 + $0x278] sm:$0xfe]
    %v709 = vld [vmem:[%s1 + $0x280] sm:$0xf]
    %v710 = vld [vmem:[%s1 + $0x288] sm:$0xf]
    %vm711 = vcmp.ne.s32.totalorder %v703, 0
    %vm712 = vcmp.ne.s32.totalorder %v704, 0
    %vm713 = vcmp.ne.s32.totalorder %v705, 0
    %vm714 = vcmp.ne.s32.totalorder %v706, 0
    %vm715 = vcmp.ne.s32.totalorder %v707, 0
    %vm716 = vcmp.ne.s32.totalorder %v708, 0
    %vm717 = vcmp.ne.s32.totalorder %v709, 0
    %vm718 = vcmp.ne.s32.totalorder %v710, 0
    %v719 = vld [vmem:[%s0 + $0xc0] sm:$0xfe]
    %v720 = vld [vmem:[%s0 + $0xc8] sm:$0xfe]
    %v721 = vld [vmem:[%s0 + $0xd0] sm:$0xf]
    %v722 = vld [vmem:[%s0 + $0xd8] sm:$0xf]
    %v723 = vld [vmem:[%s0 + $0x270] sm:$0xfe]
    %v724 = vld [vmem:[%s0 + $0x278] sm:$0xfe]
    %v725 = vld [vmem:[%s0 + $0x280] sm:$0xf]
    %v726 = vld [vmem:[%s0 + $0x288] sm:$0xf]
    %v727 = vsel %vm711, %v719, 333.0
    %v728 = vsel %vm712, %v720, 333.0
    %v729 = vsel %vm713, %v721, 333.0
    %v730 = vsel %vm714, %v722, 333.0
    %v731 = vsel %vm715, %v723, 333.0
    %v732 = vsel %vm716, %v724, 333.0
    %v733 = vsel %vm717, %v725, 333.0
    %v734 = vsel %vm718, %v726, 333.0
    %v735 = vsel %vm125, %v727, inf
    %v736 = vsel %vm127, %v729, inf
    %v737 = vmin.f32 %v735, %v736
    %v738 = vrot.slane %v737, 4
    %v739 = vmin.f32 %v737, %v738
    %v740 = vrot.slane %v739, 2
    %v741 = vmin.f32 %v739, %v740
    %v742 = vrot.slane %v741, 1
    %v743 = vmin.f32 %v741, %v742
    %v744 = vsel %vm136, %v728, inf
    %v745 = vsel %vm138, %v730, inf
    %v746 = vmin.f32 %v744, %v745
    %v747 = vrot.slane %v746, 4
    %v748 = vmin.f32 %v746, %v747
    %v749 = vrot.slane %v748, 2
    %v750 = vmin.f32 %v748, %v749
    %v751 = vrot.slane %v750, 1
    %v752 = vmin.f32 %v750, %v751
    %v753 = vsel %vm125, %v731, inf
    %v754 = vsel %vm127, %v733, inf
    %v755 = vmin.f32 %v753, %v754
    %v756 = vrot.slane %v755, 4
    %v757 = vmin.f32 %v755, %v756
    %v758 = vrot.slane %v757, 2
    %v759 = vmin.f32 %v757, %v758
    %v760 = vrot.slane %v759, 1
    %v761 = vmin.f32 %v759, %v760
    %v762 = vsel %vm136, %v732, inf
    %v763 = vsel %vm138, %v734, inf
    %v764 = vmin.f32 %v762, %v763
    %v765 = vrot.slane %v764, 4
    %v766 = vmin.f32 %v764, %v765
    %v767 = vrot.slane %v766, 2
    %v768 = vmin.f32 %v766, %v767
    %v769 = vrot.slane %v768, 1
    %v770 = vmin.f32 %v768, %v769
    %v771 = vld [vmem:[%s1 + $0xd0] sm:$0xf0]
    %v772 = vld [vmem:[%s1 + $0xd8] sm:$0xf0]
    %v773 = vld [vmem:[%s1 + $0xe0] sm:$0x7f]
    %v774 = vld [vmem:[%s1 + $0xe8] sm:$0x7f]
    %v775 = vld [vmem:[%s1 + $0x280] sm:$0xf0]
    %v776 = vld [vmem:[%s1 + $0x288] sm:$0xf0]
    %v777 = vld [vmem:[%s1 + $0x290] sm:$0x7f]
    %v778 = vld [vmem:[%s1 + $0x298] sm:$0x7f]
    %vm779 = vcmp.ne.s32.totalorder %v771, 0
    %vm780 = vcmp.ne.s32.totalorder %v772, 0
    %vm781 = vcmp.ne.s32.totalorder %v773, 0
    %vm782 = vcmp.ne.s32.totalorder %v774, 0
    %vm783 = vcmp.ne.s32.totalorder %v775, 0
    %vm784 = vcmp.ne.s32.totalorder %v776, 0
    %vm785 = vcmp.ne.s32.totalorder %v777, 0
    %vm786 = vcmp.ne.s32.totalorder %v778, 0
    %v787 = vld [vmem:[%s0 + $0xd0] sm:$0xf0]
    %v788 = vld [vmem:[%s0 + $0xd8] sm:$0xf0]
    %v789 = vld [vmem:[%s0 + $0xe0] sm:$0x7f]
    %v790 = vld [vmem:[%s0 + $0xe8] sm:$0x7f]
    %v791 = vld [vmem:[%s0 + $0x280] sm:$0xf0]
    %v792 = vld [vmem:[%s0 + $0x288] sm:$0xf0]
    %v793 = vld [vmem:[%s0 + $0x290] sm:$0x7f]
    %v794 = vld [vmem:[%s0 + $0x298] sm:$0x7f]
    %v795 = vsel %vm779, %v787, 333.0
    %v796 = vsel %vm780, %v788, 333.0
    %v797 = vsel %vm781, %v789, 333.0
    %v798 = vsel %vm782, %v790, 333.0
    %v799 = vsel %vm783, %v791, 333.0
    %v800 = vsel %vm784, %v792, 333.0
    %v801 = vsel %vm785, %v793, 333.0
    %v802 = vsel %vm786, %v794, 333.0
    %v803 = vsel %vm197, %v795, inf
    %v804 = vsel %vm199, %v797, inf
    %v805 = vmin.f32 %v803, %v804
    %v806 = vrot.slane %v805, 4
    %v807 = vmin.f32 %v805, %v806
    %v808 = vrot.slane %v807, 2
    %v809 = vmin.f32 %v807, %v808
    %v810 = vrot.slane %v809, 1
    %v811 = vmin.f32 %v809, %v810
    %v812 = vsel %vm208, %v796, inf
    %v813 = vsel %vm210, %v798, inf
    %v814 = vmin.f32 %v812, %v813
    %v815 = vrot.slane %v814, 4
    %v816 = vmin.f32 %v814, %v815
    %v817 = vrot.slane %v816, 2
    %v818 = vmin.f32 %v816, %v817
    %v819 = vrot.slane %v818, 1
    %v820 = vmin.f32 %v818, %v819
    %v821 = vsel %vm197, %v799, inf
    %v822 = vsel %vm199, %v801, inf
    %v823 = vmin.f32 %v821, %v822
    %v824 = vrot.slane %v823, 4
    %v825 = vmin.f32 %v823, %v824
    %v826 = vrot.slane %v825, 2
    %v827 = vmin.f32 %v825, %v826
    %v828 = vrot.slane %v827, 1
    %v829 = vmin.f32 %v827, %v828
    %v830 = vsel %vm208, %v800, inf
    %v831 = vsel %vm210, %v802, inf
    %v832 = vmin.f32 %v830, %v831
    %v833 = vrot.slane %v832, 4
    %v834 = vmin.f32 %v832, %v833
    %v835 = vrot.slane %v834, 2
    %v836 = vmin.f32 %v834, %v835
    %v837 = vrot.slane %v836, 1
    %v838 = vmin.f32 %v836, %v837
    %v839 = vld [vmem:[%s1 + $0xe0] sm:$0x80]
    %v840 = vld [vmem:[%s1 + $0xe8] sm:$0x80]
    %v841 = vld [vmem:[%s1 + $0xf0] sm:$0xff]
    %v842 = vld [vmem:[%s1 + $0xf8] sm:$0xff]
    %v843 = vld [vmem:[%s1 + $0x100] sm:$0x3]
    %v844 = vld [vmem:[%s1 + $0x108] sm:$0x3]
    %v845 = vld [vmem:[%s1 + $0x290] sm:$0x80]
    %v846 = vld [vmem:[%s1 + $0x298] sm:$0x80]
    %v847 = vld [vmem:[%s1 + $0x2a0] sm:$0xff]
    %v848 = vld [vmem:[%s1 + $0x2a8] sm:$0xff]
    %v849 = vld [vmem:[%s1 + $0x2b0] sm:$0x3]
    %v850 = vld [vmem:[%s1 + $0x2b8] sm:$0x3]
    %vm851 = vcmp.ne.s32.totalorder %v839, 0
    %vm852 = vcmp.ne.s32.totalorder %v840, 0
    %vm853 = vcmp.ne.s32.totalorder %v841, 0
    %vm854 = vcmp.ne.s32.totalorder %v842, 0
    %vm855 = vcmp.ne.s32.totalorder %v843, 0
    %vm856 = vcmp.ne.s32.totalorder %v844, 0
    %vm857 = vcmp.ne.s32.totalorder %v845, 0
    %vm858 = vcmp.ne.s32.totalorder %v846, 0
    %vm859 = vcmp.ne.s32.totalorder %v847, 0
    %vm860 = vcmp.ne.s32.totalorder %v848, 0
    %vm861 = vcmp.ne.s32.totalorder %v849, 0
    %vm862 = vcmp.ne.s32.totalorder %v850, 0
    %v863 = vld [vmem:[%s0 + $0xe0] sm:$0x80]
    %v864 = vld [vmem:[%s0 + $0xe8] sm:$0x80]
    %v865 = vld [vmem:[%s0 + $0xf0] sm:$0xff]
    %v866 = vld [vmem:[%s0 + $0xf8] sm:$0xff]
    %v867 = vld [vmem:[%s0 + $0x100] sm:$0x3]
    %v868 = vld [vmem:[%s0 + $0x108] sm:$0x3]
    %v869 = vld [vmem:[%s0 + $0x290] sm:$0x80]
    %v870 = vld [vmem:[%s0 + $0x298] sm:$0x80]
    %v871 = vld [vmem:[%s0 + $0x2a0] sm:$0xff]
    %v872 = vld [vmem:[%s0 + $0x2a8] sm:$0xff]
    %v873 = vld [vmem:[%s0 + $0x2b0] sm:$0x3]
    %v874 = vld [vmem:[%s0 + $0x2b8] sm:$0x3]
    %v875 = vsel %vm851, %v863, 333.0
    %v876 = vsel %vm852, %v864, 333.0
    %v877 = vsel %vm853, %v865, 333.0
    %v878 = vsel %vm854, %v866, 333.0
    %v879 = vsel %vm855, %v867, 333.0
    %v880 = vsel %vm856, %v868, 333.0
    %v881 = vsel %vm857, %v869, 333.0
    %v882 = vsel %vm858, %v870, 333.0
    %v883 = vsel %vm859, %v871, 333.0
    %v884 = vsel %vm860, %v872, 333.0
    %v885 = vsel %vm861, %v873, 333.0
    %v886 = vsel %vm862, %v874, 333.0
    %v887 = vsel %vm285, %v875, inf
    %v888 = vmin.f32 %v887, %v877
    %v889 = vsel %vm288, %v879, inf
    %v890 = vmin.f32 %v888, %v889
    %v891 = vrot.slane %v890, 4
    %v892 = vmin.f32 %v890, %v891
    %v893 = vrot.slane %v892, 2
    %v894 = vmin.f32 %v892, %v893
    %v895 = vrot.slane %v894, 1
    %v896 = vmin.f32 %v894, %v895
    %v897 = vsel %vm297, %v876, inf
    %v898 = vsel %vm65, %v878, inf
    %v899 = vmin.f32 %v897, %v898
    %v900 = vsel %vm301, %v880, inf
    %v901 = vmin.f32 %v899, %v900
    %v902 = vrot.slane %v901, 4
    %v903 = vmin.f32 %v901, %v902
    %v904 = vrot.slane %v903, 2
    %v905 = vmin.f32 %v903, %v904
    %v906 = vrot.slane %v905, 1
    %v907 = vmin.f32 %v905, %v906
    %v908 = vsel %vm285, %v881, inf
    %v909 = vmin.f32 %v908, %v883
    %v910 = vsel %vm288, %v885, inf
    %v911 = vmin.f32 %v909, %v910
    %v912 = vrot.slane %v911, 4
    %v913 = vmin.f32 %v911, %v912
    %v914 = vrot.slane %v913, 2
    %v915 = vmin.f32 %v913, %v914
    %v916 = vrot.slane %v915, 1
    %v917 = vmin.f32 %v915, %v916
    %v918 = vsel %vm297, %v882, inf
    %v919 = vsel %vm65, %v884, inf
    %v920 = vmin.f32 %v918, %v919
    %v921 = vsel %vm301, %v886, inf
    %v922 = vmin.f32 %v920, %v921
    %v923 = vrot.slane %v922, 4
    %v924 = vmin.f32 %v922, %v923
    %v925 = vrot.slane %v924, 2
    %v926 = vmin.f32 %v924, %v925
    %v927 = vrot.slane %v926, 1
    %v928 = vmin.f32 %v926, %v927
    %v929 = vld [vmem:[%s1 + $0x100] sm:$0xfc]
    %v930 = vld [vmem:[%s1 + $0x108] sm:$0xfc]
    %v931 = vld [vmem:[%s1 + $0x110] sm:$0x1f]
    %v932 = vld [vmem:[%s1 + $0x118] sm:$0x1f]
    %v933 = vld [vmem:[%s1 + $0x2b0] sm:$0xfc]
    %v934 = vld [vmem:[%s1 + $0x2b8] sm:$0xfc]
    %v935 = vld [vmem:[%s1 + $0x2c0] sm:$0x1f]
    %v936 = vld [vmem:[%s1 + $0x2c8] sm:$0x1f]
    %vm937 = vcmp.ne.s32.totalorder %v929, 0
    %vm938 = vcmp.ne.s32.totalorder %v930, 0
    %vm939 = vcmp.ne.s32.totalorder %v931, 0
    %vm940 = vcmp.ne.s32.totalorder %v932, 0
    %vm941 = vcmp.ne.s32.totalorder %v933, 0
    %vm942 = vcmp.ne.s32.totalorder %v934, 0
    %vm943 = vcmp.ne.s32.totalorder %v935, 0
    %vm944 = vcmp.ne.s32.totalorder %v936, 0
    %v945 = vld [vmem:[%s0 + $0x100] sm:$0xfc]
    %v946 = vld [vmem:[%s0 + $0x108] sm:$0xfc]
    %v947 = vld [vmem:[%s0 + $0x110] sm:$0x1f]
    %v948 = vld [vmem:[%s0 + $0x118] sm:$0x1f]
    %v949 = vld [vmem:[%s0 + $0x2b0] sm:$0xfc]
    %v950 = vld [vmem:[%s0 + $0x2b8] sm:$0xfc]
    %v951 = vld [vmem:[%s0 + $0x2c0] sm:$0x1f]
    %v952 = vld [vmem:[%s0 + $0x2c8] sm:$0x1f]
    %v953 = vsel %vm937, %v945, 333.0
    %v954 = vsel %vm938, %v946, 333.0
    %v955 = vsel %vm939, %v947, 333.0
    %v956 = vsel %vm940, %v948, 333.0
    %v957 = vsel %vm941, %v949, 333.0
    %v958 = vsel %vm942, %v950, 333.0
    %v959 = vsel %vm943, %v951, 333.0
    %v960 = vsel %vm944, %v952, 333.0
    %v961 = vsel %vm363, %v953, inf
    %v962 = vsel %vm365, %v955, inf
    %v963 = vmin.f32 %v961, %v962
    %v964 = vrot.slane %v963, 4
    %v965 = vmin.f32 %v963, %v964
    %v966 = vrot.slane %v965, 2
    %v967 = vmin.f32 %v965, %v966
    %v968 = vrot.slane %v967, 1
    %v969 = vmin.f32 %v967, %v968
    %v970 = vsel %vm374, %v954, inf
    %v971 = vsel %vm376, %v956, inf
    %v972 = vmin.f32 %v970, %v971
    %v973 = vrot.slane %v972, 4
    %v974 = vmin.f32 %v972, %v973
    %v975 = vrot.slane %v974, 2
    %v976 = vmin.f32 %v974, %v975
    %v977 = vrot.slane %v976, 1
    %v978 = vmin.f32 %v976, %v977
    %v979 = vsel %vm363, %v957, inf
    %v980 = vsel %vm365, %v959, inf
    %v981 = vmin.f32 %v979, %v980
    %v982 = vrot.slane %v981, 4
    %v983 = vmin.f32 %v981, %v982
    %v984 = vrot.slane %v983, 2
    %v985 = vmin.f32 %v983, %v984
    %v986 = vrot.slane %v985, 1
    %v987 = vmin.f32 %v985, %v986
    %v988 = vsel %vm374, %v958, inf
    %v989 = vsel %vm376, %v960, inf
    %v990 = vmin.f32 %v988, %v989
    %v991 = vrot.slane %v990, 4
    %v992 = vmin.f32 %v990, %v991
    %v993 = vrot.slane %v992, 2
    %v994 = vmin.f32 %v992, %v993
    %v995 = vrot.slane %v994, 1
    %v996 = vmin.f32 %v994, %v995
    %v997 = vld [vmem:[%s1 + $0x110] sm:$0xe0]
    %v998 = vld [vmem:[%s1 + $0x118] sm:$0xe0]
    %v999 = vld [vmem:[%s1 + $0x120] sm:$0xff]
    %v1000 = vld [vmem:[%s1 + $0x128] sm:$0xff]
    %v1001 = vld [vmem:[%s1 + $0x2c0] sm:$0xe0]
    %v1002 = vld [vmem:[%s1 + $0x2c8] sm:$0xe0]
    %v1003 = vld [vmem:[%s1 + $0x2d0] sm:$0xff]
    %v1004 = vld [vmem:[%s1 + $0x2d8] sm:$0xff]
    %vm1005 = vcmp.ne.s32.totalorder %v997, 0
    %vm1006 = vcmp.ne.s32.totalorder %v998, 0
    %vm1007 = vcmp.ne.s32.totalorder %v999, 0
    %vm1008 = vcmp.ne.s32.totalorder %v1000, 0
    %vm1009 = vcmp.ne.s32.totalorder %v1001, 0
    %vm1010 = vcmp.ne.s32.totalorder %v1002, 0
    %vm1011 = vcmp.ne.s32.totalorder %v1003, 0
    %vm1012 = vcmp.ne.s32.totalorder %v1004, 0
    %v1013 = vld [vmem:[%s0 + $0x110] sm:$0xe0]
    %v1014 = vld [vmem:[%s0 + $0x118] sm:$0xe0]
    %v1015 = vld [vmem:[%s0 + $0x120] sm:$0xff]
    %v1016 = vld [vmem:[%s0 + $0x128] sm:$0xff]
    %v1017 = vld [vmem:[%s0 + $0x2c0] sm:$0xe0]
    %v1018 = vld [vmem:[%s0 + $0x2c8] sm:$0xe0]
    %v1019 = vld [vmem:[%s0 + $0x2d0] sm:$0xff]
    %v1020 = vld [vmem:[%s0 + $0x2d8] sm:$0xff]
    %v1021 = vsel %vm1005, %v1013, 333.0
    %v1022 = vsel %vm1006, %v1014, 333.0
    %v1023 = vsel %vm1007, %v1015, 333.0
    %v1024 = vsel %vm1008, %v1016, 333.0
    %v1025 = vsel %vm1009, %v1017, 333.0
    %v1026 = vsel %vm1010, %v1018, 333.0
    %v1027 = vsel %vm1011, %v1019, 333.0
    %v1028 = vsel %vm1012, %v1020, 333.0
    %v1029 = vsel %vm435, %v1021, inf
    %v1030 = vmin.f32 %v1029, %v1023
    %v1031 = vrot.slane %v1030, 4
    %v1032 = vmin.f32 %v1030, %v1031
    %v1033 = vrot.slane %v1032, 2
    %v1034 = vmin.f32 %v1032, %v1033
    %v1035 = vrot.slane %v1034, 1
    %v1036 = vmin.f32 %v1034, %v1035
    %v1037 = vsel %vm444, %v1022, inf
    %v1038 = vsel %vm65, %v1024, inf
    %v1039 = vmin.f32 %v1037, %v1038
    %v1040 = vrot.slane %v1039, 4
    %v1041 = vmin.f32 %v1039, %v1040
    %v1042 = vrot.slane %v1041, 2
    %v1043 = vmin.f32 %v1041, %v1042
    %v1044 = vrot.slane %v1043, 1
    %v1045 = vmin.f32 %v1043, %v1044
    %v1046 = vsel %vm435, %v1025, inf
    %v1047 = vmin.f32 %v1046, %v1027
    %v1048 = vrot.slane %v1047, 4
    %v1049 = vmin.f32 %v1047, %v1048
    %v1050 = vrot.slane %v1049, 2
    %v1051 = vmin.f32 %v1049, %v1050
    %v1052 = vrot.slane %v1051, 1
    %v1053 = vmin.f32 %v1051, %v1052
    %v1054 = vsel %vm444, %v1026, inf
    %v1055 = vsel %vm65, %v1028, inf
    %v1056 = vmin.f32 %v1054, %v1055
    %v1057 = vrot.slane %v1056, 4
    %v1058 = vmin.f32 %v1056, %v1057
    %v1059 = vrot.slane %v1058, 2
    %v1060 = vmin.f32 %v1058, %v1059
    %v1061 = vrot.slane %v1060, 1
    %v1062 = vmin.f32 %v1060, %v1061
    %v1063 = vld [vmem:[%s1 + $0x130] sm:$0xff]
    %v1064 = vld [vmem:[%s1 + $0x138] sm:$0xff]
    %v1065 = vld [vmem:[%s1 + $0x140] sm:$0x7]
    %v1066 = vld [vmem:[%s1 + $0x148] sm:$0x7]
    %v1067 = vld [vmem:[%s1 + $0x2e0] sm:$0xff]
    %v1068 = vld [vmem:[%s1 + $0x2e8] sm:$0xff]
    %v1069 = vld [vmem:[%s1 + $0x2f0] sm:$0x7]
    %v1070 = vld [vmem:[%s1 + $0x2f8] sm:$0x7]
    %vm1071 = vcmp.ne.s32.totalorder %v1063, 0
    %vm1072 = vcmp.ne.s32.totalorder %v1064, 0
    %vm1073 = vcmp.ne.s32.totalorder %v1065, 0
    %vm1074 = vcmp.ne.s32.totalorder %v1066, 0
    %vm1075 = vcmp.ne.s32.totalorder %v1067, 0
    %vm1076 = vcmp.ne.s32.totalorder %v1068, 0
    %vm1077 = vcmp.ne.s32.totalorder %v1069, 0
    %vm1078 = vcmp.ne.s32.totalorder %v1070, 0
    %v1079 = vld [vmem:[%s0 + $0x130] sm:$0xff]
    %v1080 = vld [vmem:[%s0 + $0x138] sm:$0xff]
    %v1081 = vld [vmem:[%s0 + $0x140] sm:$0x7]
    %v1082 = vld [vmem:[%s0 + $0x148] sm:$0x7]
    %v1083 = vld [vmem:[%s0 + $0x2e0] sm:$0xff]
    %v1084 = vld [vmem:[%s0 + $0x2e8] sm:$0xff]
    %v1085 = vld [vmem:[%s0 + $0x2f0] sm:$0x7]
    %v1086 = vld [vmem:[%s0 + $0x2f8] sm:$0x7]
    %v1087 = vsel %vm1071, %v1079, 333.0
    %v1088 = vsel %vm1072, %v1080, 333.0
    %v1089 = vsel %vm1073, %v1081, 333.0
    %v1090 = vsel %vm1074, %v1082, 333.0
    %v1091 = vsel %vm1075, %v1083, 333.0
    %v1092 = vsel %vm1076, %v1084, 333.0
    %v1093 = vsel %vm1077, %v1085, 333.0
    %v1094 = vsel %vm1078, %v1086, 333.0
    %v1095 = vsel %vm503, %v1089, inf
    %v1096 = vmin.f32 %v1087, %v1095
    %v1097 = vrot.slane %v1096, 4
    %v1098 = vmin.f32 %v1096, %v1097
    %v1099 = vrot.slane %v1098, 2
    %v1100 = vmin.f32 %v1098, %v1099
    %v1101 = vrot.slane %v1100, 1
    %v1102 = vmin.f32 %v1100, %v1101
    %v1103 = vsel %vm65, %v1088, inf
    %v1104 = vsel %vm513, %v1090, inf
    %v1105 = vmin.f32 %v1103, %v1104
    %v1106 = vrot.slane %v1105, 4
    %v1107 = vmin.f32 %v1105, %v1106
    %v1108 = vrot.slane %v1107, 2
    %v1109 = vmin.f32 %v1107, %v1108
    %v1110 = vrot.slane %v1109, 1
    %v1111 = vmin.f32 %v1109, %v1110
    %v1112 = vsel %vm503, %v1093, inf
    %v1113 = vmin.f32 %v1091, %v1112
    %v1114 = vrot.slane %v1113, 4
    %v1115 = vmin.f32 %v1113, %v1114
    %v1116 = vrot.slane %v1115, 2
    %v1117 = vmin.f32 %v1115, %v1116
    %v1118 = vrot.slane %v1117, 1
    %v1119 = vmin.f32 %v1117, %v1118
    %v1120 = vsel %vm65, %v1092, inf
    %v1121 = vsel %vm513, %v1094, inf
    %v1122 = vmin.f32 %v1120, %v1121
    %v1123 = vrot.slane %v1122, 4
    %v1124 = vmin.f32 %v1122, %v1123
    %v1125 = vrot.slane %v1124, 2
    %v1126 = vmin.f32 %v1124, %v1125
    %v1127 = vrot.slane %v1126, 1
    %v1128 = vmin.f32 %v1126, %v1127
    %v1129 = vld [vmem:[%s1 + $0x140] sm:$0xf8]
    %v1130 = vld [vmem:[%s1 + $0x148] sm:$0xf8]
    %v1131 = vld [vmem:[%s1 + $0x150] sm:$0x3f]
    %v1132 = vld [vmem:[%s1 + $0x158] sm:$0x3f]
    %v1133 = vld [vmem:[%s1 + $0x2f0] sm:$0xf8]
    %v1134 = vld [vmem:[%s1 + $0x2f8] sm:$0xf8]
    %v1135 = vld [vmem:[%s1 + $0x300] sm:$0x3f]
    %v1136 = vld [vmem:[%s1 + $0x308] sm:$0x3f]
    %vm1137 = vcmp.ne.s32.totalorder %v1129, 0
    %vm1138 = vcmp.ne.s32.totalorder %v1130, 0
    %vm1139 = vcmp.ne.s32.totalorder %v1131, 0
    %vm1140 = vcmp.ne.s32.totalorder %v1132, 0
    %vm1141 = vcmp.ne.s32.totalorder %v1133, 0
    %vm1142 = vcmp.ne.s32.totalorder %v1134, 0
    %vm1143 = vcmp.ne.s32.totalorder %v1135, 0
    %vm1144 = vcmp.ne.s32.totalorder %v1136, 0
    %v1145 = vld [vmem:[%s0 + $0x140] sm:$0xf8]
    %v1146 = vld [vmem:[%s0 + $0x148] sm:$0xf8]
    %v1147 = vld [vmem:[%s0 + $0x150] sm:$0x3f]
    %v1148 = vld [vmem:[%s0 + $0x158] sm:$0x3f]
    %v1149 = vld [vmem:[%s0 + $0x2f0] sm:$0xf8]
    %v1150 = vld [vmem:[%s0 + $0x2f8] sm:$0xf8]
    %v1151 = vld [vmem:[%s0 + $0x300] sm:$0x3f]
    %v1152 = vld [vmem:[%s0 + $0x308] sm:$0x3f]
    %v1153 = vsel %vm1137, %v1145, 333.0
    %v1154 = vsel %vm1138, %v1146, 333.0
    %v1155 = vsel %vm1139, %v1147, 333.0
    %v1156 = vsel %vm1140, %v1148, 333.0
    %v1157 = vsel %vm1141, %v1149, 333.0
    %v1158 = vsel %vm1142, %v1150, 333.0
    %v1159 = vsel %vm1143, %v1151, 333.0
    %v1160 = vsel %vm1144, %v1152, 333.0
    %v1161 = vsel %vm571, %v1153, inf
    %v1162 = vsel %vm573, %v1155, inf
    %v1163 = vmin.f32 %v1161, %v1162
    %v1164 = vrot.slane %v1163, 4
    %v1165 = vmin.f32 %v1163, %v1164
    %v1166 = vrot.slane %v1165, 2
    %v1167 = vmin.f32 %v1165, %v1166
    %v1168 = vrot.slane %v1167, 1
    %v1169 = vmin.f32 %v1167, %v1168
    %v1170 = vsel %vm582, %v1154, inf
    %v1171 = vsel %vm584, %v1156, inf
    %v1172 = vmin.f32 %v1170, %v1171
    %v1173 = vrot.slane %v1172, 4
    %v1174 = vmin.f32 %v1172, %v1173
    %v1175 = vrot.slane %v1174, 2
    %v1176 = vmin.f32 %v1174, %v1175
    %v1177 = vrot.slane %v1176, 1
    %v1178 = vmin.f32 %v1176, %v1177
    %v1179 = vsel %vm571, %v1157, inf
    %v1180 = vsel %vm573, %v1159, inf
    %v1181 = vmin.f32 %v1179, %v1180
    %v1182 = vrot.slane %v1181, 4
    %v1183 = vmin.f32 %v1181, %v1182
    %v1184 = vrot.slane %v1183, 2
    %v1185 = vmin.f32 %v1183, %v1184
    %v1186 = vrot.slane %v1185, 1
    %v1187 = vmin.f32 %v1185, %v1186
    %v1188 = vsel %vm582, %v1158, inf
    %v1189 = vsel %vm584, %v1160, inf
    %v1190 = vmin.f32 %v1188, %v1189
    %v1191 = vrot.slane %v1190, 4
    %v1192 = vmin.f32 %v1190, %v1191
    %v1193 = vrot.slane %v1192, 2
    %v1194 = vmin.f32 %v1192, %v1193
    %v1195 = vrot.slane %v1194, 1
    %v1196 = vmin.f32 %v1194, %v1195
    %v1197 = vld [vmem:[%s1 + $0x150] sm:$0xc0]
    %v1198 = vld [vmem:[%s1 + $0x158] sm:$0xc0]
    %v1199 = vld [vmem:[%s1 + $0x160] sm:$0xff]
    %v1200 = vld [vmem:[%s1 + $0x168] sm:$0xff]
    %v1201 = vld [vmem:[%s1 + $0x170] sm:$0x1]
    %v1202 = vld [vmem:[%s1 + $0x178] sm:$0x1]
    %v1203 = vld [vmem:[%s1 + $0x300] sm:$0xc0]
    %v1204 = vld [vmem:[%s1 + $0x308] sm:$0xc0]
    %v1205 = vld [vmem:[%s1 + $0x310] sm:$0xff]
    %v1206 = vld [vmem:[%s1 + $0x318] sm:$0xff]
    %v1207 = vld [vmem:[%s1 + $0x320] sm:$0x1]
    %v1208 = vld [vmem:[%s1 + $0x328] sm:$0x1]
    %vm1209 = vcmp.ne.s32.totalorder %v1197, 0
    %vm1210 = vcmp.ne.s32.totalorder %v1198, 0
    %vm1211 = vcmp.ne.s32.totalorder %v1199, 0
    %vm1212 = vcmp.ne.s32.totalorder %v1200, 0
    %vm1213 = vcmp.ne.s32.totalorder %v1201, 0
    %vm1214 = vcmp.ne.s32.totalorder %v1202, 0
    %vm1215 = vcmp.ne.s32.totalorder %v1203, 0
    %vm1216 = vcmp.ne.s32.totalorder %v1204, 0
    %vm1217 = vcmp.ne.s32.totalorder %v1205, 0
    %vm1218 = vcmp.ne.s32.totalorder %v1206, 0
    %vm1219 = vcmp.ne.s32.totalorder %v1207, 0
    %vm1220 = vcmp.ne.s32.totalorder %v1208, 0
    %v1221 = vld [vmem:[%s0 + $0x150] sm:$0xc0]
    %v1222 = vld [vmem:[%s0 + $0x158] sm:$0xc0]
    %v1223 = vld [vmem:[%s0 + $0x160] sm:$0xff]
    %v1224 = vld [vmem:[%s0 + $0x168] sm:$0xff]
    %v1225 = vld [vmem:[%s0 + $0x170] sm:$0x1]
    %v1226 = vld [vmem:[%s0 + $0x178] sm:$0x1]
    %v1227 = vld [vmem:[%s0 + $0x300] sm:$0xc0]
    %v1228 = vld [vmem:[%s0 + $0x308] sm:$0xc0]
    %v1229 = vld [vmem:[%s0 + $0x310] sm:$0xff]
    %v1230 = vld [vmem:[%s0 + $0x318] sm:$0xff]
    %v1231 = vld [vmem:[%s0 + $0x320] sm:$0x1]
    %v1232 = vld [vmem:[%s0 + $0x328] sm:$0x1]
    %v1233 = vsel %vm1209, %v1221, 333.0
    %v1234 = vsel %vm1210, %v1222, 333.0
    %v1235 = vsel %vm1211, %v1223, 333.0
    %v1236 = vsel %vm1212, %v1224, 333.0
    %v1237 = vsel %vm1213, %v1225, 333.0
    %v1238 = vsel %vm1214, %v1226, 333.0
    %v1239 = vsel %vm1215, %v1227, 333.0
    %v1240 = vsel %vm1216, %v1228, 333.0
    %v1241 = vsel %vm1217, %v1229, 333.0
    %v1242 = vsel %vm1218, %v1230, 333.0
    %v1243 = vsel %vm1219, %v1231, 333.0
    %v1244 = vsel %vm1220, %v1232, 333.0
    %v1245 = vsel %vm659, %v1233, inf
    %v1246 = vmin.f32 %v1245, %v1235
    %v1247 = vsel %vm56, %v1237, inf
    %v1248 = vmin.f32 %v1246, %v1247
    %v1249 = vrot.slane %v1248, 4
    %v1250 = vmin.f32 %v1248, %v1249
    %v1251 = vrot.slane %v1250, 2
    %v1252 = vmin.f32 %v1250, %v1251
    %v1253 = vrot.slane %v1252, 1
    %v1254 = vmin.f32 %v1252, %v1253
    %v1255 = vsel %vm670, %v1234, inf
    %v1256 = vsel %vm65, %v1236, inf
    %v1257 = vmin.f32 %v1255, %v1256
    %v1258 = vsel %vm67, %v1238, inf
    %v1259 = vmin.f32 %v1257, %v1258
    %v1260 = vrot.slane %v1259, 4
    %v1261 = vmin.f32 %v1259, %v1260
    %v1262 = vrot.slane %v1261, 2
    %v1263 = vmin.f32 %v1261, %v1262
    %v1264 = vrot.slane %v1263, 1
    %v1265 = vmin.f32 %v1263, %v1264
    %v1266 = vsel %vm659, %v1239, inf
    %v1267 = vmin.f32 %v1266, %v1241
    %v1268 = vsel %vm56, %v1243, inf
    %v1269 = vmin.f32 %v1267, %v1268
    %v1270 = vrot.slane %v1269, 4
    %v1271 = vmin.f32 %v1269, %v1270
    %v1272 = vrot.slane %v1271, 2
    %v1273 = vmin.f32 %v1271, %v1272
    %v1274 = vrot.slane %v1273, 1
    %v1275 = vmin.f32 %v1273, %v1274
    %v1276 = vsel %vm670, %v1240, inf
    %v1277 = vsel %vm65, %v1242, inf
    %v1278 = vmin.f32 %v1276, %v1277
    %v1279 = vsel %vm67, %v1244, inf
    %v1280 = vmin.f32 %v1278, %v1279
    %v1281 = vrot.slane %v1280, 4
    %v1282 = vmin.f32 %v1280, %v1281
    %v1283 = vrot.slane %v1282, 2
    %v1284 = vmin.f32 %v1282, %v1283
    %v1285 = vrot.slane %v1284, 1
    %v1286 = vmin.f32 %v1284, %v1285
    %v1287 = vld [vmem:[%s1 + $0x170] sm:$0xfe]
    %v1288 = vld [vmem:[%s1 + $0x178] sm:$0xfe]
    %v1289 = vld [vmem:[%s1 + $0x180] sm:$0xf]
    %v1290 = vld [vmem:[%s1 + $0x188] sm:$0xf]
    %v1291 = vld [vmem:[%s1 + $0x320] sm:$0xfe]
    %v1292 = vld [vmem:[%s1 + $0x328] sm:$0xfe]
    %v1293 = vld [vmem:[%s1 + $0x330] sm:$0xf]
    %v1294 = vld [vmem:[%s1 + $0x338] sm:$0xf]
    %vm1295 = vcmp.ne.s32.totalorder %v1287, 0
    %vm1296 = vcmp.ne.s32.totalorder %v1288, 0
    %vm1297 = vcmp.ne.s32.totalorder %v1289, 0
    %vm1298 = vcmp.ne.s32.totalorder %v1290, 0
    %vm1299 = vcmp.ne.s32.totalorder %v1291, 0
    %vm1300 = vcmp.ne.s32.totalorder %v1292, 0
    %vm1301 = vcmp.ne.s32.totalorder %v1293, 0
    %vm1302 = vcmp.ne.s32.totalorder %v1294, 0
    %v1303 = vld [vmem:[%s0 + $0x170] sm:$0xfe]
    %v1304 = vld [vmem:[%s0 + $0x178] sm:$0xfe]
    %v1305 = vld [vmem:[%s0 + $0x180] sm:$0xf]
    %v1306 = vld [vmem:[%s0 + $0x188] sm:$0xf]
    %v1307 = vld [vmem:[%s0 + $0x320] sm:$0xfe]
    %v1308 = vld [vmem:[%s0 + $0x328] sm:$0xfe]
    %v1309 = vld [vmem:[%s0 + $0x330] sm:$0xf]
    %v1310 = vld [vmem:[%s0 + $0x338] sm:$0xf]
    %v1311 = vsel %vm1295, %v1303, 333.0
    %v1312 = vsel %vm1296, %v1304, 333.0
    %v1313 = vsel %vm1297, %v1305, 333.0
    %v1314 = vsel %vm1298, %v1306, 333.0
    %v1315 = vsel %vm1299, %v1307, 333.0
    %v1316 = vsel %vm1300, %v1308, 333.0
    %v1317 = vsel %vm1301, %v1309, 333.0
    %v1318 = vsel %vm1302, %v1310, 333.0
    %v1319 = vsel %vm125, %v1311, inf
    %v1320 = vsel %vm127, %v1313, inf
    %v1321 = vmin.f32 %v1319, %v1320
    %v1322 = vrot.slane %v1321, 4
    %v1323 = vmin.f32 %v1321, %v1322
    %v1324 = vrot.slane %v1323, 2
    %v1325 = vmin.f32 %v1323, %v1324
    %v1326 = vrot.slane %v1325, 1
    %v1327 = vmin.f32 %v1325, %v1326
    %v1328 = vsel %vm136, %v1312, inf
    %v1329 = vsel %vm138, %v1314, inf
    %v1330 = vmin.f32 %v1328, %v1329
    %v1331 = vrot.slane %v1330, 4
    %v1332 = vmin.f32 %v1330, %v1331
    %v1333 = vrot.slane %v1332, 2
    %v1334 = vmin.f32 %v1332, %v1333
    %v1335 = vrot.slane %v1334, 1
    %v1336 = vmin.f32 %v1334, %v1335
    %v1337 = vsel %vm125, %v1315, inf
    %v1338 = vsel %vm127, %v1317, inf
    %v1339 = vmin.f32 %v1337, %v1338
    %v1340 = vrot.slane %v1339, 4
    %v1341 = vmin.f32 %v1339, %v1340
    %v1342 = vrot.slane %v1341, 2
    %v1343 = vmin.f32 %v1341, %v1342
    %v1344 = vrot.slane %v1343, 1
    %v1345 = vmin.f32 %v1343, %v1344
    %v1346 = vsel %vm136, %v1316, inf
    %v1347 = vsel %vm138, %v1318, inf
    %v1348 = vmin.f32 %v1346, %v1347
    %v1349 = vrot.slane %v1348, 4
    %v1350 = vmin.f32 %v1348, %v1349
    %v1351 = vrot.slane %v1350, 2
    %v1352 = vmin.f32 %v1350, %v1351
    %v1353 = vrot.slane %v1352, 1
    %v1354 = vmin.f32 %v1352, %v1353
    %v1355 = vld [vmem:[%s1 + $0x180] sm:$0xf0]
    %v1356 = vld [vmem:[%s1 + $0x188] sm:$0xf0]
    %v1357 = vld [vmem:[%s1 + $0x190] sm:$0x7f]
    %v1358 = vld [vmem:[%s1 + $0x198] sm:$0x7f]
    %v1359 = vld [vmem:[%s1 + $0x330] sm:$0xf0]
    %v1360 = vld [vmem:[%s1 + $0x338] sm:$0xf0]
    %v1361 = vld [vmem:[%s1 + $0x340] sm:$0x7f]
    %v1362 = vld [vmem:[%s1 + $0x348] sm:$0x7f]
    %vm1363 = vcmp.ne.s32.totalorder %v1355, 0
    %vm1364 = vcmp.ne.s32.totalorder %v1356, 0
    %vm1365 = vcmp.ne.s32.totalorder %v1357, 0
    %vm1366 = vcmp.ne.s32.totalorder %v1358, 0
    %vm1367 = vcmp.ne.s32.totalorder %v1359, 0
    %vm1368 = vcmp.ne.s32.totalorder %v1360, 0
    %vm1369 = vcmp.ne.s32.totalorder %v1361, 0
    %vm1370 = vcmp.ne.s32.totalorder %v1362, 0
    %v1371 = vld [vmem:[%s0 + $0x180] sm:$0xf0]
    %v1372 = vld [vmem:[%s0 + $0x188] sm:$0xf0]
    %v1373 = vld [vmem:[%s0 + $0x190] sm:$0x7f]
    %v1374 = vld [vmem:[%s0 + $0x198] sm:$0x7f]
    %v1375 = vld [vmem:[%s0 + $0x330] sm:$0xf0]
    %v1376 = vld [vmem:[%s0 + $0x338] sm:$0xf0]
    %v1377 = vld [vmem:[%s0 + $0x340] sm:$0x7f]
    %v1378 = vld [vmem:[%s0 + $0x348] sm:$0x7f]
    %v1379 = vsel %vm1363, %v1371, 333.0
    %v1380 = vsel %vm1364, %v1372, 333.0
    %v1381 = vsel %vm1365, %v1373, 333.0
    %v1382 = vsel %vm1366, %v1374, 333.0
    %v1383 = vsel %vm1367, %v1375, 333.0
    %v1384 = vsel %vm1368, %v1376, 333.0
    %v1385 = vsel %vm1369, %v1377, 333.0
    %v1386 = vsel %vm1370, %v1378, 333.0
    %v1387 = vsel %vm197, %v1379, inf
    %v1388 = vsel %vm199, %v1381, inf
    %v1389 = vmin.f32 %v1387, %v1388
    %v1390 = vrot.slane %v1389, 4
    %v1391 = vmin.f32 %v1389, %v1390
    %v1392 = vrot.slane %v1391, 2
    %v1393 = vmin.f32 %v1391, %v1392
    %v1394 = vrot.slane %v1393, 1
    %v1395 = vmin.f32 %v1393, %v1394
    %v1396 = vsel %vm208, %v1380, inf
    %v1397 = vsel %vm210, %v1382, inf
    %v1398 = vmin.f32 %v1396, %v1397
    %v1399 = vrot.slane %v1398, 4
    %v1400 = vmin.f32 %v1398, %v1399
    %v1401 = vrot.slane %v1400, 2
    %v1402 = vmin.f32 %v1400, %v1401
    %v1403 = vrot.slane %v1402, 1
    %v1404 = vmin.f32 %v1402, %v1403
    %v1405 = vsel %vm197, %v1383, inf
    %v1406 = vsel %vm199, %v1385, inf
    %v1407 = vmin.f32 %v1405, %v1406
    %v1408 = vrot.slane %v1407, 4
    %v1409 = vmin.f32 %v1407, %v1408
    %v1410 = vrot.slane %v1409, 2
    %v1411 = vmin.f32 %v1409, %v1410
    %v1412 = vrot.slane %v1411, 1
    %v1413 = vmin.f32 %v1411, %v1412
    %v1414 = vsel %vm208, %v1384, inf
    %v1415 = vsel %vm210, %v1386, inf
    %v1416 = vmin.f32 %v1414, %v1415
    %v1417 = vrot.slane %v1416, 4
    %v1418 = vmin.f32 %v1416, %v1417
    %v1419 = vrot.slane %v1418, 2
    %v1420 = vmin.f32 %v1418, %v1419
    %v1421 = vrot.slane %v1420, 1
    %v1422 = vmin.f32 %v1420, %v1421
    %v1423 = vld [vmem:[%s1 + $0x190] sm:$0x80]
    %v1424 = vld [vmem:[%s1 + $0x198] sm:$0x80]
    %v1425 = vld [vmem:[%s1 + $0x1a0] sm:$0xff]
    %v1426 = vld [vmem:[%s1 + $0x1a8] sm:$0xff]
    %v1427 = vld [vmem:[%s1 + $0x340] sm:$0x80]
    %v1428 = vld [vmem:[%s1 + $0x348] sm:$0x80]
    %v1429 = vld [vmem:[%s1 + $0x350] sm:$0xff]
    %v1430 = vld [vmem:[%s1 + $0x358] sm:$0xff]
    %vm1431 = vcmp.ne.s32.totalorder %v1423, 0
    %vm1432 = vcmp.ne.s32.totalorder %v1424, 0
    %vm1433 = vcmp.ne.s32.totalorder %v1425, 0
    %vm1434 = vcmp.ne.s32.totalorder %v1426, 0
    %vm1435 = vcmp.ne.s32.totalorder %v1427, 0
    %vm1436 = vcmp.ne.s32.totalorder %v1428, 0
    %vm1437 = vcmp.ne.s32.totalorder %v1429, 0
    %vm1438 = vcmp.ne.s32.totalorder %v1430, 0
    %v1439 = vld [vmem:[%s0 + $0x190] sm:$0x80]
    %v1440 = vld [vmem:[%s0 + $0x198] sm:$0x80]
    %v1441 = vld [vmem:[%s0 + $0x1a0] sm:$0xff]
    %v1442 = vld [vmem:[%s0 + $0x1a8] sm:$0xff]
    %v1443 = vld [vmem:[%s0 + $0x340] sm:$0x80]
    %v1444 = vld [vmem:[%s0 + $0x348] sm:$0x80]
    %v1445 = vld [vmem:[%s0 + $0x350] sm:$0xff]
    %v1446 = vld [vmem:[%s0 + $0x358] sm:$0xff]
    %v1447 = vsel %vm1431, %v1439, 333.0
    %v1448 = vsel %vm1432, %v1440, 333.0
    %v1449 = vsel %vm1433, %v1441, 333.0
    %v1450 = vsel %vm1434, %v1442, 333.0
    %v1451 = vsel %vm1435, %v1443, 333.0
    %v1452 = vsel %vm1436, %v1444, 333.0
    %v1453 = vsel %vm1437, %v1445, 333.0
    %v1454 = vsel %vm1438, %v1446, 333.0
    %v1455 = vsel %vm285, %v1447, inf
    %v1456 = vmin.f32 %v1455, %v1449
    %v1457 = vrot.slane %v1456, 4
    %v1458 = vmin.f32 %v1456, %v1457
    %v1459 = vrot.slane %v1458, 2
    %v1460 = vmin.f32 %v1458, %v1459
    %v1461 = vrot.slane %v1460, 1
    %v1462 = vmin.f32 %v1460, %v1461
    %v1463 = vsel %vm297, %v1448, inf
    %v1464 = vsel %vm65, %v1450, inf
    %v1465 = vmin.f32 %v1463, %v1464
    %v1466 = vrot.slane %v1465, 4
    %v1467 = vmin.f32 %v1465, %v1466
    %v1468 = vrot.slane %v1467, 2
    %v1469 = vmin.f32 %v1467, %v1468
    %v1470 = vrot.slane %v1469, 1
    %v1471 = vmin.f32 %v1469, %v1470
    %v1472 = vsel %vm285, %v1451, inf
    %v1473 = vmin.f32 %v1472, %v1453
    %v1474 = vrot.slane %v1473, 4
    %v1475 = vmin.f32 %v1473, %v1474
    %v1476 = vrot.slane %v1475, 2
    %v1477 = vmin.f32 %v1475, %v1476
    %v1478 = vrot.slane %v1477, 1
    %v1479 = vmin.f32 %v1477, %v1478
    %v1480 = vsel %vm297, %v1452, inf
    %v1481 = vsel %vm65, %v1454, inf
    %v1482 = vmin.f32 %v1480, %v1481
    %v1483 = vrot.slane %v1482, 4
    %v1484 = vmin.f32 %v1482, %v1483
    %v1485 = vrot.slane %v1484, 2
    %v1486 = vmin.f32 %v1484, %v1485
    %v1487 = vrot.slane %v1486, 1
    %v1488 = vmin.f32 %v1486, %v1487
    %v1489 = vsel %vm56, %v64, %v135
    %v1490 = vsel %vm56, %v75, %v146
    %v1491 = vsel %vm56, %v83, %v155
    %v1492 = vsel %vm56, %v92, %v164
    %v1493 = vsel %vm288, %v1489, %v207
    %v1494 = vsel %vm288, %v1490, %v218
    %v1495 = vsel %vm288, %v1491, %v227
    %v1496 = vsel %vm288, %v1492, %v236
    %v1497 = vsel %vm503, %v1493, %v296
    %v1498 = vsel %vm503, %v1494, %v309
    %v1499 = vsel %vm503, %v1495, %v319
    %v1500 = vsel %vm503, %v1496, %v330
    %v1501 = vsel %vm127, %v1497, %v373
    %v1502 = vsel %vm127, %v1498, %v384
    %v1503 = vsel %vm127, %v1499, %v393
    %v1504 = vsel %vm127, %v1500, %v402
    %v1505 = vsel %vm365, %v1501, %v443
    %v1506 = vsel %vm365, %v1502, %v453
    %v1507 = vsel %vm365, %v1503, %v461
    %v1508 = vsel %vm365, %v1504, %v470
    %v1509 = vsel %vm573, %v1505, %v511
    %v1510 = vsel %vm573, %v1506, %v521
    %v1511 = vsel %vm573, %v1507, %v529
    %v1512 = vsel %vm573, %v1508, %v538
    %v1513 = vsel %vm199, %v1509, %v581
    %v1514 = vsel %vm199, %v1510, %v592
    %v1515 = vsel %vm199, %v1511, %v601
    %v1516 = vsel %vm199, %v1512, %v610
    %v1517 = vsel %vm56, %v669, %v743
    %v1518 = vsel %vm56, %v681, %v752
    %v1519 = vsel %vm56, %v691, %v761
    %v1520 = vsel %vm56, %v702, %v770
    %v1521 = vsel %vm288, %v1517, %v811
    %v1522 = vsel %vm288, %v1518, %v820
    %v1523 = vsel %vm288, %v1519, %v829
    %v1524 = vsel %vm288, %v1520, %v838
    %v1525 = vsel %vm503, %v1521, %v896
    %v1526 = vsel %vm503, %v1522, %v907
    %v1527 = vsel %vm503, %v1523, %v917
    %v1528 = vsel %vm503, %v1524, %v928
    %v1529 = vsel %vm127, %v1525, %v969
    %v1530 = vsel %vm127, %v1526, %v978
    %v1531 = vsel %vm127, %v1527, %v987
    %v1532 = vsel %vm127, %v1528, %v996
    %v1533 = vsel %vm365, %v1529, %v1036
    %v1534 = vsel %vm365, %v1530, %v1045
    %v1535 = vsel %vm365, %v1531, %v1053
    %v1536 = vsel %vm365, %v1532, %v1062
    %v1537 = vsel %vm573, %v1533, %v1102
    %v1538 = vsel %vm573, %v1534, %v1111
    %v1539 = vsel %vm573, %v1535, %v1119
    %v1540 = vsel %vm573, %v1536, %v1128
    %v1541 = vsel %vm199, %v1537, %v1169
    %v1542 = vsel %vm199, %v1538, %v1178
    %v1543 = vsel %vm199, %v1539, %v1187
    %v1544 = vsel %vm199, %v1540, %v1196
    %v1545 = vsel %vm56, %v1254, %v1327
    %v1546 = vsel %vm56, %v1265, %v1336
    %v1547 = vsel %vm56, %v1275, %v1345
    %v1548 = vsel %vm56, %v1286, %v1354
    %v1549 = vsel %vm288, %v1545, %v1395
    %v1550 = vsel %vm288, %v1546, %v1404
    %v1551 = vsel %vm288, %v1547, %v1413
    %v1552 = vsel %vm288, %v1548, %v1422
    %v1553 = vsel %vm503, %v1549, %v1462
    %v1554 = vsel %vm503, %v1550, %v1471
    %v1555 = vsel %vm503, %v1551, %v1479
    %v1556 = vsel %vm503, %v1552, %v1488
    %vm1557 = vcmask 72704
    %v1558 = vsel %vm1557, %v1513, inf
    %1559 = vmin.xlane.f32.xlu0 %v1558
    %v1560 = vpop.xlane.xlu0 %1559
    %v1561 = vsel %vm1557, %v1541, inf
    %1562 = vmin.xlane.f32.xlu0 %v1561
    %v1563 = vpop.xlane.xlu0 %1562
    %vm1564 = vcmask 68608
    %v1565 = vsel %vm1564, %v1553, inf
    %1566 = vmin.xlane.f32.xlu0 %v1565
    %v1567 = vpop.xlane.xlu0 %1566
    %v1568 = vsel %vm1557, %v1515, inf
    %1569 = vmin.xlane.f32.xlu0 %v1568
    %v1570 = vpop.xlane.xlu0 %1569
    %v1571 = vsel %vm1557, %v1543, inf
    %1572 = vmin.xlane.f32.xlu0 %v1571
    %v1573 = vpop.xlane.xlu0 %1572
    %v1574 = vsel %vm1564, %v1555, inf
    %1575 = vmin.xlane.f32.xlu0 %v1574
    %v1576 = vpop.xlane.xlu0 %1575
    %vm1577 = vcmask 162888
    %v1578 = vsel %vm1577, %v1513, inf
    %1579 = vmin.xlane.f32.xlu0 %v1578
    %v1580 = vpop.xlane.xlu0 %1579
    %v1581 = vsel %vm1577, %v1541, inf
    %1582 = vmin.xlane.f32.xlu0 %v1581
    %v1583 = vpop.xlane.xlu0 %1582
    %vm1584 = vcmask 158792
    %v1585 = vsel %vm1584, %v1553, inf
    %1586 = vmin.xlane.f32.xlu0 %v1585
    %v1587 = vpop.xlane.xlu0 %1586
    %v1588 = vsel %vm1577, %v1515, inf
    %1589 = vmin.xlane.f32.xlu0 %v1588
    %v1590 = vpop.xlane.xlu0 %1589
    %v1591 = vsel %vm1577, %v1543, inf
    %1592 = vmin.xlane.f32.xlu0 %v1591
    %v1593 = vpop.xlane.xlu0 %1592
    %v1594 = vsel %vm1584, %v1555, inf
    %1595 = vmin.xlane.f32.xlu0 %v1594
    %v1596 = vpop.xlane.xlu0 %1595
    %vm1597 = vcmask 253088
    %v1598 = vsel %vm1597, %v1513, inf
    %1599 = vmin.xlane.f32.xlu0 %v1598
    %v1600 = vpop.xlane.xlu0 %1599
    %v1601 = vsel %vm1597, %v1541, inf
    %1602 = vmin.xlane.f32.xlu0 %v1601
    %v1603 = vpop.xlane.xlu0 %1602
    %vm1604 = vcmask 248992
    %v1605 = vsel %vm1604, %v1553, inf
    %1606 = vmin.xlane.f32.xlu0 %v1605
    %v1607 = vpop.xlane.xlu0 %1606
    %v1608 = vsel %vm1597, %v1515, inf
    %1609 = vmin.xlane.f32.xlu0 %v1608
    %v1610 = vpop.xlane.xlu0 %1609
    %v1611 = vsel %vm1597, %v1543, inf
    %1612 = vmin.xlane.f32.xlu0 %v1611
    %v1613 = vpop.xlane.xlu0 %1612
    %v1614 = vsel %vm1604, %v1555, inf
    %1615 = vmin.xlane.f32.xlu0 %v1614
    %v1616 = vpop.xlane.xlu0 %1615
    %vm1617 = vcmask 343288
    %v1618 = vsel %vm1617, %v1513, inf
    %1619 = vmin.xlane.f32.xlu0 %v1618
    %v1620 = vpop.xlane.xlu0 %1619
    %v1621 = vsel %vm1617, %v1541, inf
    %1622 = vmin.xlane.f32.xlu0 %v1621
    %v1623 = vpop.xlane.xlu0 %1622
    %vm1624 = vcmask 339192
    %v1625 = vsel %vm1624, %v1553, inf
    %1626 = vmin.xlane.f32.xlu0 %v1625
    %v1627 = vpop.xlane.xlu0 %1626
    %v1628 = vsel %vm1617, %v1515, inf
    %1629 = vmin.xlane.f32.xlu0 %v1628
    %v1630 = vpop.xlane.xlu0 %1629
    %v1631 = vsel %vm1617, %v1543, inf
    %1632 = vmin.xlane.f32.xlu0 %v1631
    %v1633 = vpop.xlane.xlu0 %1632
    %v1634 = vsel %vm1624, %v1555, inf
    %1635 = vmin.xlane.f32.xlu0 %v1634
    %v1636 = vpop.xlane.xlu0 %1635
    %vm1637 = vcmask 433488
    %v1638 = vsel %vm1637, %v1513, inf
    %1639 = vmin.xlane.f32.xlu0 %v1638
    %v1640 = vpop.xlane.xlu0 %1639
    %v1641 = vsel %vm1637, %v1541, inf
    %1642 = vmin.xlane.f32.xlu0 %v1641
    %v1643 = vpop.xlane.xlu0 %1642
    %vm1644 = vcmask 429392
    %v1645 = vsel %vm1644, %v1553, inf
    %1646 = vmin.xlane.f32.xlu0 %v1645
    %v1647 = vpop.xlane.xlu0 %1646
    %v1648 = vsel %vm1637, %v1515, inf
    %1649 = vmin.xlane.f32.xlu0 %v1648
    %v1650 = vpop.xlane.xlu0 %1649
    %v1651 = vsel %vm1637, %v1543, inf
    %1652 = vmin.xlane.f32.xlu0 %v1651
    %v1653 = vpop.xlane.xlu0 %1652
    %v1654 = vsel %vm1644, %v1555, inf
    %1655 = vmin.xlane.f32.xlu0 %v1654
    %v1656 = vpop.xlane.xlu0 %1655
    %vm1657 = vcmask 523688
    %v1658 = vsel %vm1657, %v1513, inf
    %1659 = vmin.xlane.f32.xlu0 %v1658
    %v1660 = vpop.xlane.xlu0 %1659
    %v1661 = vsel %vm1657, %v1541, inf
    %1662 = vmin.xlane.f32.xlu0 %v1661
    %v1663 = vpop.xlane.xlu0 %1662
    %vm1664 = vcmask 519592
    %v1665 = vsel %vm1664, %v1553, inf
    %1666 = vmin.xlane.f32.xlu0 %v1665
    %v1667 = vpop.xlane.xlu0 %1666
    %v1668 = vsel %vm1657, %v1515, inf
    %1669 = vmin.xlane.f32.xlu0 %v1668
    %v1670 = vpop.xlane.xlu0 %1669
    %v1671 = vsel %vm1657, %v1543, inf
    %1672 = vmin.xlane.f32.xlu0 %v1671
    %v1673 = vpop.xlane.xlu0 %1672
    %v1674 = vsel %vm1664, %v1555, inf
    %1675 = vmin.xlane.f32.xlu0 %v1674
    %v1676 = vpop.xlane.xlu0 %1675
    %vm1677 = vcmask 613888
    %v1678 = vsel %vm1677, %v1513, inf
    %1679 = vmin.xlane.f32.xlu0 %v1678
    %v1680 = vpop.xlane.xlu0 %1679
    %v1681 = vsel %vm1677, %v1541, inf
    %1682 = vmin.xlane.f32.xlu0 %v1681
    %v1683 = vpop.xlane.xlu0 %1682
    %vm1684 = vcmask 609792
    %v1685 = vsel %vm1684, %v1553, inf
    %1686 = vmin.xlane.f32.xlu0 %v1685
    %v1687 = vpop.xlane.xlu0 %1686
    %v1688 = vsel %vm1677, %v1515, inf
    %1689 = vmin.xlane.f32.xlu0 %v1688
    %v1690 = vpop.xlane.xlu0 %1689
    %v1691 = vsel %vm1677, %v1543, inf
    %1692 = vmin.xlane.f32.xlu0 %v1691
    %v1693 = vpop.xlane.xlu0 %1692
    %v1694 = vsel %vm1684, %v1555, inf
    %1695 = vmin.xlane.f32.xlu0 %v1694
    %v1696 = vpop.xlane.xlu0 %1695
    %vm1697 = vcmask 704088
    %v1698 = vsel %vm1697, %v1513, inf
    %1699 = vmin.xlane.f32.xlu0 %v1698
    %v1700 = vpop.xlane.xlu0 %1699
    %v1701 = vsel %vm1697, %v1541, inf
    %1702 = vmin.xlane.f32.xlu0 %v1701
    %v1703 = vpop.xlane.xlu0 %1702
    %vm1704 = vcmask 699992
    %v1705 = vsel %vm1704, %v1553, inf
    %1706 = vmin.xlane.f32.xlu0 %v1705
    %v1707 = vpop.xlane.xlu0 %1706
    %v1708 = vsel %vm1697, %v1515, inf
    %1709 = vmin.xlane.f32.xlu0 %v1708
    %v1710 = vpop.xlane.xlu0 %1709
    %v1711 = vsel %vm1697, %v1543, inf
    %1712 = vmin.xlane.f32.xlu0 %v1711
    %v1713 = vpop.xlane.xlu0 %1712
    %v1714 = vsel %vm1704, %v1555, inf
    %1715 = vmin.xlane.f32.xlu0 %v1714
    %v1716 = vpop.xlane.xlu0 %1715
    %vm1717 = vcmask 794288
    %v1718 = vsel %vm1717, %v1513, inf
    %1719 = vmin.xlane.f32.xlu0 %v1718
    %v1720 = vpop.xlane.xlu0 %1719
    %v1721 = vsel %vm1717, %v1541, inf
    %1722 = vmin.xlane.f32.xlu0 %v1721
    %v1723 = vpop.xlane.xlu0 %1722
    %vm1724 = vcmask 790192
    %v1725 = vsel %vm1724, %v1553, inf
    %1726 = vmin.xlane.f32.xlu0 %v1725
    %v1727 = vpop.xlane.xlu0 %1726
    %v1728 = vsel %vm1717, %v1515, inf
    %1729 = vmin.xlane.f32.xlu0 %v1728
    %v1730 = vpop.xlane.xlu0 %1729
    %v1731 = vsel %vm1717, %v1543, inf
    %1732 = vmin.xlane.f32.xlu0 %v1731
    %v1733 = vpop.xlane.xlu0 %1732
    %v1734 = vsel %vm1724, %v1555, inf
    %1735 = vmin.xlane.f32.xlu0 %v1734
    %v1736 = vpop.xlane.xlu0 %1735
    %vm1737 = vcmask 884488
    %v1738 = vsel %vm1737, %v1513, inf
    %1739 = vmin.xlane.f32.xlu0 %v1738
    %v1740 = vpop.xlane.xlu0 %1739
    %v1741 = vsel %vm1737, %v1541, inf
    %1742 = vmin.xlane.f32.xlu0 %v1741
    %v1743 = vpop.xlane.xlu0 %1742
    %vm1744 = vcmask 880392
    %v1745 = vsel %vm1744, %v1553, inf
    %1746 = vmin.xlane.f32.xlu0 %v1745
    %v1747 = vpop.xlane.xlu0 %1746
    %v1748 = vsel %vm1737, %v1515, inf
    %1749 = vmin.xlane.f32.xlu0 %v1748
    %v1750 = vpop.xlane.xlu0 %1749
    %v1751 = vsel %vm1737, %v1543, inf
    %1752 = vmin.xlane.f32.xlu0 %v1751
    %v1753 = vpop.xlane.xlu0 %1752
    %v1754 = vsel %vm1744, %v1555, inf
    %1755 = vmin.xlane.f32.xlu0 %v1754
    %v1756 = vpop.xlane.xlu0 %1755
    %vm1757 = vcmask 974688
    %v1758 = vsel %vm1757, %v1513, inf
    %1759 = vmin.xlane.f32.xlu0 %v1758
    %v1760 = vpop.xlane.xlu0 %1759
    %v1761 = vsel %vm1757, %v1541, inf
    %1762 = vmin.xlane.f32.xlu0 %v1761
    %v1763 = vpop.xlane.xlu0 %1762
    %vm1764 = vcmask 970592
    %v1765 = vsel %vm1764, %v1553, inf
    %1766 = vmin.xlane.f32.xlu0 %v1765
    %v1767 = vpop.xlane.xlu0 %1766
    %v1768 = vsel %vm1757, %v1515, inf
    %1769 = vmin.xlane.f32.xlu0 %v1768
    %v1770 = vpop.xlane.xlu0 %1769
    %v1771 = vsel %vm1757, %v1543, inf
    %1772 = vmin.xlane.f32.xlu0 %v1771
    %v1773 = vpop.xlane.xlu0 %1772
    %v1774 = vsel %vm1764, %v1555, inf
    %1775 = vmin.xlane.f32.xlu0 %v1774
    %v1776 = vpop.xlane.xlu0 %1775
    %vm1777 = vcmask 1048504
    %v1778 = vsel %vm1777, %v1513, inf
    %vm1779 = vcmask 15360
    %v1780 = vsel %vm1779, %v1514, inf
    %v1781 = vmin.f32 %v1778, %v1780
    %1782 = vmin.xlane.f32.xlu0 %v1781
    %v1783 = vpop.xlane.xlu0 %1782
    %v1784 = vsel %vm1777, %v1541, inf
    %v1785 = vsel %vm1779, %v1542, inf
    %v1786 = vmin.f32 %v1784, %v1785
    %1787 = vmin.xlane.f32.xlu0 %v1786
    %v1788 = vpop.xlane.xlu0 %1787
    %vm1789 = vcmask 1044408
    %v1790 = vsel %vm1789, %v1553, inf
    %vm1791 = vcmask 11264
    %v1792 = vsel %vm1791, %v1554, inf
    %v1793 = vmin.f32 %v1790, %v1792
    %1794 = vmin.xlane.f32.xlu0 %v1793
    %v1795 = vpop.xlane.xlu0 %1794
    %v1796 = vsel %vm1777, %v1515, inf
    %v1797 = vsel %vm1779, %v1516, inf
    %v1798 = vmin.f32 %v1796, %v1797
    %1799 = vmin.xlane.f32.xlu0 %v1798
    %v1800 = vpop.xlane.xlu0 %1799
    %v1801 = vsel %vm1777, %v1543, inf
    %v1802 = vsel %vm1779, %v1544, inf
    %v1803 = vmin.f32 %v1801, %v1802
    %1804 = vmin.xlane.f32.xlu0 %v1803
    %v1805 = vpop.xlane.xlu0 %1804
    %v1806 = vsel %vm1789, %v1555, inf
    %v1807 = vsel %vm1791, %v1556, inf
    %v1808 = vmin.f32 %v1806, %v1807
    %1809 = vmin.xlane.f32.xlu0 %v1808
    %v1810 = vpop.xlane.xlu0 %1809
    %vm1811 = vcmask 105488
    %v1812 = vsel %vm1811, %v1514, inf
    %1813 = vmin.xlane.f32.xlu0 %v1812
    %v1814 = vpop.xlane.xlu0 %1813
    %v1815 = vsel %vm1811, %v1542, inf
    %1816 = vmin.xlane.f32.xlu0 %v1815
    %v1817 = vpop.xlane.xlu0 %1816
    %vm1818 = vcmask 101392
    %v1819 = vsel %vm1818, %v1554, inf
    %1820 = vmin.xlane.f32.xlu0 %v1819
    %v1821 = vpop.xlane.xlu0 %1820
    %v1822 = vsel %vm1811, %v1516, inf
    %1823 = vmin.xlane.f32.xlu0 %v1822
    %v1824 = vpop.xlane.xlu0 %1823
    %v1825 = vsel %vm1811, %v1544, inf
    %1826 = vmin.xlane.f32.xlu0 %v1825
    %v1827 = vpop.xlane.xlu0 %1826
    %v1828 = vsel %vm1818, %v1556, inf
    %1829 = vmin.xlane.f32.xlu0 %v1828
    %v1830 = vpop.xlane.xlu0 %1829
    %vm1831 = vcmask 195688
    %v1832 = vsel %vm1831, %v1514, inf
    %1833 = vmin.xlane.f32.xlu0 %v1832
    %v1834 = vpop.xlane.xlu0 %1833
    %v1835 = vsel %vm1831, %v1542, inf
    %1836 = vmin.xlane.f32.xlu0 %v1835
    %v1837 = vpop.xlane.xlu0 %1836
    %vm1838 = vcmask 191592
    %v1839 = vsel %vm1838, %v1554, inf
    %1840 = vmin.xlane.f32.xlu0 %v1839
    %v1841 = vpop.xlane.xlu0 %1840
    %v1842 = vsel %vm1831, %v1516, inf
    %1843 = vmin.xlane.f32.xlu0 %v1842
    %v1844 = vpop.xlane.xlu0 %1843
    %v1845 = vsel %vm1831, %v1544, inf
    %1846 = vmin.xlane.f32.xlu0 %v1845
    %v1847 = vpop.xlane.xlu0 %1846
    %v1848 = vsel %vm1838, %v1556, inf
    %1849 = vmin.xlane.f32.xlu0 %v1848
    %v1850 = vpop.xlane.xlu0 %1849
    %vm1851 = vcmask 285888
    %v1852 = vsel %vm1851, %v1514, inf
    %1853 = vmin.xlane.f32.xlu0 %v1852
    %v1854 = vpop.xlane.xlu0 %1853
    %v1855 = vsel %vm1851, %v1542, inf
    %1856 = vmin.xlane.f32.xlu0 %v1855
    %v1857 = vpop.xlane.xlu0 %1856
    %vm1858 = vcmask 281792
    %v1859 = vsel %vm1858, %v1554, inf
    %1860 = vmin.xlane.f32.xlu0 %v1859
    %v1861 = vpop.xlane.xlu0 %1860
    %v1862 = vsel %vm1851, %v1516, inf
    %1863 = vmin.xlane.f32.xlu0 %v1862
    %v1864 = vpop.xlane.xlu0 %1863
    %v1865 = vsel %vm1851, %v1544, inf
    %1866 = vmin.xlane.f32.xlu0 %v1865
    %v1867 = vpop.xlane.xlu0 %1866
    %v1868 = vsel %vm1858, %v1556, inf
    %1869 = vmin.xlane.f32.xlu0 %v1868
    %v1870 = vpop.xlane.xlu0 %1869
    %vm1871 = vcmask 376088
    %v1872 = vsel %vm1871, %v1514, inf
    %1873 = vmin.xlane.f32.xlu0 %v1872
    %v1874 = vpop.xlane.xlu0 %1873
    %v1875 = vsel %vm1871, %v1542, inf
    %1876 = vmin.xlane.f32.xlu0 %v1875
    %v1877 = vpop.xlane.xlu0 %1876
    %vm1878 = vcmask 371992
    %v1879 = vsel %vm1878, %v1554, inf
    %1880 = vmin.xlane.f32.xlu0 %v1879
    %v1881 = vpop.xlane.xlu0 %1880
    %v1882 = vsel %vm1871, %v1516, inf
    %1883 = vmin.xlane.f32.xlu0 %v1882
    %v1884 = vpop.xlane.xlu0 %1883
    %v1885 = vsel %vm1871, %v1544, inf
    %1886 = vmin.xlane.f32.xlu0 %v1885
    %v1887 = vpop.xlane.xlu0 %1886
    %v1888 = vsel %vm1878, %v1556, inf
    %1889 = vmin.xlane.f32.xlu0 %v1888
    %v1890 = vpop.xlane.xlu0 %1889
    %vm1891 = vcmask 466288
    %v1892 = vsel %vm1891, %v1514, inf
    %1893 = vmin.xlane.f32.xlu0 %v1892
    %v1894 = vpop.xlane.xlu0 %1893
    %v1895 = vsel %vm1891, %v1542, inf
    %1896 = vmin.xlane.f32.xlu0 %v1895
    %v1897 = vpop.xlane.xlu0 %1896
    %vm1898 = vcmask 462192
    %v1899 = vsel %vm1898, %v1554, inf
    %1900 = vmin.xlane.f32.xlu0 %v1899
    %v1901 = vpop.xlane.xlu0 %1900
    %v1902 = vsel %vm1891, %v1516, inf
    %1903 = vmin.xlane.f32.xlu0 %v1902
    %v1904 = vpop.xlane.xlu0 %1903
    %v1905 = vsel %vm1891, %v1544, inf
    %1906 = vmin.xlane.f32.xlu0 %v1905
    %v1907 = vpop.xlane.xlu0 %1906
    %v1908 = vsel %vm1898, %v1556, inf
    %1909 = vmin.xlane.f32.xlu0 %v1908
    %v1910 = vpop.xlane.xlu0 %1909
    %vm1911 = vcmask 556488
    %v1912 = vsel %vm1911, %v1514, inf
    %1913 = vmin.xlane.f32.xlu0 %v1912
    %v1914 = vpop.xlane.xlu0 %1913
    %v1915 = vsel %vm1911, %v1542, inf
    %1916 = vmin.xlane.f32.xlu0 %v1915
    %v1917 = vpop.xlane.xlu0 %1916
    %vm1918 = vcmask 552392
    %v1919 = vsel %vm1918, %v1554, inf
    %1920 = vmin.xlane.f32.xlu0 %v1919
    %v1921 = vpop.xlane.xlu0 %1920
    %v1922 = vsel %vm1911, %v1516, inf
    %1923 = vmin.xlane.f32.xlu0 %v1922
    %v1924 = vpop.xlane.xlu0 %1923
    %v1925 = vsel %vm1911, %v1544, inf
    %1926 = vmin.xlane.f32.xlu0 %v1925
    %v1927 = vpop.xlane.xlu0 %1926
    %v1928 = vsel %vm1918, %v1556, inf
    %1929 = vmin.xlane.f32.xlu0 %v1928
    %v1930 = vpop.xlane.xlu0 %1929
    %vm1931 = vcmask 646688
    %v1932 = vsel %vm1931, %v1514, inf
    %1933 = vmin.xlane.f32.xlu0 %v1932
    %v1934 = vpop.xlane.xlu0 %1933
    %v1935 = vsel %vm1931, %v1542, inf
    %1936 = vmin.xlane.f32.xlu0 %v1935
    %v1937 = vpop.xlane.xlu0 %1936
    %vm1938 = vcmask 642592
    %v1939 = vsel %vm1938, %v1554, inf
    %1940 = vmin.xlane.f32.xlu0 %v1939
    %v1941 = vpop.xlane.xlu0 %1940
    %v1942 = vsel %vm1931, %v1516, inf
    %1943 = vmin.xlane.f32.xlu0 %v1942
    %v1944 = vpop.xlane.xlu0 %1943
    %v1945 = vsel %vm1931, %v1544, inf
    %1946 = vmin.xlane.f32.xlu0 %v1945
    %v1947 = vpop.xlane.xlu0 %1946
    %v1948 = vsel %vm1938, %v1556, inf
    %1949 = vmin.xlane.f32.xlu0 %v1948
    %v1950 = vpop.xlane.xlu0 %1949
    %vm1951 = vcmask 720504
    %v1952 = vsel %vm1951, %v1514, inf
    %1953 = vmin.xlane.f32.xlu0 %v1952
    %v1954 = vpop.xlane.xlu0 %1953
    %v1955 = vsel %vm1951, %v1542, inf
    %1956 = vmin.xlane.f32.xlu0 %v1955
    %v1957 = vpop.xlane.xlu0 %1956
    %vm1958 = vcmask 716408
    %v1959 = vsel %vm1958, %v1554, inf
    %1960 = vmin.xlane.f32.xlu0 %v1959
    %v1961 = vpop.xlane.xlu0 %1960
    %v1962 = vsel %vm1951, %v1516, inf
    %1963 = vmin.xlane.f32.xlu0 %v1962
    %v1964 = vpop.xlane.xlu0 %1963
    %v1965 = vsel %vm1951, %v1544, inf
    %1966 = vmin.xlane.f32.xlu0 %v1965
    %v1967 = vpop.xlane.xlu0 %1966
    %v1968 = vsel %vm1958, %v1556, inf
    %1969 = vmin.xlane.f32.xlu0 %v1968
    %v1970 = vpop.xlane.xlu0 %1969
    %v1977 = vlaneseq
    %v1978 = vand.u32 %v1977, 127
    %v1979 = vlaneseq
    %v1980 = vshrl.u32 %v1979, 7
    %v1981 = vsub.s32 %v1978, %v1980
    %v1982 = vrot.slane %v1560, %v1981
    %v1983 = vadd.s32 %v1978, 4294967288
    %v1984 = vlaneseq
    %v1985 = vshrl.u32 %v1984, 7
    %v1986 = vsub.s32 %v1983, %v1985
    %v1987 = vrot.slane %v1563, %v1986
    %vm1988 = vcmask 130112
    %v1989 = vsel %vm1988, %v1987, %v1982
    %v1990 = vadd.s32 %v1978, 4294967280
    %v1991 = vlaneseq
    %v1992 = vshrl.u32 %v1991, 7
    %v1993 = vsub.s32 %v1990, %v1992
    %v1994 = vrot.slane %v1567, %v1993
    %vm1995 = vcmask 195712
    %v1996 = vsel %vm1995, %v1994, %v1989
    %v1997 = vlaneseq
    %v1998 = vshrl.u32 %v1997, 7
    %v1999 = vsub.s32 %v1978, %v1998
    %v2000 = vrot.slane %v1570, %v1999
    %v2001 = vlaneseq
    %v2002 = vshrl.u32 %v2001, 7
    %v2003 = vsub.s32 %v1983, %v2002
    %v2004 = vrot.slane %v1573, %v2003
    %v2005 = vsel %vm1988, %v2004, %v2000
    %v2006 = vlaneseq
    %v2007 = vshrl.u32 %v2006, 7
    %v2008 = vsub.s32 %v1990, %v2007
    %v2009 = vrot.slane %v1576, %v2008
    %v2010 = vsel %vm1995, %v2009, %v2005
    %vm2011 = vcmask 1041409
    %v2012 = vsel %vm2011, %v2010, %v1996
    %v2020 = vadd.s32 %v1978, 4294967276
    %v2021 = vlaneseq
    %v2022 = vshrl.u32 %v2021, 7
    %v2023 = vsub.s32 %v2020, %v2022
    %v2024 = vrot.slane %v1580, %v2023
    %v2025 = vadd.s32 %v1978, 4294967268
    %v2026 = vlaneseq
    %v2027 = vshrl.u32 %v2026, 7
    %v2028 = vsub.s32 %v2025, %v2027
    %v2029 = vrot.slane %v1583, %v2028
    %vm2030 = vcmask 294112
    %v2031 = vsel %vm2030, %v2029, %v2024
    %v2032 = vadd.s32 %v1978, 4294967260
    %v2033 = vlaneseq
    %v2034 = vshrl.u32 %v2033, 7
    %v2035 = vsub.s32 %v2032, %v2034
    %v2036 = vrot.slane %v1587, %v2035
    %vm2037 = vcmask 359712
    %v2038 = vsel %vm2037, %v2036, %v2031
    %v2039 = vlaneseq
    %v2040 = vshrl.u32 %v2039, 7
    %v2041 = vsub.s32 %v2020, %v2040
    %v2042 = vrot.slane %v1590, %v2041
    %v2043 = vlaneseq
    %v2044 = vshrl.u32 %v2043, 7
    %v2045 = vsub.s32 %v2025, %v2044
    %v2046 = vrot.slane %v1593, %v2045
    %v2047 = vsel %vm2030, %v2046, %v2042
    %v2048 = vlaneseq
    %v2049 = vshrl.u32 %v2048, 7
    %v2050 = vsub.s32 %v2032, %v2049
    %v2051 = vrot.slane %v1596, %v2050
    %v2052 = vsel %vm2037, %v2051, %v2047
    %v2053 = vsel %vm2011, %v2052, %v2038
    %v2061 = vadd.s32 %v1978, 4294967256
    %v2062 = vlaneseq
    %v2063 = vshrl.u32 %v2062, 7
    %v2064 = vsub.s32 %v2061, %v2063
    %v2065 = vrot.slane %v1600, %v2064
    %v2066 = vadd.s32 %v1978, 4294967248
    %v2067 = vlaneseq
    %v2068 = vshrl.u32 %v2067, 7
    %v2069 = vsub.s32 %v2066, %v2068
    %v2070 = vrot.slane %v1603, %v2069
    %vm2071 = vcmask 458112
    %v2072 = vsel %vm2071, %v2070, %v2065
    %v2073 = vadd.s32 %v1978, 4294967240
    %v2074 = vlaneseq
    %v2075 = vshrl.u32 %v2074, 7
    %v2076 = vsub.s32 %v2073, %v2075
    %v2077 = vrot.slane %v1607, %v2076
    %vm2078 = vcmask 523712
    %v2079 = vsel %vm2078, %v2077, %v2072
    %v2080 = vlaneseq
    %v2081 = vshrl.u32 %v2080, 7
    %v2082 = vsub.s32 %v2061, %v2081
    %v2083 = vrot.slane %v1610, %v2082
    %v2084 = vlaneseq
    %v2085 = vshrl.u32 %v2084, 7
    %v2086 = vsub.s32 %v2066, %v2085
    %v2087 = vrot.slane %v1613, %v2086
    %v2088 = vsel %vm2071, %v2087, %v2083
    %v2089 = vlaneseq
    %v2090 = vshrl.u32 %v2089, 7
    %v2091 = vsub.s32 %v2073, %v2090
    %v2092 = vrot.slane %v1616, %v2091
    %v2093 = vsel %vm2078, %v2092, %v2088
    %v2094 = vsel %vm2011, %v2093, %v2079
    %v2102 = vadd.s32 %v1978, 4294967236
    %v2103 = vlaneseq
    %v2104 = vshrl.u32 %v2103, 7
    %v2105 = vsub.s32 %v2102, %v2104
    %v2106 = vrot.slane %v1620, %v2105
    %v2107 = vadd.s32 %v1978, 4294967228
    %v2108 = vlaneseq
    %v2109 = vshrl.u32 %v2108, 7
    %v2110 = vsub.s32 %v2107, %v2109
    %v2111 = vrot.slane %v1623, %v2110
    %vm2112 = vcmask 622112
    %v2113 = vsel %vm2112, %v2111, %v2106
    %v2114 = vadd.s32 %v1978, 4294967220
    %v2115 = vlaneseq
    %v2116 = vshrl.u32 %v2115, 7
    %v2117 = vsub.s32 %v2114, %v2116
    %v2118 = vrot.slane %v1627, %v2117
    %vm2119 = vcmask 687712
    %v2120 = vsel %vm2119, %v2118, %v2113
    %v2121 = vlaneseq
    %v2122 = vshrl.u32 %v2121, 7
    %v2123 = vsub.s32 %v2102, %v2122
    %v2124 = vrot.slane %v1630, %v2123
    %v2125 = vlaneseq
    %v2126 = vshrl.u32 %v2125, 7
    %v2127 = vsub.s32 %v2107, %v2126
    %v2128 = vrot.slane %v1633, %v2127
    %v2129 = vsel %vm2112, %v2128, %v2124
    %v2130 = vlaneseq
    %v2131 = vshrl.u32 %v2130, 7
    %v2132 = vsub.s32 %v2114, %v2131
    %v2133 = vrot.slane %v1636, %v2132
    %v2134 = vsel %vm2119, %v2133, %v2129
    %v2135 = vsel %vm2011, %v2134, %v2120
    %v2143 = vadd.s32 %v1978, 4294967216
    %v2144 = vlaneseq
    %v2145 = vshrl.u32 %v2144, 7
    %v2146 = vsub.s32 %v2143, %v2145
    %v2147 = vrot.slane %v1640, %v2146
    %v2148 = vadd.s32 %v1978, 4294967208
    %v2149 = vlaneseq
    %v2150 = vshrl.u32 %v2149, 7
    %v2151 = vsub.s32 %v2148, %v2150
    %v2152 = vrot.slane %v1643, %v2151
    %vm2153 = vcmask 786112
    %v2154 = vsel %vm2153, %v2152, %v2147
    %v2155 = vadd.s32 %v1978, 4294967200
    %v2156 = vlaneseq
    %v2157 = vshrl.u32 %v2156, 7
    %v2158 = vsub.s32 %v2155, %v2157
    %v2159 = vrot.slane %v1647, %v2158
    %vm2160 = vcmask 851712
    %v2161 = vsel %vm2160, %v2159, %v2154
    %v2162 = vlaneseq
    %v2163 = vshrl.u32 %v2162, 7
    %v2164 = vsub.s32 %v2143, %v2163
    %v2165 = vrot.slane %v1650, %v2164
    %v2166 = vlaneseq
    %v2167 = vshrl.u32 %v2166, 7
    %v2168 = vsub.s32 %v2148, %v2167
    %v2169 = vrot.slane %v1653, %v2168
    %v2170 = vsel %vm2153, %v2169, %v2165
    %v2171 = vlaneseq
    %v2172 = vshrl.u32 %v2171, 7
    %v2173 = vsub.s32 %v2155, %v2172
    %v2174 = vrot.slane %v1656, %v2173
    %v2175 = vsel %vm2160, %v2174, %v2170
    %v2176 = vsel %vm2011, %v2175, %v2161
    %v2184 = vadd.s32 %v1978, 4294967196
    %v2185 = vlaneseq
    %v2186 = vshrl.u32 %v2185, 7
    %v2187 = vsub.s32 %v2184, %v2186
    %v2188 = vrot.slane %v1660, %v2187
    %v2189 = vadd.s32 %v1978, 4294967188
    %v2190 = vlaneseq
    %v2191 = vshrl.u32 %v2190, 7
    %v2192 = vsub.s32 %v2189, %v2191
    %v2193 = vrot.slane %v1663, %v2192
    %vm2194 = vcmask 950112
    %v2195 = vsel %vm2194, %v2193, %v2188
    %v2196 = vadd.s32 %v1978, 4294967180
    %v2197 = vlaneseq
    %v2198 = vshrl.u32 %v2197, 7
    %v2199 = vsub.s32 %v2196, %v2198
    %v2200 = vrot.slane %v1667, %v2199
    %vm2201 = vcmask 1015712
    %v2202 = vsel %vm2201, %v2200, %v2195
    %v2203 = vlaneseq
    %v2204 = vshrl.u32 %v2203, 7
    %v2205 = vsub.s32 %v2184, %v2204
    %v2206 = vrot.slane %v1670, %v2205
    %v2207 = vlaneseq
    %v2208 = vshrl.u32 %v2207, 7
    %v2209 = vsub.s32 %v2189, %v2208
    %v2210 = vrot.slane %v1673, %v2209
    %v2211 = vsel %vm2194, %v2210, %v2206
    %v2212 = vlaneseq
    %v2213 = vshrl.u32 %v2212, 7
    %v2214 = vsub.s32 %v2196, %v2213
    %v2215 = vrot.slane %v1676, %v2214
    %v2216 = vsel %vm2201, %v2215, %v2211
    %v2217 = vsel %vm2011, %v2216, %v2202
    %v2225 = vadd.s32 %v1978, 4294967176
    %v2226 = vlaneseq
    %v2227 = vshrl.u32 %v2226, 7
    %v2228 = vsub.s32 %v2225, %v2227
    %v2229 = vrot.slane %v1680, %v2228
    %v2230 = vlaneseq
    %v2231 = vshrl.u32 %v2230, 7
    %v2232 = vsub.s32 %v1978, %v2231
    %v2233 = vrot.slane %v1683, %v2232
    %v2234 = vlaneseq
    %v2235 = vshrl.u32 %v2234, 7
    %v2236 = vsub.s32 %v1983, %v2235
    %v2237 = vrot.slane %v1687, %v2236
    %v2238 = vsel %vm1988, %v2237, %v2233
    %v2239 = vlaneseq
    %v2240 = vshrl.u32 %v2239, 7
    %v2241 = vsub.s32 %v2225, %v2240
    %v2242 = vrot.slane %v1690, %v2241
    %v2243 = vlaneseq
    %v2244 = vshrl.u32 %v2243, 7
    %v2245 = vsub.s32 %v1978, %v2244
    %v2246 = vrot.slane %v1693, %v2245
    %v2247 = vlaneseq
    %v2248 = vshrl.u32 %v2247, 7
    %v2249 = vsub.s32 %v1983, %v2248
    %v2250 = vrot.slane %v1696, %v2249
    %v2251 = vsel %vm1988, %v2250, %v2246
    %v2252 = vsel %vm2011, %v2242, %v2229
    %v2253 = vsel %vm2011, %v2251, %v2238
    %v2262 = vadd.s32 %v1978, 4294967284
    %v2263 = vlaneseq
    %v2264 = vshrl.u32 %v2263, 7
    %v2265 = vsub.s32 %v2262, %v2264
    %v2266 = vrot.slane %v1700, %v2265
    %v2267 = vlaneseq
    %v2268 = vshrl.u32 %v2267, 7
    %v2269 = vsub.s32 %v2020, %v2268
    %v2270 = vrot.slane %v1703, %v2269
    %vm2271 = vcmask 228512
    %v2272 = vsel %vm2271, %v2270, %v2266
    %v2273 = vlaneseq
    %v2274 = vshrl.u32 %v2273, 7
    %v2275 = vsub.s32 %v2025, %v2274
    %v2276 = vrot.slane %v1707, %v2275
    %v2277 = vsel %vm2030, %v2276, %v2272
    %v2278 = vlaneseq
    %v2279 = vshrl.u32 %v2278, 7
    %v2280 = vsub.s32 %v2262, %v2279
    %v2281 = vrot.slane %v1710, %v2280
    %v2282 = vlaneseq
    %v2283 = vshrl.u32 %v2282, 7
    %v2284 = vsub.s32 %v2020, %v2283
    %v2285 = vrot.slane %v1713, %v2284
    %v2286 = vsel %vm2271, %v2285, %v2281
    %v2287 = vlaneseq
    %v2288 = vshrl.u32 %v2287, 7
    %v2289 = vsub.s32 %v2025, %v2288
    %v2290 = vrot.slane %v1716, %v2289
    %v2291 = vsel %vm2030, %v2290, %v2286
    %v2292 = vsel %vm2011, %v2291, %v2277
    %v2300 = vadd.s32 %v1978, 4294967264
    %v2301 = vlaneseq
    %v2302 = vshrl.u32 %v2301, 7
    %v2303 = vsub.s32 %v2300, %v2302
    %v2304 = vrot.slane %v1720, %v2303
    %v2305 = vlaneseq
    %v2306 = vshrl.u32 %v2305, 7
    %v2307 = vsub.s32 %v2061, %v2306
    %v2308 = vrot.slane %v1723, %v2307
    %vm2309 = vcmask 392512
    %v2310 = vsel %vm2309, %v2308, %v2304
    %v2311 = vlaneseq
    %v2312 = vshrl.u32 %v2311, 7
    %v2313 = vsub.s32 %v2066, %v2312
    %v2314 = vrot.slane %v1727, %v2313
    %v2315 = vsel %vm2071, %v2314, %v2310
    %v2316 = vlaneseq
    %v2317 = vshrl.u32 %v2316, 7
    %v2318 = vsub.s32 %v2300, %v2317
    %v2319 = vrot.slane %v1730, %v2318
    %v2320 = vlaneseq
    %v2321 = vshrl.u32 %v2320, 7
    %v2322 = vsub.s32 %v2061, %v2321
    %v2323 = vrot.slane %v1733, %v2322
    %v2324 = vsel %vm2309, %v2323, %v2319
    %v2325 = vlaneseq
    %v2326 = vshrl.u32 %v2325, 7
    %v2327 = vsub.s32 %v2066, %v2326
    %v2328 = vrot.slane %v1736, %v2327
    %v2329 = vsel %vm2071, %v2328, %v2324
    %v2330 = vsel %vm2011, %v2329, %v2315
    %v2338 = vadd.s32 %v1978, 4294967244
    %v2339 = vlaneseq
    %v2340 = vshrl.u32 %v2339, 7
    %v2341 = vsub.s32 %v2338, %v2340
    %v2342 = vrot.slane %v1740, %v2341
    %v2343 = vlaneseq
    %v2344 = vshrl.u32 %v2343, 7
    %v2345 = vsub.s32 %v2102, %v2344
    %v2346 = vrot.slane %v1743, %v2345
    %vm2347 = vcmask 556512
    %v2348 = vsel %vm2347, %v2346, %v2342
    %v2349 = vlaneseq
    %v2350 = vshrl.u32 %v2349, 7
    %v2351 = vsub.s32 %v2107, %v2350
    %v2352 = vrot.slane %v1747, %v2351
    %v2353 = vsel %vm2112, %v2352, %v2348
    %v2354 = vlaneseq
    %v2355 = vshrl.u32 %v2354, 7
    %v2356 = vsub.s32 %v2338, %v2355
    %v2357 = vrot.slane %v1750, %v2356
    %v2358 = vlaneseq
    %v2359 = vshrl.u32 %v2358, 7
    %v2360 = vsub.s32 %v2102, %v2359
    %v2361 = vrot.slane %v1753, %v2360
    %v2362 = vsel %vm2347, %v2361, %v2357
    %v2363 = vlaneseq
    %v2364 = vshrl.u32 %v2363, 7
    %v2365 = vsub.s32 %v2107, %v2364
    %v2366 = vrot.slane %v1756, %v2365
    %v2367 = vsel %vm2112, %v2366, %v2362
    %v2368 = vsel %vm2011, %v2367, %v2353
    %v2376 = vadd.s32 %v1978, 4294967224
    %v2377 = vlaneseq
    %v2378 = vshrl.u32 %v2377, 7
    %v2379 = vsub.s32 %v2376, %v2378
    %v2380 = vrot.slane %v1760, %v2379
    %v2381 = vlaneseq
    %v2382 = vshrl.u32 %v2381, 7
    %v2383 = vsub.s32 %v2143, %v2382
    %v2384 = vrot.slane %v1763, %v2383
    %vm2385 = vcmask 720512
    %v2386 = vsel %vm2385, %v2384, %v2380
    %v2387 = vlaneseq
    %v2388 = vshrl.u32 %v2387, 7
    %v2389 = vsub.s32 %v2148, %v2388
    %v2390 = vrot.slane %v1767, %v2389
    %v2391 = vsel %vm2153, %v2390, %v2386
    %v2392 = vlaneseq
    %v2393 = vshrl.u32 %v2392, 7
    %v2394 = vsub.s32 %v2376, %v2393
    %v2395 = vrot.slane %v1770, %v2394
    %v2396 = vlaneseq
    %v2397 = vshrl.u32 %v2396, 7
    %v2398 = vsub.s32 %v2143, %v2397
    %v2399 = vrot.slane %v1773, %v2398
    %v2400 = vsel %vm2385, %v2399, %v2395
    %v2401 = vlaneseq
    %v2402 = vshrl.u32 %v2401, 7
    %v2403 = vsub.s32 %v2148, %v2402
    %v2404 = vrot.slane %v1776, %v2403
    %v2405 = vsel %vm2153, %v2404, %v2400
    %v2406 = vsel %vm2011, %v2405, %v2391
    %v2414 = vadd.s32 %v1978, 4294967204
    %v2415 = vlaneseq
    %v2416 = vshrl.u32 %v2415, 7
    %v2417 = vsub.s32 %v2414, %v2416
    %v2418 = vrot.slane %v1783, %v2417
    %v2419 = vlaneseq
    %v2420 = vshrl.u32 %v2419, 7
    %v2421 = vsub.s32 %v2184, %v2420
    %v2422 = vrot.slane %v1788, %v2421
    %vm2423 = vcmask 884512
    %v2424 = vsel %vm2423, %v2422, %v2418
    %v2425 = vlaneseq
    %v2426 = vshrl.u32 %v2425, 7
    %v2427 = vsub.s32 %v2189, %v2426
    %v2428 = vrot.slane %v1795, %v2427
    %v2429 = vsel %vm2194, %v2428, %v2424
    %v2430 = vlaneseq
    %v2431 = vshrl.u32 %v2430, 7
    %v2432 = vsub.s32 %v2414, %v2431
    %v2433 = vrot.slane %v1800, %v2432
    %v2434 = vlaneseq
    %v2435 = vshrl.u32 %v2434, 7
    %v2436 = vsub.s32 %v2184, %v2435
    %v2437 = vrot.slane %v1805, %v2436
    %v2438 = vsel %vm2423, %v2437, %v2433
    %v2439 = vlaneseq
    %v2440 = vshrl.u32 %v2439, 7
    %v2441 = vsub.s32 %v2189, %v2440
    %v2442 = vrot.slane %v1810, %v2441
    %v2443 = vsel %vm2194, %v2442, %v2438
    %v2444 = vsel %vm2011, %v2443, %v2429
    %v2452 = vadd.s32 %v1978, 4294967184
    %v2453 = vlaneseq
    %v2454 = vshrl.u32 %v2453, 7
    %v2455 = vsub.s32 %v2452, %v2454
    %v2456 = vrot.slane %v1814, %v2455
    %v2457 = vlaneseq
    %v2458 = vshrl.u32 %v2457, 7
    %v2459 = vsub.s32 %v2225, %v2458
    %v2460 = vrot.slane %v1817, %v2459
    %vm2461 = vcmask 1048512
    %v2462 = vsel %vm2461, %v2460, %v2456
    %v2463 = vlaneseq
    %v2464 = vshrl.u32 %v2463, 7
    %v2465 = vsub.s32 %v1978, %v2464
    %v2466 = vrot.slane %v1821, %v2465
    %v2467 = vlaneseq
    %v2468 = vshrl.u32 %v2467, 7
    %v2469 = vsub.s32 %v2452, %v2468
    %v2470 = vrot.slane %v1824, %v2469
    %v2471 = vlaneseq
    %v2472 = vshrl.u32 %v2471, 7
    %v2473 = vsub.s32 %v2225, %v2472
    %v2474 = vrot.slane %v1827, %v2473
    %v2475 = vsel %vm2461, %v2474, %v2470
    %v2476 = vlaneseq
    %v2477 = vshrl.u32 %v2476, 7
    %v2478 = vsub.s32 %v1978, %v2477
    %v2479 = vrot.slane %v1830, %v2478
    %v2480 = vsel %vm2011, %v2475, %v2462
    %v2481 = vsel %vm2011, %v2479, %v2466
    %v2490 = vadd.s32 %v1978, 4294967292
    %v2491 = vlaneseq
    %v2492 = vshrl.u32 %v2491, 7
    %v2493 = vsub.s32 %v2490, %v2492
    %v2494 = vrot.slane %v1834, %v2493
    %v2495 = vlaneseq
    %v2496 = vshrl.u32 %v2495, 7
    %v2497 = vsub.s32 %v2262, %v2496
    %v2498 = vrot.slane %v1837, %v2497
    %vm2499 = vcmask 162912
    %v2500 = vsel %vm2499, %v2498, %v2494
    %v2501 = vlaneseq
    %v2502 = vshrl.u32 %v2501, 7
    %v2503 = vsub.s32 %v2020, %v2502
    %v2504 = vrot.slane %v1841, %v2503
    %v2505 = vsel %vm2271, %v2504, %v2500
    %v2506 = vlaneseq
    %v2507 = vshrl.u32 %v2506, 7
    %v2508 = vsub.s32 %v2490, %v2507
    %v2509 = vrot.slane %v1844, %v2508
    %v2510 = vlaneseq
    %v2511 = vshrl.u32 %v2510, 7
    %v2512 = vsub.s32 %v2262, %v2511
    %v2513 = vrot.slane %v1847, %v2512
    %v2514 = vsel %vm2499, %v2513, %v2509
    %v2515 = vlaneseq
    %v2516 = vshrl.u32 %v2515, 7
    %v2517 = vsub.s32 %v2020, %v2516
    %v2518 = vrot.slane %v1850, %v2517
    %v2519 = vsel %vm2271, %v2518, %v2514
    %v2520 = vsel %vm2011, %v2519, %v2505
    %v2528 = vadd.s32 %v1978, 4294967272
    %v2529 = vlaneseq
    %v2530 = vshrl.u32 %v2529, 7
    %v2531 = vsub.s32 %v2528, %v2530
    %v2532 = vrot.slane %v1854, %v2531
    %v2533 = vlaneseq
    %v2534 = vshrl.u32 %v2533, 7
    %v2535 = vsub.s32 %v2300, %v2534
    %v2536 = vrot.slane %v1857, %v2535
    %vm2537 = vcmask 326912
    %v2538 = vsel %vm2537, %v2536, %v2532
    %v2539 = vlaneseq
    %v2540 = vshrl.u32 %v2539, 7
    %v2541 = vsub.s32 %v2061, %v2540
    %v2542 = vrot.slane %v1861, %v2541
    %v2543 = vsel %vm2309, %v2542, %v2538
    %v2544 = vlaneseq
    %v2545 = vshrl.u32 %v2544, 7
    %v2546 = vsub.s32 %v2528, %v2545
    %v2547 = vrot.slane %v1864, %v2546
    %v2548 = vlaneseq
    %v2549 = vshrl.u32 %v2548, 7
    %v2550 = vsub.s32 %v2300, %v2549
    %v2551 = vrot.slane %v1867, %v2550
    %v2552 = vsel %vm2537, %v2551, %v2547
    %v2553 = vlaneseq
    %v2554 = vshrl.u32 %v2553, 7
    %v2555 = vsub.s32 %v2061, %v2554
    %v2556 = vrot.slane %v1870, %v2555
    %v2557 = vsel %vm2309, %v2556, %v2552
    %v2558 = vsel %vm2011, %v2557, %v2543
    %v2566 = vadd.s32 %v1978, 4294967252
    %v2567 = vlaneseq
    %v2568 = vshrl.u32 %v2567, 7
    %v2569 = vsub.s32 %v2566, %v2568
    %v2570 = vrot.slane %v1874, %v2569
    %v2571 = vlaneseq
    %v2572 = vshrl.u32 %v2571, 7
    %v2573 = vsub.s32 %v2338, %v2572
    %v2574 = vrot.slane %v1877, %v2573
    %vm2575 = vcmask 490912
    %v2576 = vsel %vm2575, %v2574, %v2570
    %v2577 = vlaneseq
    %v2578 = vshrl.u32 %v2577, 7
    %v2579 = vsub.s32 %v2102, %v2578
    %v2580 = vrot.slane %v1881, %v2579
    %v2581 = vsel %vm2347, %v2580, %v2576
    %v2582 = vlaneseq
    %v2583 = vshrl.u32 %v2582, 7
    %v2584 = vsub.s32 %v2566, %v2583
    %v2585 = vrot.slane %v1884, %v2584
    %v2586 = vlaneseq
    %v2587 = vshrl.u32 %v2586, 7
    %v2588 = vsub.s32 %v2338, %v2587
    %v2589 = vrot.slane %v1887, %v2588
    %v2590 = vsel %vm2575, %v2589, %v2585
    %v2591 = vlaneseq
    %v2592 = vshrl.u32 %v2591, 7
    %v2593 = vsub.s32 %v2102, %v2592
    %v2594 = vrot.slane %v1890, %v2593
    %v2595 = vsel %vm2347, %v2594, %v2590
    %v2596 = vsel %vm2011, %v2595, %v2581
    %vm2598 = vcmask 162816
    %v2599 = vsel %vm2598, %v2012, %v2053
    %vm2600 = vcmask 326656
    %v2601 = vsel %vm2600, %v2599, %v2094
    %vm2602 = vcmask 490496
    %v2603 = vsel %vm2602, %v2601, %v2135
    %vm2604 = vcmask 654336
    %v2605 = vsel %vm2604, %v2603, %v2176
    %vm2606 = vcmask 818176
    %v2607 = vsel %vm2606, %v2605, %v2217
    %vm2608 = vcmask 982016
    %v2609 = vsel %vm2608, %v2607, %v2252
    %vm2610 = vcmask 97280
    %v2611 = vsel %vm2610, %v2253, %v2292
    %vm2612 = vcmask 261120
    %v2613 = vsel %vm2612, %v2611, %v2330
    %vm2614 = vcmask 424960
    %v2615 = vsel %vm2614, %v2613, %v2368
    %vm2616 = vcmask 588800
    %v2617 = vsel %vm2616, %v2615, %v2406
    %vm2618 = vcmask 752640
    %v2619 = vsel %vm2618, %v2617, %v2444
    %vm2620 = vcmask 916480
    %v2621 = vsel %vm2620, %v2619, %v2480
    %vm2622 = vcmask 31744
    %v2623 = vsel %vm2622, %v2481, %v2520
    %vm2624 = vcmask 195584
    %v2625 = vsel %vm2624, %v2623, %v2558
    %vm2626 = vcmask 359424
    %v2627 = vsel %vm2626, %v2625, %v2596
    %v2634 = vlaneseq
    %v2635 = vshrl.u32 %v2634, 7
    %v2636 = vsub.s32 %v1978, %v2635
    %v2637 = vrot.slane %v1894, %v2636
    %v2638 = vlaneseq
    %v2639 = vshrl.u32 %v2638, 7
    %v2640 = vsub.s32 %v1983, %v2639
    %v2641 = vrot.slane %v1897, %v2640
    %v2642 = vsel %vm1988, %v2641, %v2637
    %v2643 = vlaneseq
    %v2644 = vshrl.u32 %v2643, 7
    %v2645 = vsub.s32 %v1990, %v2644
    %v2646 = vrot.slane %v1901, %v2645
    %v2647 = vsel %vm1995, %v2646, %v2642
    %v2648 = vlaneseq
    %v2649 = vshrl.u32 %v2648, 7
    %v2650 = vsub.s32 %v1978, %v2649
    %v2651 = vrot.slane %v1904, %v2650
    %v2652 = vlaneseq
    %v2653 = vshrl.u32 %v2652, 7
    %v2654 = vsub.s32 %v1983, %v2653
    %v2655 = vrot.slane %v1907, %v2654
    %v2656 = vsel %vm1988, %v2655, %v2651
    %v2657 = vlaneseq
    %v2658 = vshrl.u32 %v2657, 7
    %v2659 = vsub.s32 %v1990, %v2658
    %v2660 = vrot.slane %v1910, %v2659
    %v2661 = vsel %vm1995, %v2660, %v2656
    %v2662 = vsel %vm2011, %v2661, %v2647
    %v2670 = vlaneseq
    %v2671 = vshrl.u32 %v2670, 7
    %v2672 = vsub.s32 %v2020, %v2671
    %v2673 = vrot.slane %v1914, %v2672
    %v2674 = vlaneseq
    %v2675 = vshrl.u32 %v2674, 7
    %v2676 = vsub.s32 %v2025, %v2675
    %v2677 = vrot.slane %v1917, %v2676
    %v2678 = vsel %vm2030, %v2677, %v2673
    %v2679 = vlaneseq
    %v2680 = vshrl.u32 %v2679, 7
    %v2681 = vsub.s32 %v2032, %v2680
    %v2682 = vrot.slane %v1921, %v2681
    %v2683 = vsel %vm2037, %v2682, %v2678
    %v2684 = vlaneseq
    %v2685 = vshrl.u32 %v2684, 7
    %v2686 = vsub.s32 %v2020, %v2685
    %v2687 = vrot.slane %v1924, %v2686
    %v2688 = vlaneseq
    %v2689 = vshrl.u32 %v2688, 7
    %v2690 = vsub.s32 %v2025, %v2689
    %v2691 = vrot.slane %v1927, %v2690
    %v2692 = vsel %vm2030, %v2691, %v2687
    %v2693 = vlaneseq
    %v2694 = vshrl.u32 %v2693, 7
    %v2695 = vsub.s32 %v2032, %v2694
    %v2696 = vrot.slane %v1930, %v2695
    %v2697 = vsel %vm2037, %v2696, %v2692
    %v2698 = vsel %vm2011, %v2697, %v2683
    %v2706 = vlaneseq
    %v2707 = vshrl.u32 %v2706, 7
    %v2708 = vsub.s32 %v2061, %v2707
    %v2709 = vrot.slane %v1934, %v2708
    %v2710 = vlaneseq
    %v2711 = vshrl.u32 %v2710, 7
    %v2712 = vsub.s32 %v2066, %v2711
    %v2713 = vrot.slane %v1937, %v2712
    %v2714 = vsel %vm2071, %v2713, %v2709
    %v2715 = vlaneseq
    %v2716 = vshrl.u32 %v2715, 7
    %v2717 = vsub.s32 %v2073, %v2716
    %v2718 = vrot.slane %v1941, %v2717
    %v2719 = vsel %vm2078, %v2718, %v2714
    %v2720 = vlaneseq
    %v2721 = vshrl.u32 %v2720, 7
    %v2722 = vsub.s32 %v2061, %v2721
    %v2723 = vrot.slane %v1944, %v2722
    %v2724 = vlaneseq
    %v2725 = vshrl.u32 %v2724, 7
    %v2726 = vsub.s32 %v2066, %v2725
    %v2727 = vrot.slane %v1947, %v2726
    %v2728 = vsel %vm2071, %v2727, %v2723
    %v2729 = vlaneseq
    %v2730 = vshrl.u32 %v2729, 7
    %v2731 = vsub.s32 %v2073, %v2730
    %v2732 = vrot.slane %v1950, %v2731
    %v2733 = vsel %vm2078, %v2732, %v2728
    %v2734 = vsel %vm2011, %v2733, %v2719
    %v2742 = vlaneseq
    %v2743 = vshrl.u32 %v2742, 7
    %v2744 = vsub.s32 %v2102, %v2743
    %v2745 = vrot.slane %v1954, %v2744
    %v2746 = vlaneseq
    %v2747 = vshrl.u32 %v2746, 7
    %v2748 = vsub.s32 %v2107, %v2747
    %v2749 = vrot.slane %v1957, %v2748
    %v2750 = vsel %vm2112, %v2749, %v2745
    %v2751 = vlaneseq
    %v2752 = vshrl.u32 %v2751, 7
    %v2753 = vsub.s32 %v2114, %v2752
    %v2754 = vrot.slane %v1961, %v2753
    %v2755 = vsel %vm2119, %v2754, %v2750
    %v2756 = vlaneseq
    %v2757 = vshrl.u32 %v2756, 7
    %v2758 = vsub.s32 %v2102, %v2757
    %v2759 = vrot.slane %v1964, %v2758
    %v2760 = vlaneseq
    %v2761 = vshrl.u32 %v2760, 7
    %v2762 = vsub.s32 %v2107, %v2761
    %v2763 = vrot.slane %v1967, %v2762
    %v2764 = vsel %vm2112, %v2763, %v2759
    %v2765 = vlaneseq
    %v2766 = vshrl.u32 %v2765, 7
    %v2767 = vsub.s32 %v2114, %v2766
    %v2768 = vrot.slane %v1970, %v2767
    %v2769 = vsel %vm2119, %v2768, %v2764
    %v2770 = vsel %vm2011, %v2769, %v2755
    %v2772 = vsel %vm2598, %v2662, %v2698
    %v2773 = vsel %vm2600, %v2772, %v2734
    %v2774 = vsel %vm2602, %v2773, %v2770
    %2776 = vrot.lane.b32.xlu0 %v2774, 64
    %v2777 = vpop.permute.xlu0 %2776
    %vm2779 = vcmask 523264
    %v2780 = vsel %vm2779, %v2627, %v2777
    %vm2781 = vcmp.eq.f32.partialorder %v2609, 333.0
    %vm2782 = vcmp.eq.f32.partialorder %v2621, 333.0
    %vm2783 = vcmp.eq.f32.partialorder %v2780, 333.0
    %vm2784 = vcmp.eq.f32.partialorder %v2777, 333.0
    %v2785 = vsel %vm2781, 0.0, %v2609
    %v2786 = vsel %vm2782, 0.0, %v2621
    %v2787 = vsel %vm2783, 0.0, %v2780
    %v2788 = vsel %vm2784, 0.0, %v2777
    %v2789 = vld [vmem:[%s2] sm:$0xff]
    %v2790 = vld [vmem:[%s2 + $0x8] sm:$0xff]
    %v2791 = vld [vmem:[%s2 + $0x10] sm:$0xff]
    %v2792 = vld [vmem:[%s2 + $0x18] sm:$0xff]
    %v2793 = vld [vmem:[%s2 + $0x20] sm:$0xff]
    %v2794 = vld [vmem:[%s2 + $0x28] sm:$0xff]
    %v2795 = vld [vmem:[%s2 + $0x30] sm:$0xff]
    %v2796 = vld [vmem:[%s2 + $0x38] sm:$0xff]
    %v2797 = vld [vmem:[%s2 + $0x40] sm:$0xff]
    %v2798 = vld [vmem:[%s2 + $0x48] sm:$0xff]
    %v2799 = vld [vmem:[%s2 + $0x50] sm:$0xff]
    %v2800 = vld [vmem:[%s2 + $0x58] sm:$0xff]
    %v2801 = vld [vmem:[%s2 + $0x60] sm:$0xff]
    %v2802 = vld [vmem:[%s2 + $0x68] sm:$0xff]
    %v2803 = vld [vmem:[%s2 + $0x70] sm:$0xff]
    %v2804 = vld [vmem:[%s2 + $0x78] sm:$0xff]
    %v2805 = vld [vmem:[%s2 + $0x80] sm:$0xff]
    %v2806 = vld [vmem:[%s2 + $0x88] sm:$0xff]
    %v2807 = vld [vmem:[%s2 + $0x90] sm:$0xff]
    %v2808 = vld [vmem:[%s2 + $0x98] sm:$0xff]
    %v2809 = vld [vmem:[%s2 + $0xa0] sm:$0xff]
    %v2810 = vld [vmem:[%s2 + $0xa8] sm:$0xff]
    %v2811 = vld [vmem:[%s2 + $0xb0] sm:$0xff]
    %v2812 = vld [vmem:[%s2 + $0xb8] sm:$0xff]
    %v2813 = vld [vmem:[%s2 + $0xc0] sm:$0xff]
    %v2814 = vld [vmem:[%s2 + $0xc8] sm:$0xff]
    %v2815 = vld [vmem:[%s2 + $0xd0] sm:$0xff]
    %v2816 = vld [vmem:[%s2 + $0xd8] sm:$0xff]
    %v2817 = vld [vmem:[%s2 + $0xe0] sm:$0xff]
    %v2818 = vld [vmem:[%s2 + $0xe8] sm:$0xff]
    %v2819 = vld [vmem:[%s2 + $0xf0] sm:$0xff]
    %v2820 = vld [vmem:[%s2 + $0xf8] sm:$0xff]
    %v2821 = vld [vmem:[%s2 + $0x100] sm:$0xff]
    %v2822 = vld [vmem:[%s2 + $0x108] sm:$0xff]
    %v2823 = vld [vmem:[%s2 + $0x110] sm:$0xff]
    %v2824 = vld [vmem:[%s2 + $0x118] sm:$0xff]
    %v2825 = vld [vmem:[%s2 + $0x120] sm:$0xff]
    %v2826 = vld [vmem:[%s2 + $0x128] sm:$0xff]
    %v2827 = vld [vmem:[%s2 + $0x130] sm:$0xff]
    %v2828 = vld [vmem:[%s2 + $0x138] sm:$0xff]
    %v2829 = vld [vmem:[%s2 + $0x140] sm:$0xff]
    %v2830 = vld [vmem:[%s2 + $0x148] sm:$0xff]
    %v2831 = vld [vmem:[%s2 + $0x150] sm:$0xff]
    %v2832 = vld [vmem:[%s2 + $0x158] sm:$0xff]
    %v2833 = vld [vmem:[%s2 + $0x160] sm:$0xff]
    %v2834 = vld [vmem:[%s2 + $0x168] sm:$0xff]
    %v2835 = vld [vmem:[%s2 + $0x170] sm:$0xff]
    %v2836 = vld [vmem:[%s2 + $0x178] sm:$0xff]
    %v2837 = vld [vmem:[%s2 + $0x180] sm:$0xff]
    %v2838 = vld [vmem:[%s2 + $0x188] sm:$0xff]
    %v2839 = vld [vmem:[%s3] sm:$0x1]
    %v2841 = vlaneseq
    %v2842 = vshrl.u32 %v2841, 7
    %v2843 = vsub.s32 0, %v2842
    %v2844 = vrot.slane %v2839, %v2843
    %vm2846 = vcmask 130048
    %v2848 = vsel %vm2846, %v2788, 0
    %2850 = vmatprep.subr.mxu0 0.0
    %2851 = vmatpush1.msra.mxu0 %v2804
    %2852 = vmatprep.subr.mxu0 0.0
    %2853 = vmatpush1.msra.mxu0 %v2803
    %2854 = vmatprep.subr.mxu0 0.0
    %2855 = vmatpush1.msra.mxu0 %v2802
    %2856 = vmatprep.subr.mxu0 0.0
    %2857 = vmatpush1.msra.mxu0 %v2801
    %2858 = vmatprep.subr.mxu0 0.0
    %2859 = vmatpush1.msra.mxu0 %v2800
    %2860 = vmatprep.subr.mxu0 0.0
    %2861 = vmatpush1.msra.mxu0 %v2799
    %2862 = vmatprep.subr.mxu0 0.0
    %2863 = vmatpush1.msra.mxu0 %v2798
    %2864 = vmatprep.subr.mxu0 0.0
    %2865 = vmatpush1.msra.mxu0 %v2797
    %2866 = vmatprep.subr.mxu0 0.0
    %2867 = vmatpush1.msra.mxu0 %v2796
    %2868 = vmatprep.subr.mxu0 0.0
    %2869 = vmatpush1.msra.mxu0 %v2795
    %2870 = vmatprep.subr.mxu0 0.0
    %2871 = vmatpush1.msra.mxu0 %v2794
    %2872 = vmatprep.subr.mxu0 0.0
    %2873 = vmatpush1.msra.mxu0 %v2793
    %2874 = vmatprep.subr.mxu0 0.0
    %2875 = vmatpush1.msra.mxu0 %v2792
    %2876 = vmatprep.subr.mxu0 0.0
    %2877 = vmatpush1.msra.mxu0 %v2791
    %2878 = vmatprep.subr.mxu0 0.0
    %2879 = vmatpush1.msra.mxu0 %v2790
    %2880 = vmatprep.subr.mxu0 0.0
    %2881 = vmatpush1.msra.mxu0 %v2789
    %2882 = vmatprep.subr.mxu0 0.0
    %2883 = vmatpush2.msra.mxu0 %v2820
    %2884 = vmatprep.subr.mxu0 0.0
    %2885 = vmatpush2.msra.mxu0 %v2819
    %2886 = vmatprep.subr.mxu0 0.0
    %2887 = vmatpush2.msra.mxu0 %v2818
    %2888 = vmatprep.subr.mxu0 0.0
    %2889 = vmatpush2.msra.mxu0 %v2817
    %2890 = vmatprep.subr.mxu0 0.0
    %2891 = vmatpush2.msra.mxu0 %v2816
    %2892 = vmatprep.subr.mxu0 0.0
    %2893 = vmatpush2.msra.mxu0 %v2815
    %2894 = vmatprep.subr.mxu0 0.0
    %2895 = vmatpush2.msra.mxu0 %v2814
    %2896 = vmatprep.subr.mxu0 0.0
    %2897 = vmatpush2.msra.mxu0 %v2813
    %2898 = vmatprep.subr.mxu0 0.0
    %2899 = vmatpush2.msra.mxu0 %v2812
    %2900 = vmatprep.subr.mxu0 0.0
    %2901 = vmatpush2.msra.mxu0 %v2811
    %2902 = vmatprep.subr.mxu0 0.0
    %2903 = vmatpush2.msra.mxu0 %v2810
    %2904 = vmatprep.subr.mxu0 0.0
    %2905 = vmatpush2.msra.mxu0 %v2809
    %2906 = vmatprep.subr.mxu0 0.0
    %2907 = vmatpush2.msra.mxu0 %v2808
    %2908 = vmatprep.subr.mxu0 0.0
    %2909 = vmatpush2.msra.mxu0 %v2807
    %2910 = vmatprep.subr.mxu0 0.0
    %2911 = vmatpush2.msra.mxu0 %v2806
    %2912 = vmatprep.subr.mxu0 0.0
    %2913 = vmatpush2.msra.mxu0 %v2805
    %2914 = vmatprep.mubr.f32.mxu0 %v2786
    %2915 = vmatmul.mubr.f32.gmra.mxu0 %v2785
    %v2916 = vpop.f32.mrf.mxu0
    %v2917 = vadd.f32 %v2844, %v2916
    %v2918 = vpop.f32.mrf.mxu0
    %2919 = vdwg.mxu0
    %2920 = vmatprep.subr.mxu0 0.0
    %2921 = vmatpush1.msra.mxu0 %v2836
    %2922 = vmatprep.subr.mxu0 0.0
    %2923 = vmatpush1.msra.mxu0 %v2835
    %2924 = vmatprep.subr.mxu0 0.0
    %2925 = vmatpush1.msra.mxu0 %v2834
    %2926 = vmatprep.subr.mxu0 0.0
    %2927 = vmatpush1.msra.mxu0 %v2833
    %2928 = vmatprep.subr.mxu0 0.0
    %2929 = vmatpush1.msra.mxu0 %v2832
    %2930 = vmatprep.subr.mxu0 0.0
    %2931 = vmatpush1.msra.mxu0 %v2831
    %2932 = vmatprep.subr.mxu0 0.0
    %2933 = vmatpush1.msra.mxu0 %v2830
    %2934 = vmatprep.subr.mxu0 0.0
    %2935 = vmatpush1.msra.mxu0 %v2829
    %2936 = vmatprep.subr.mxu0 0.0
    %2937 = vmatpush1.msra.mxu0 %v2828
    %2938 = vmatprep.subr.mxu0 0.0
    %2939 = vmatpush1.msra.mxu0 %v2827
    %2940 = vmatprep.subr.mxu0 0.0
    %2941 = vmatpush1.msra.mxu0 %v2826
    %2942 = vmatprep.subr.mxu0 0.0
    %2943 = vmatpush1.msra.mxu0 %v2825
    %2944 = vmatprep.subr.mxu0 0.0
    %2945 = vmatpush1.msra.mxu0 %v2824
    %2946 = vmatprep.subr.mxu0 0.0
    %2947 = vmatpush1.msra.mxu0 %v2823
    %2948 = vmatprep.subr.mxu0 0.0
    %2949 = vmatpush1.msra.mxu0 %v2822
    %2950 = vmatprep.subr.mxu0 0.0
    %2951 = vmatpush1.msra.mxu0 %v2821
    %2952 = vmatprep.subr.mxu0 0.0
    %2953 = vmatpush2.msra.mxu0 0.0
    %2954 = vmatprep.subr.mxu0 0.0
    %2955 = vmatpush2.msra.mxu0 0.0
    %2956 = vmatprep.subr.mxu0 0.0
    %2957 = vmatpush2.msra.mxu0 0.0
    %2958 = vmatprep.subr.mxu0 0.0
    %2959 = vmatpush2.msra.mxu0 0.0
    %2960 = vmatprep.subr.mxu0 0.0
    %2961 = vmatpush2.msra.mxu0 0.0
    %2962 = vmatprep.subr.mxu0 0.0
    %2963 = vmatpush2.msra.mxu0 0.0
    %2964 = vmatprep.subr.mxu0 0.0
    %2965 = vmatpush2.msra.mxu0 0.0
    %2966 = vmatprep.subr.mxu0 0.0
    %2967 = vmatpush2.msra.mxu0 0.0
    %2968 = vmatprep.subr.mxu0 0.0
    %2969 = vmatpush2.msra.mxu0 0.0
    %2970 = vmatprep.subr.mxu0 0.0
    %2971 = vmatpush2.msra.mxu0 0.0
    %2972 = vmatprep.subr.mxu0 0.0
    %2973 = vmatpush2.msra.mxu0 0.0
    %2974 = vmatprep.subr.mxu0 0.0
    %2975 = vmatpush2.msra.mxu0 0.0
    %2976 = vmatprep.subr.mxu0 0.0
    %2977 = vmatpush2.msra.mxu0 0.0
    %2978 = vmatprep.subr.mxu0 0.0
    %2979 = vmatpush2.msra.mxu0 0.0
    %2980 = vmatprep.subr.mxu0 0.0
    %2981 = vmatpush2.msra.mxu0 %v2838
    %2982 = vmatprep.subr.mxu0 0.0
    %2983 = vmatpush2.msra.mxu0 %v2837
    %2984 = vmatprep.mubr.f32.mxu0 %v2848
    %2985 = vmatmul.mubr.f32.gmra.mxu0 %v2787
    %v2986 = vpop.f32.mrf.mxu0
    %v2987 = vadd.f32 %v2917, %v2986
    %v2988 = vpop.f32.mrf.mxu0
    %2989 = vdwg.mxu0
    %v2990 = vmax.f32 %v2987, 0.0
    %v2991 = vld [vmem:[%s4] sm:$0xff]
    %v2992 = vld [vmem:[%s4 + $0x8] sm:$0xff]
    %v2993 = vld [vmem:[%s4 + $0x10] sm:$0xff]
    %v2994 = vld [vmem:[%s4 + $0x18] sm:$0xff]
    %v2995 = vld [vmem:[%s4 + $0x20] sm:$0xff]
    %v2996 = vld [vmem:[%s4 + $0x28] sm:$0xff]
    %v2997 = vld [vmem:[%s4 + $0x30] sm:$0xff]
    %v2998 = vld [vmem:[%s4 + $0x38] sm:$0xff]
    %v2999 = vld [vmem:[%s4 + $0x40] sm:$0xff]
    %v3000 = vld [vmem:[%s4 + $0x48] sm:$0xff]
    %v3001 = vld [vmem:[%s5] sm:$0x1]
    %v3003 = vlaneseq
    %v3004 = vshrl.u32 %v3003, 7
    %v3005 = vsub.s32 0, %v3004
    %v3006 = vrot.slane %v3001, %v3005
    %v3009 = vsel %vm2604, %v2990, 0
    %3011 = vmatprep.subr.mxu0 0.0
    %3012 = vmatpush1.msra.mxu0 0.0
    %3013 = vmatprep.subr.mxu0 0.0
    %3014 = vmatpush1.msra.mxu0 0.0
    %3015 = vmatprep.subr.mxu0 0.0
    %3016 = vmatpush1.msra.mxu0 0.0
    %3017 = vmatprep.subr.mxu0 0.0
    %3018 = vmatpush1.msra.mxu0 0.0
    %3019 = vmatprep.subr.mxu0 0.0
    %3020 = vmatpush1.msra.mxu0 0.0
    %3021 = vmatprep.subr.mxu0 0.0
    %3022 = vmatpush1.msra.mxu0 0.0
    %3023 = vmatprep.subr.mxu0 0.0
    %3024 = vmatpush1.msra.mxu0 %v3000
    %3025 = vmatprep.subr.mxu0 0.0
    %3026 = vmatpush1.msra.mxu0 %v2999
    %3027 = vmatprep.subr.mxu0 0.0
    %3028 = vmatpush1.msra.mxu0 %v2998
    %3029 = vmatprep.subr.mxu0 0.0
    %3030 = vmatpush1.msra.mxu0 %v2997
    %3031 = vmatprep.subr.mxu0 0.0
    %3032 = vmatpush1.msra.mxu0 %v2996
    %3033 = vmatprep.subr.mxu0 0.0
    %3034 = vmatpush1.msra.mxu0 %v2995
    %3035 = vmatprep.subr.mxu0 0.0
    %3036 = vmatpush1.msra.mxu0 %v2994
    %3037 = vmatprep.subr.mxu0 0.0
    %3038 = vmatpush1.msra.mxu0 %v2993
    %3039 = vmatprep.subr.mxu0 0.0
    %3040 = vmatpush1.msra.mxu0 %v2992
    %3041 = vmatprep.subr.mxu0 0.0
    %3042 = vmatpush1.msra.mxu0 %v2991
    %3043 = vmatprep.subr.mxu0 0.0
    %3044 = vmatpush2.msra.mxu0 0.0
    %3045 = vmatprep.subr.mxu0 0.0
    %3046 = vmatpush2.msra.mxu0 0.0
    %3047 = vmatprep.subr.mxu0 0.0
    %3048 = vmatpush2.msra.mxu0 0.0
    %3049 = vmatprep.subr.mxu0 0.0
    %3050 = vmatpush2.msra.mxu0 0.0
    %3051 = vmatprep.subr.mxu0 0.0
    %3052 = vmatpush2.msra.mxu0 0.0
    %3053 = vmatprep.subr.mxu0 0.0
    %3054 = vmatpush2.msra.mxu0 0.0
    %3055 = vmatprep.subr.mxu0 0.0
    %3056 = vmatpush2.msra.mxu0 0.0
    %3057 = vmatprep.subr.mxu0 0.0
    %3058 = vmatpush2.msra.mxu0 0.0
    %3059 = vmatprep.subr.mxu0 0.0
    %3060 = vmatpush2.msra.mxu0 0.0
    %3061 = vmatprep.subr.mxu0 0.0
    %3062 = vmatpush2.msra.mxu0 0.0
    %3063 = vmatprep.subr.mxu0 0.0
    %3064 = vmatpush2.msra.mxu0 0.0
    %3065 = vmatprep.subr.mxu0 0.0
    %3066 = vmatpush2.msra.mxu0 0.0
    %3067 = vmatprep.subr.mxu0 0.0
    %3068 = vmatpush2.msra.mxu0 0.0
    %3069 = vmatprep.subr.mxu0 0.0
    %3070 = vmatpush2.msra.mxu0 0.0
    %3071 = vmatprep.subr.mxu0 0.0
    %3072 = vmatpush2.msra.mxu0 0.0
    %3073 = vmatprep.subr.mxu0 0.0
    %3074 = vmatpush2.msra.mxu0 0.0
    %3075 = vmatprep.mubr.f32.mxu0 0.0
    %3076 = vmatmul.mubr.f32.gmra.mxu0 %v3009
    %v3077 = vpop.f32.mrf.mxu0
    %v3078 = vadd.f32 %v3006, %v3077
    %v3079 = vpop.f32.mrf.mxu0
    %3080 = vdwg.mxu0
    %vm3081 = vcmask 66560
    %3082 = vst.msk [vmem:[#allocation2] sm:$0x3] %vm3081, %v3078
    // Predicated region
    $region26: #{track_agile_extractor.1} parent=1 // pred_check
      _
    $region27: #{track_agile_extractor.1} parent=1 // pred_check_branch
      %3084 = sbr.rel (0) target = $region29
    $region28: #{track_agile_extractor.1} parent=1 // pred_region
      %s3086 = ssub.s32 32, 32
      %3087 = vsyncadd [#allocation3], %s3086
      %s3089 = sshll.u32 [#allocation2], 4
      %s3090 = int_to_ptr.vmem [resolvable:$true] %s3089
      %3092 = dma.vmem_to_hbm [thread:$0]  %s3090, 32, %s6, [#allocation3]
    $region29: #{track_agile_extractor.1} parent=1 // pred_fallthru
      _
    // Predicated region
    $region30: #{track_agile_extractor.1} parent=1 // pred_check
      _
    $region31: #{track_agile_extractor.1} parent=1 // pred_check_branch
      %3094 = sbr.rel (0) target = $region33
    $region32: #{track_agile_extractor.1} parent=1 // pred_region
      %3095 = dma.done [#allocation3], 32
    $region33: #{track_agile_extractor.1} parent=1 // pred_fallthru
      _
    %3096 = vsyncpa [#allocation3], 1

</llo_original>
